<compile_context>
chip_gen: v5e
topology: v5e:2x2
jax: 0.10.0
libtpu: 0.0.40
codegen_flags: <defaults>
</compile_context>

<pallas_src>
import jax
import jax.numpy as jnp
from jax.experimental import pallas as pl
from jax.experimental.pallas import tpu as pltpu

_LANE = 128  # TPU lane width; used to pad the 2-wide logits head lane-dense


# ----------------------------------------------------------------------------
# fused multi-input linear:  y = sum_l x_l @ W_l + b   (bf16 MXU, f32 accum)
# ----------------------------------------------------------------------------
def _make_fused_linear_kernel(n_in):
    def kernel(*refs):
        x_refs = refs[:n_in]
        w_ref, b_ref, o_ref = refs[n_in], refs[n_in + 1], refs[n_in + 2]
        acc = b_ref[...]  # (1, N) f32, broadcasts over rows
        for l in range(n_in):
            acc = acc + jnp.dot(x_refs[l][0].astype(jnp.bfloat16), w_ref[l],
                                preferred_element_type=jnp.float32)
        o_ref[...] = acc.astype(o_ref.dtype)
    return kernel


def _plane_index_map(plane):
    return lambda i: (plane, i, 0)


def fused_linear(inputs, w_stack, b, *, out_dtype=jnp.float32, tm_cap=256):
    """y = sum_l inputs[l] @ w_stack[l] + b, row-tiled.

    inputs : list of (arr, plane) with arr shaped (P, M, K); `plane` selects the
             leading-dim slab (lets us read the last `layers_used` hidden planes or the
             two GRU direction outputs without materialising any concatenation/stack).
    w_stack: (L, K, N) bf16 (resident).   b: (N,) f32.
    """
    n_in = len(inputs)
    M, K = inputs[0][0].shape[1], inputs[0][0].shape[2]
    N = w_stack.shape[-1]
    tm = M if M <= tm_cap else tm_cap          # cap is a multiple of 8; cdiv handles the tail
    grid = (pl.cdiv(M, tm),)
    in_specs = [pl.BlockSpec((1, tm, K), _plane_index_map(plane)) for _, plane in inputs]
    in_specs += [
        pl.BlockSpec((n_in, K, N), lambda i: (0, 0, 0)),   # resident weights
        pl.BlockSpec((1, N), lambda i: (0, 0)),            # resident bias
    ]
    return pl.pallas_call(
        _make_fused_linear_kernel(n_in),
        out_shape=jax.ShapeDtypeStruct((M, N), out_dtype),
        grid=grid,
        in_specs=in_specs,
        out_specs=pl.BlockSpec((tm, N), lambda i: (i, 0)),
        compiler_params=pltpu.CompilerParams(dimension_semantics=("parallel",)),
    )(*[arr for arr, _ in inputs], w_stack, b.reshape(1, N))


# ----------------------------------------------------------------------------
# one bidirectional GRU layer: fwd + rev recurrences fused, TS timesteps per grid step
# ----------------------------------------------------------------------------
def _bigru_layer_kernel(xgf_ref, xgr_ref, whf_ref, whr_ref, bhn_ref,
                        of_ref, or_ref, hf_ref, hr_ref):
    # xgf_ref: (B, TS, 3H) fwd gate pre-acts for time tile t          (x@W_ih^T + b_ih + b_hh[rz])
    # xgr_ref: (B, TS, 3H) rev gate pre-acts for time tile T-1-t
    # whf/whr: (H, 3H) bf16 W_hh^T, resident (constant index_map)
    # bhn_ref: (2, 1, H) f32  n-gate hidden bias [fwd; rev] (must stay under the r* multiply)
    # of/or  : (B, TS, H) outputs written back at original time positions
    # hf/hr  : (B, H) f32 hidden-state scratch carried across grid steps
    t = pl.program_id(0)
    H = hf_ref.shape[-1]
    TS = xgf_ref.shape[1]

    @pl.when(t == 0)
    def _():
        hf_ref[...] = jnp.zeros_like(hf_ref)
        hr_ref[...] = jnp.zeros_like(hr_ref)

    xgf = xgf_ref[...]
    xgr = xgr_ref[...]
    whf = whf_ref[...]
    whr = whr_ref[...]
    bhn_f = bhn_ref[0]
    bhn_r = bhn_ref[1]

    def cell(xg, h, wh, bhn):
        hg = jnp.dot(h.astype(jnp.bfloat16), wh, preferred_element_type=jnp.float32)
        r = jax.nn.sigmoid(xg[:, :H] + hg[:, :H])
        z = jax.nn.sigmoid(xg[:, H:2 * H] + hg[:, H:2 * H])
        n = jnp.tanh(xg[:, 2 * H:] + r * (hg[:, 2 * H:] + bhn))
        return (1.0 - z) * n + z * h

    # static unroll: the two independent direction chains interleave on MXU / EUP / VPU
    for s in range(TS):
        sr = TS - 1 - s
        hf_new = cell(xgf[:, s, :], hf_ref[...], whf, bhn_f)
        hr_new = cell(xgr[:, sr, :], hr_ref[...], whr, bhn_r)
        hf_ref[...] = hf_new
        hr_ref[...] = hr_new
        of_ref[:, s:s + 1, :] = hf_new[:, None, :].astype(of_ref.dtype)
        or_ref[:, sr:sr + 1, :] = hr_new[:, None, :].astype(or_ref.dtype)


def _pick_ts(s):
    for ts in (32, 24, 16, 8):
        if s % ts == 0:
            return ts
    return s  # full extent (always a legal block shape)


def bigru_layer(xg, w_hh_f_t, w_hh_r_t, b_hn_pair):
    # xg: (B, S, 6H) f32 (fwd gates | rev gates).  Returns fwd_out, rev_out each (B, S, H) f32.
    B, S, G6 = xg.shape
    H = G6 // 6
    TS = _pick_ts(S)
    T = S // TS
    in_specs = [
        pl.BlockSpec((B, TS, 3 * H), lambda t: (0, t, 0)),           # fwd gates, tile t
        pl.BlockSpec((B, TS, 3 * H), lambda t: (0, T - 1 - t, 1)),   # rev gates, tile T-1-t
        pl.BlockSpec((H, 3 * H), lambda t: (0, 0)),
        pl.BlockSpec((H, 3 * H), lambda t: (0, 0)),
        pl.BlockSpec((2, 1, H), lambda t: (0, 0, 0)),
    ]
    out_specs = (
        pl.BlockSpec((B, TS, H), lambda t: (0, t, 0)),
        pl.BlockSpec((B, TS, H), lambda t: (0, T - 1 - t, 0)),
    )
    return pl.pallas_call(
        _bigru_layer_kernel,
        out_shape=(jax.ShapeDtypeStruct((B, S, H), jnp.float32),
                   jax.ShapeDtypeStruct((B, S, H), jnp.float32)),
        grid=(T,),
        in_specs=in_specs,
        out_specs=out_specs,
        scratch_shapes=[pltpu.VMEM((B, H), jnp.float32),
                        pltpu.VMEM((B, H), jnp.float32)],
        compiler_params=pltpu.CompilerParams(dimension_semantics=("arbitrary",)),
    )(xg, xg, w_hh_f_t, w_hh_r_t, b_hn_pair)


# ----------------------------------------------------------------------------
# weight packing + full forward
# ----------------------------------------------------------------------------
def _pack_gru_layer_weights(gru_params, layer, H):
    w_ih_f, w_hh_f, b_ih_f, b_hh_f = gru_params[(layer, 0)]
    w_ih_r, w_hh_r, b_ih_r, b_hh_r = gru_params[(layer, 1)]
    wf, wr = w_ih_f.T, w_ih_r.T                      # (K_total, 3H)
    n_chunks = wf.shape[0] // H                      # 1 for layer 0, 2 for layers >= 1
    w_stack = jnp.stack(
        [jnp.concatenate([wf[j * H:(j + 1) * H], wr[j * H:(j + 1) * H]], axis=1)
         for j in range(n_chunks)], axis=0).astype(jnp.bfloat16)        # (n_chunks, H, 6H)
    # fold r/z halves of b_hh into the precomputed gate bias; keep b_hn for the recurrence
    b6 = jnp.concatenate([b_ih_f[:2 * H] + b_hh_f[:2 * H], b_ih_f[2 * H:],
                          b_ih_r[:2 * H] + b_hh_r[:2 * H], b_ih_r[2 * H:]])
    b_hn = jnp.stack([b_hh_f[2 * H:], b_hh_r[2 * H:]]).reshape(2, 1, H)
    return (w_stack, b6,
            w_hh_f.T.astype(jnp.bfloat16), w_hh_r.T.astype(jnp.bfloat16), b_hn)


def gru_head_forward(hidden_states, params, mask=None):
    """hidden_states: [num_layers_total, B, S, d_model]. Returns start/end logits [B, S]."""
    del mask  # torch forward computes mask.ne(0) but never uses it
    L = params["layers_used"]
    num_layers = params["num_layers"]
    H = params["d_model"]
    Lt, B, S, D = hidden_states.shape
    M = B * S

    # --- cat([hidden[-1],...,hidden[-L]], -1) fused with Linear `d` (no concat/stack in HBM)
    hidden2d = hidden_states.reshape(Lt, M, D)        # free reshape, no copy
    dwT = params["d_w"].T.reshape(L, D, H)            # chunk l pairs with hidden[-1-l]
    # TODO(synk): train-mode nn.Dropout(0.1) before `d`; eval-mode forward is identity.
    y = fused_linear([(hidden2d, Lt - 1 - l) for l in range(L)],
                     dwT.astype(jnp.bfloat16), params["d_b"])            # (M, H) f32

    # --- bidirectional multi-layer GRU, one fused fwd+rev kernel per layer
    planes = [(y.reshape(1, M, H), 0)]
    for layer in range(num_layers):
        w_ih6, b6, whf_t, whr_t, b_hn = _pack_gru_layer_weights(params["gru"], layer, H)
        xg = fused_linear(planes, w_ih6, b6)           # (M, 6H): all timesteps, both directions
        fwd, rev = bigru_layer(xg.reshape(B, S, 6 * H), whf_t, whr_t, b_hn)
        planes = [(fwd.reshape(1, M, H), 0), (rev.reshape(1, M, H), 0)]

    # --- l0 head, lane-dense: pad the 2 logit columns to 128, slice in the wrapper
    l0T = params["l0_w"].T                             # (2H, 2)
    w_head = jnp.zeros((2, H, _LANE), jnp.float32)
    w_head = w_head.at[0, :, :2].set(l0T[:H]).at[1, :, :2].set(l0T[H:])
    b_head = jnp.zeros((_LANE,), jnp.float32).at[:2].set(params["l0_b"])
    logits = fused_linear(planes, w_head.astype(jnp.bfloat16), b_head)   # (M, 128)
    logits = logits[:, :2].reshape(B, S, 2)
    return {"start_logits": logits[..., 0], "end_logits": logits[..., 1]}


# ----------------------------------------------------------------------------
# parameters + pure-JAX references (for correctness check)
# ----------------------------------------------------------------------------
def init_params(key, d_model, layers_used, num_layers):
    keys = iter(jax.random.split(key, 8 + 8 * num_layers))

    def w(shape, scale=0.1):
        return scale * jax.random.normal(next(keys), shape, dtype=jnp.float32)

    params = {"d_model": d_model, "layers_used": layers_used, "num_layers": num_layers}
    params["d_w"] = w((d_model, d_model * layers_used))
    params["d_b"] = w((d_model,))
    gru = {}
    for layer in range(num_layers):
        in_dim = d_model if layer == 0 else 2 * d_model
        for direction in range(2):
            gru[(layer, direction)] = (
                w((3 * d_model, in_dim)),   # weight_ih (r|z|n)
                w((3 * d_model, d_model)),  # weight_hh
                w((3 * d_model,)),          # bias_ih
                w((3 * d_model,)),          # bias_hh
            )
    params["gru"] = gru
    params["l0_w"] = w((2, 2 * d_model))
    params["l0_b"] = w((2,))
    return params


def _ref_dot(a, b, mxu_dtype):
    return jnp.dot(a.astype(mxu_dtype), b.astype(mxu_dtype),
                   preferred_element_type=jnp.float32,
                   precision=jax.lax.Precision.HIGHEST)


def gru_head_reference(hidden_states, params, mxu_dtype=jnp.float32):
    L = params["layers_used"]
    num_layers = params["num_layers"]
    Lt, B, S, D = hidden_states.shape
    xcat = jnp.concatenate([hidden_states[Lt - 1 - i] for i in range(L)], axis=-1)
    y = _ref_dot(xcat, params["d_w"].T, mxu_dtype) + params["d_b"]
    layer_in = jnp.transpose(y, (1, 0, 2))  # (S, B, D)
    for layer in range(num_layers):
        dir_outs = []
        for direction, rev in ((0, False), (1, True)):
            w_ih, w_hh, b_ih, b_hh = params["gru"][(layer, direction)]
            H = w_hh.shape[-1]
            h = jnp.zeros((B, H), jnp.float32)
            hs = [None] * S
            order = range(S - 1, -1, -1) if rev else range(S)
            for t in order:
                xg = _ref_dot(layer_in[t], w_ih.T, mxu_dtype) + b_ih
                hg = _ref_dot(h, w_hh.T, mxu_dtype) + b_hh
                r = jax.nn.sigmoid(xg[:, :H] + hg[:, :H])
                z = jax.nn.sigmoid(xg[:, H:2 * H] + hg[:, H:2 * H])
                n = jnp.tanh(xg[:, 2 * H:] + r * hg[:, 2 * H:])
                h = (1.0 - z) * n + z * h
                hs[t] = h
            dir_outs.append(jnp.stack(hs, axis=0))
        layer_in = jnp.concatenate(dir_outs, axis=-1)
    out = jnp.transpose(layer_in, (1, 0, 2))
    logits = _ref_dot(out, params["l0_w"].T, mxu_dtype) + params["l0_b"]
    return {"start_logits": logits[..., 0], "end_logits": logits[..., 1]}


if __name__ == "__main__":
    B, S, d_model = 2, 8, 128
    layers_used, num_layers, total_layers = 2, 2, 4

    key = jax.random.PRNGKey(0)
    k_h, k_p = jax.random.split(key)
    hidden_states = jax.random.normal(k_h, (total_layers, B, S, d_model), dtype=jnp.float32)
    mask = jnp.ones((B, S), dtype=jnp.int32)  # accepted for parity; unused by the forward
    params = init_params(k_p, d_model, layers_used, num_layers)

    run = jax.jit(lambda hs: gru_head_forward(hs, params, mask=mask))
    out = jax.block_until_ready(run(hidden_states))

    # structural check vs a reference using the same bf16-multiplicand / f32-accum policy
    ref_same = gru_head_reference(hidden_states, params, mxu_dtype=jnp.bfloat16)
    # precision sanity check vs a full-f32 (HIGHEST) reference
    ref_gold = gru_head_reference(hidden_states, params, mxu_dtype=jnp.float32)
    for name in ("start_logits", "end_logits"):
        assert out[name].shape == (B, S)
        assert jnp.allclose(out[name], ref_same[name], atol=1e-2, rtol=1e-2), f"{name}: structural mismatch"
        assert jnp.allclose(out[name], ref_gold[name], atol=1e-1, rtol=1e-1), f"{name}: drift vs f32 reference"

    print("KERNEL_OK")
</pallas_src>

<mosaic_0001>
module attributes {stable_mosaic.version = 11 : i64} {
  func.func @kernel(%arg0: i32, %arg1: memref<1x16x128xf32, #tpu.memory_space<vmem>>, %arg2: memref<1x16x128xf32, #tpu.memory_space<vmem>>, %arg3: memref<2x128x128xbf16, #tpu.memory_space<vmem>>, %arg4: memref<1x128xf32, #tpu.memory_space<vmem>>, %arg5: memref<16x128xf32, #tpu.memory_space<vmem>>) attributes {dimension_semantics = [#tpu.dimension_semantics<parallel>], iteration_bounds = array<i64: 1>, scalar_prefetch = 0 : i64, scratch_operands = 0 : i64, tpu.core_type = #tpu.core_type<tc>, window_params = [{transform_indices = @transform_0, window_bounds = array<i64: 1, 16, 128>}, {transform_indices = @transform_1, window_bounds = array<i64: 1, 16, 128>}, {pipeline_mode = #tpu.pipeline_mode<synchronous>, transform_indices = @transform_2, window_bounds = array<i64: 2, 128, 128>}, {pipeline_mode = #tpu.pipeline_mode<synchronous>, transform_indices = @transform_3, window_bounds = array<i64: 1, 128>}, {transform_indices = @transform_4, window_bounds = array<i64: 16, 128>}]} {
    %c0 = arith.constant 0 : index
    %c0_0 = arith.constant 0 : index
    %0 = vector.load %arg4[%c0, %c0_0] : memref<1x128xf32, #tpu.memory_space<vmem>>, vector<1x128xf32>
    %c0_1 = arith.constant 0 : index
    %c0_2 = arith.constant 0 : index
    %c0_3 = arith.constant 0 : index
    %1 = vector.load %arg1[%c0_1, %c0_2, %c0_3] : memref<1x16x128xf32, #tpu.memory_space<vmem>>, vector<1x16x128xf32>
    %2 = vector.shape_cast %1 : vector<1x16x128xf32> to vector<16x128xf32>
    %3 = arith.truncf %2 : vector<16x128xf32> to vector<16x128xbf16>
    %c0_4 = arith.constant 0 : index
    %c0_5 = arith.constant 0 : index
    %c0_6 = arith.constant 0 : index
    %4 = vector.load %arg3[%c0_4, %c0_5, %c0_6] : memref<2x128x128xbf16, #tpu.memory_space<vmem>>, vector<1x128x128xbf16>
    %5 = vector.shape_cast %4 : vector<1x128x128xbf16> to vector<128x128xbf16>
    %cst = arith.constant dense<0.000000e+00> : vector<16x128xf32>
    %6 = tpu.matmul %3, %5, %cst {dimension_numbers = #tpu.dot_dimension_numbers<[1], [0], [0], [1], [0, 0, 1, 1], [], []>} : vector<16x128xbf16>, vector<128x128xbf16>, vector<16x128xf32> -> vector<16x128xf32>
    %7 = vector.broadcast %0 : vector<1x128xf32> to vector<16x128xf32>
    %8 = arith.addf %7, %6 : vector<16x128xf32>
    %c0_7 = arith.constant 0 : index
    %c0_8 = arith.constant 0 : index
    %c0_9 = arith.constant 0 : index
    %9 = vector.load %arg2[%c0_7, %c0_8, %c0_9] : memref<1x16x128xf32, #tpu.memory_space<vmem>>, vector<1x16x128xf32>
    %10 = vector.shape_cast %9 : vector<1x16x128xf32> to vector<16x128xf32>
    %11 = arith.truncf %10 : vector<16x128xf32> to vector<16x128xbf16>
    %c1 = arith.constant 1 : index
    %c0_10 = arith.constant 0 : index
    %c0_11 = arith.constant 0 : index
    %12 = vector.load %arg3[%c1, %c0_10, %c0_11] : memref<2x128x128xbf16, #tpu.memory_space<vmem>>, vector<1x128x128xbf16>
    %13 = vector.shape_cast %12 : vector<1x128x128xbf16> to vector<128x128xbf16>
    %cst_12 = arith.constant dense<0.000000e+00> : vector<16x128xf32>
    %14 = tpu.matmul %11, %13, %cst_12 {dimension_numbers = #tpu.dot_dimension_numbers<[1], [0], [0], [1], [0, 0, 1, 1], [], []>} : vector<16x128xbf16>, vector<128x128xbf16>, vector<16x128xf32> -> vector<16x128xf32>
    %15 = arith.addf %8, %14 : vector<16x128xf32>
    %c0_13 = arith.constant 0 : index
    %c0_14 = arith.constant 0 : index
    %16 = vector.load %arg5[%c0_13, %c0_14] : memref<16x128xf32, #tpu.memory_space<vmem>>, vector<16x128xf32>
    tpu.vector_store %arg5[%c0_13, %c0_14], %15 {strides = array<i32>} : memref<16x128xf32, #tpu.memory_space<vmem>>, vector<16x128xf32>,
    return
  }
  func.func @transform_0(%arg0: i32) -> (i32, i32, i32) {
    %c3_i32 = arith.constant 3 : i32
    %c0_i32 = arith.constant 0 : i32
    %c0_i32_0 = arith.constant 0 : i32
    return %c3_i32, %arg0, %c0_i32 : i32, i32, i32
  }
  func.func @transform_1(%arg0: i32) -> (i32, i32, i32) {
    %c2_i32 = arith.constant 2 : i32
    %c0_i32 = arith.constant 0 : i32
    %c0_i32_0 = arith.constant 0 : i32
    return %c2_i32, %arg0, %c0_i32 : i32, i32, i32
  }
  func.func @transform_2(%arg0: i32) -> (i32, i32, i32) {
    %c0_i32 = arith.constant 0 : i32
    %c0_i32_0 = arith.constant 0 : i32
    %c0_i32_1 = arith.constant 0 : i32
    %c0_i32_2 = arith.constant 0 : i32
    return %c0_i32, %c0_i32_0, %c0_i32_1 : i32, i32, i32
  }
  func.func @transform_3(%arg0: i32) -> (i32, i32) {
    %c0_i32 = arith.constant 0 : i32
    %c0_i32_0 = arith.constant 0 : i32
    %c0_i32_1 = arith.constant 0 : i32
    return %c0_i32, %c0_i32_0 : i32, i32
  }
  func.func @transform_4(%arg0: i32) -> (i32, i32) {
    %c0_i32 = arith.constant 0 : i32
    %c0_i32_0 = arith.constant 0 : i32
    return %arg0, %c0_i32 : i32, i32
  }
}

module attributes {stable_mosaic.version = 11 : i64} {
  func.func @kernel(%arg0: i32, %arg1: memref<1x16x128xf32, #tpu.memory_space<vmem>>, %arg2: memref<1x128x768xbf16, #tpu.memory_space<vmem>>, %arg3: memref<1x768xf32, #tpu.memory_space<vmem>>, %arg4: memref<16x768xf32, #tpu.memory_space<vmem>>) attributes {dimension_semantics = [#tpu.dimension_semantics<parallel>], iteration_bounds = array<i64: 1>, scalar_prefetch = 0 : i64, scratch_operands = 0 : i64, tpu.core_type = #tpu.core_type<tc>, window_params = [{transform_indices = @transform_0, window_bounds = array<i64: 1, 16, 128>}, {pipeline_mode = #tpu.pipeline_mode<synchronous>, transform_indices = @transform_1, window_bounds = array<i64: 1, 128, 768>}, {pipeline_mode = #tpu.pipeline_mode<synchronous>, transform_indices = @transform_2, window_bounds = array<i64: 1, 768>}, {transform_indices = @transform_3, window_bounds = array<i64: 16, 768>}]} {
    %c0 = arith.constant 0 : index
    %c0_0 = arith.constant 0 : index
    %0 = vector.load %arg3[%c0, %c0_0] : memref<1x768xf32, #tpu.memory_space<vmem>>, vector<1x768xf32>
    %c0_1 = arith.constant 0 : index
    %c0_2 = arith.constant 0 : index
    %c0_3 = arith.constant 0 : index
    %1 = vector.load %arg1[%c0_1, %c0_2, %c0_3] : memref<1x16x128xf32, #tpu.memory_space<vmem>>, vector<1x16x128xf32>
    %2 = vector.shape_cast %1 : vector<1x16x128xf32> to vector<16x128xf32>
    %3 = arith.truncf %2 : vector<16x128xf32> to vector<16x128xbf16>
    %c0_4 = arith.constant 0 : index
    %c0_5 = arith.constant 0 : index
    %c0_6 = arith.constant 0 : index
    %4 = vector.load %arg2[%c0_4, %c0_5, %c0_6] : memref<1x128x768xbf16, #tpu.memory_space<vmem>>, vector<1x128x768xbf16>
    %5 = vector.shape_cast %4 : vector<1x128x768xbf16> to vector<128x768xbf16>
    %cst = arith.constant dense<0.000000e+00> : vector<16x768xf32>
    %6 = tpu.matmul %3, %5, %cst {dimension_numbers = #tpu.dot_dimension_numbers<[1], [0], [0], [1], [0, 0, 1, 1], [], []>} : vector<16x128xbf16>, vector<128x768xbf16>, vector<16x768xf32> -> vector<16x768xf32>
    %7 = vector.broadcast %0 : vector<1x768xf32> to vector<16x768xf32>
    %8 = arith.addf %7, %6 : vector<16x768xf32>
    %c0_7 = arith.constant 0 : index
    %c0_8 = arith.constant 0 : index
    %9 = vector.load %arg4[%c0_7, %c0_8] : memref<16x768xf32, #tpu.memory_space<vmem>>, vector<16x768xf32>
    tpu.vector_store %arg4[%c0_7, %c0_8], %8 {strides = array<i32>} : memref<16x768xf32, #tpu.memory_space<vmem>>, vector<16x768xf32>,
    return
  }
  func.func @transform_0(%arg0: i32) -> (i32, i32, i32) {
    %c0_i32 = arith.constant 0 : i32
    %c0_i32_0 = arith.constant 0 : i32
    %c0_i32_1 = arith.constant 0 : i32
    return %c0_i32, %arg0, %c0_i32_0 : i32, i32, i32
  }
  func.func @transform_1(%arg0: i32) -> (i32, i32, i32) {
    %c0_i32 = arith.constant 0 : i32
    %c0_i32_0 = arith.constant 0 : i32
    %c0_i32_1 = arith.constant 0 : i32
    %c0_i32_2 = arith.constant 0 : i32
    return %c0_i32, %c0_i32_0, %c0_i32_1 : i32, i32, i32
  }
  func.func @transform_2(%arg0: i32) -> (i32, i32) {
    %c0_i32 = arith.constant 0 : i32
    %c0_i32_0 = arith.constant 0 : i32
    %c0_i32_1 = arith.constant 0 : i32
    return %c0_i32, %c0_i32_0 : i32, i32
  }
  func.func @transform_3(%arg0: i32) -> (i32, i32) {
    %c0_i32 = arith.constant 0 : i32
    %c0_i32_0 = arith.constant 0 : i32
    return %arg0, %c0_i32 : i32, i32
  }
}

module attributes {stable_mosaic.version = 11 : i64} {
  func.func @kernel(%arg0: i32, %arg1: memref<1x16x128xf32, #tpu.memory_space<vmem>>, %arg2: memref<1x16x128xf32, #tpu.memory_space<vmem>>, %arg3: memref<2x128x768xbf16, #tpu.memory_space<vmem>>, %arg4: memref<1x768xf32, #tpu.memory_space<vmem>>, %arg5: memref<16x768xf32, #tpu.memory_space<vmem>>) attributes {dimension_semantics = [#tpu.dimension_semantics<parallel>], iteration_bounds = array<i64: 1>, scalar_prefetch = 0 : i64, scratch_operands = 0 : i64, tpu.core_type = #tpu.core_type<tc>, window_params = [{transform_indices = @transform_0, window_bounds = array<i64: 1, 16, 128>}, {transform_indices = @transform_1, window_bounds = array<i64: 1, 16, 128>}, {pipeline_mode = #tpu.pipeline_mode<synchronous>, transform_indices = @transform_2, window_bounds = array<i64: 2, 128, 768>}, {pipeline_mode = #tpu.pipeline_mode<synchronous>, transform_indices = @transform_3, window_bounds = array<i64: 1, 768>}, {transform_indices = @transform_4, window_bounds = array<i64: 16, 768>}]} {
    %c0 = arith.constant 0 : index
    %c0_0 = arith.constant 0 : index
    %0 = vector.load %arg4[%c0, %c0_0] : memref<1x768xf32, #tpu.memory_space<vmem>>, vector<1x768xf32>
    %c0_1 = arith.constant 0 : index
    %c0_2 = arith.constant 0 : index
    %c0_3 = arith.constant 0 : index
    %1 = vector.load %arg1[%c0_1, %c0_2, %c0_3] : memref<1x16x128xf32, #tpu.memory_space<vmem>>, vector<1x16x128xf32>
    %2 = vector.shape_cast %1 : vector<1x16x128xf32> to vector<16x128xf32>
    %3 = arith.truncf %2 : vector<16x128xf32> to vector<16x128xbf16>
    %c0_4 = arith.constant 0 : index
    %c0_5 = arith.constant 0 : index
    %c0_6 = arith.constant 0 : index
    %4 = vector.load %arg3[%c0_4, %c0_5, %c0_6] : memref<2x128x768xbf16, #tpu.memory_space<vmem>>, vector<1x128x768xbf16>
    %5 = vector.shape_cast %4 : vector<1x128x768xbf16> to vector<128x768xbf16>
    %cst = arith.constant dense<0.000000e+00> : vector<16x768xf32>
    %6 = tpu.matmul %3, %5, %cst {dimension_numbers = #tpu.dot_dimension_numbers<[1], [0], [0], [1], [0, 0, 1, 1], [], []>} : vector<16x128xbf16>, vector<128x768xbf16>, vector<16x768xf32> -> vector<16x768xf32>
    %7 = vector.broadcast %0 : vector<1x768xf32> to vector<16x768xf32>
    %8 = arith.addf %7, %6 : vector<16x768xf32>
    %c0_7 = arith.constant 0 : index
    %c0_8 = arith.constant 0 : index
    %c0_9 = arith.constant 0 : index
    %9 = vector.load %arg2[%c0_7, %c0_8, %c0_9] : memref<1x16x128xf32, #tpu.memory_space<vmem>>, vector<1x16x128xf32>
    %10 = vector.shape_cast %9 : vector<1x16x128xf32> to vector<16x128xf32>
    %11 = arith.truncf %10 : vector<16x128xf32> to vector<16x128xbf16>
    %c1 = arith.constant 1 : index
    %c0_10 = arith.constant 0 : index
    %c0_11 = arith.constant 0 : index
    %12 = vector.load %arg3[%c1, %c0_10, %c0_11] : memref<2x128x768xbf16, #tpu.memory_space<vmem>>, vector<1x128x768xbf16>
    %13 = vector.shape_cast %12 : vector<1x128x768xbf16> to vector<128x768xbf16>
    %cst_12 = arith.constant dense<0.000000e+00> : vector<16x768xf32>
    %14 = tpu.matmul %11, %13, %cst_12 {dimension_numbers = #tpu.dot_dimension_numbers<[1], [0], [0], [1], [0, 0, 1, 1], [], []>} : vector<16x128xbf16>, vector<128x768xbf16>, vector<16x768xf32> -> vector<16x768xf32>
    %15 = arith.addf %8, %14 : vector<16x768xf32>
    %c0_13 = arith.constant 0 : index
    %c0_14 = arith.constant 0 : index
    %16 = vector.load %arg5[%c0_13, %c0_14] : memref<16x768xf32, #tpu.memory_space<vmem>>, vector<16x768xf32>
    tpu.vector_store %arg5[%c0_13, %c0_14], %15 {strides = array<i32>} : memref<16x768xf32, #tpu.memory_space<vmem>>, vector<16x768xf32>,
    return
  }
  func.func @transform_0(%arg0: i32) -> (i32, i32, i32) {
    %c0_i32 = arith.constant 0 : i32
    %c0_i32_0 = arith.constant 0 : i32
    %c0_i32_1 = arith.constant 0 : i32
    return %c0_i32, %arg0, %c0_i32_0 : i32, i32, i32
  }
  func.func @transform_1(%arg0: i32) -> (i32, i32, i32) {
    %c0_i32 = arith.constant 0 : i32
    %c0_i32_0 = arith.constant 0 : i32
    %c0_i32_1 = arith.constant 0 : i32
    return %c0_i32, %arg0, %c0_i32_0 : i32, i32, i32
  }
  func.func @transform_2(%arg0: i32) -> (i32, i32, i32) {
    %c0_i32 = arith.constant 0 : i32
    %c0_i32_0 = arith.constant 0 : i32
    %c0_i32_1 = arith.constant 0 : i32
    %c0_i32_2 = arith.constant 0 : i32
    return %c0_i32, %c0_i32_0, %c0_i32_1 : i32, i32, i32
  }
  func.func @transform_3(%arg0: i32) -> (i32, i32) {
    %c0_i32 = arith.constant 0 : i32
    %c0_i32_0 = arith.constant 0 : i32
    %c0_i32_1 = arith.constant 0 : i32
    return %c0_i32, %c0_i32_0 : i32, i32
  }
  func.func @transform_4(%arg0: i32) -> (i32, i32) {
    %c0_i32 = arith.constant 0 : i32
    %c0_i32_0 = arith.constant 0 : i32
    return %arg0, %c0_i32 : i32, i32
  }
}

module attributes {stable_mosaic.version = 11 : i64} {
  func.func @_bigru_layer_kernel(%arg0: i32, %arg1: memref<2x8x384xf32, #tpu.memory_space<vmem>>, %arg2: memref<2x8x384xf32, #tpu.memory_space<vmem>>, %arg3: memref<128x384xbf16, #tpu.memory_space<vmem>>, %arg4: memref<128x384xbf16, #tpu.memory_space<vmem>>, %arg5: memref<2x1x128xf32, #tpu.memory_space<vmem>>, %arg6: memref<2x8x128xf32, #tpu.memory_space<vmem>>, %arg7: memref<2x8x128xf32, #tpu.memory_space<vmem>>, %arg8: memref<2x128xf32, #tpu.memory_space<vmem>>, %arg9: memref<2x128xf32, #tpu.memory_space<vmem>>) attributes {dimension_semantics = [#tpu.dimension_semantics<arbitrary>], iteration_bounds = array<i64: 1>, scalar_prefetch = 0 : i64, scratch_operands = 2 : i64, tpu.core_type = #tpu.core_type<tc>, window_params = [{transform_indices = @transform_0, window_bounds = array<i64: 2, 8, 384>}, {transform_indices = @transform_1, window_bounds = array<i64: 2, 8, 384>}, {pipeline_mode = #tpu.pipeline_mode<synchronous>, transform_indices = @transform_2, window_bounds = array<i64: 128, 384>}, {pipeline_mode = #tpu.pipeline_mode<synchronous>, transform_indices = @transform_3, window_bounds = array<i64: 128, 384>}, {pipeline_mode = #tpu.pipeline_mode<synchronous>, transform_indices = @transform_4, window_bounds = array<i64: 2, 1, 128>}, {transform_indices = @transform_5, window_bounds = array<i64: 2, 8, 128>}, {transform_indices = @transform_6, window_bounds = array<i64: 2, 8, 128>}]} {
    %c0_i32 = arith.constant 0 : i32
    %0 = arith.cmpi eq, %arg0, %c0_i32 : i32
    %1 = arith.extui %0 : i1 to i32
    %c0_i32_0 = arith.constant 0 : i32
    %2 = arith.cmpi ne, %1, %c0_i32_0 : i32
    scf.if %2 {
      %cst_184 = arith.constant 0.000000e+00 : f32
      %587 = vector.broadcast %cst_184 : f32 to vector<2x128xf32>
      %c0_185 = arith.constant 0 : index
      %c0_186 = arith.constant 0 : index
      %588 = vector.load %arg8[%c0_185, %c0_186] : memref<2x128xf32, #tpu.memory_space<vmem>>, vector<2x128xf32>
      tpu.vector_store %arg8[%c0_185, %c0_186], %587 {strides = array<i32>} : memref<2x128xf32, #tpu.memory_space<vmem>>, vector<2x128xf32>,
      %cst_187 = arith.constant 0.000000e+00 : f32
      %589 = vector.broadcast %cst_187 : f32 to vector<2x128xf32>
      %c0_188 = arith.constant 0 : index
      %c0_189 = arith.constant 0 : index
      %590 = vector.load %arg9[%c0_188, %c0_189] : memref<2x128xf32, #tpu.memory_space<vmem>>, vector<2x128xf32>
      tpu.vector_store %arg9[%c0_188, %c0_189], %589 {strides = array<i32>} : memref<2x128xf32, #tpu.memory_space<vmem>>, vector<2x128xf32>,
    } else {
    }
    %c0 = arith.constant 0 : index
    %c0_1 = arith.constant 0 : index
    %c0_2 = arith.constant 0 : index
    %3 = vector.load %arg1[%c0, %c0_1, %c0_2] : memref<2x8x384xf32, #tpu.memory_space<vmem>>, vector<2x8x384xf32>
    %c0_3 = arith.constant 0 : index
    %c0_4 = arith.constant 0 : index
    %c0_5 = arith.constant 0 : index
    %4 = vector.load %arg2[%c0_3, %c0_4, %c0_5] : memref<2x8x384xf32, #tpu.memory_space<vmem>>, vector<2x8x384xf32>
    %c0_6 = arith.constant 0 : index
    %c0_7 = arith.constant 0 : index
    %5 = vector.load %arg3[%c0_6, %c0_7] : memref<128x384xbf16, #tpu.memory_space<vmem>>, vector<128x384xbf16>
    %c0_8 = arith.constant 0 : index
    %c0_9 = arith.constant 0 : index
    %6 = vector.load %arg4[%c0_8, %c0_9] : memref<128x384xbf16, #tpu.memory_space<vmem>>, vector<128x384xbf16>
    %c0_10 = arith.constant 0 : index
    %c0_11 = arith.constant 0 : index
    %c0_12 = arith.constant 0 : index
    %7 = vector.load %arg5[%c0_10, %c0_11, %c0_12] : memref<2x1x128xf32, #tpu.memory_space<vmem>>, vector<1x1x128xf32>
    %8 = vector.shape_cast %7 : vector<1x1x128xf32> to vector<1x128xf32>
    %c1 = arith.constant 1 : index
    %c0_13 = arith.constant 0 : index
    %c0_14 = arith.constant 0 : index
    %9 = vector.load %arg5[%c1, %c0_13, %c0_14] : memref<2x1x128xf32, #tpu.memory_space<vmem>>, vector<1x1x128xf32>
    %10 = vector.shape_cast %9 : vector<1x1x128xf32> to vector<1x128xf32>
    %11 = vector.extract_strided_slice %3 {offsets = [0, 0, 0], sizes = [2, 1, 384], strides = [1, 1, 1]} : vector<2x8x384xf32> to vector<2x1x384xf32>
    %12 = vector.shape_cast %11 : vector<2x1x384xf32> to vector<2x384xf32>
    %c0_15 = arith.constant 0 : index
    %c0_16 = arith.constant 0 : index
    %13 = vector.load %arg8[%c0_15, %c0_16] : memref<2x128xf32, #tpu.memory_space<vmem>>, vector<2x128xf32>
    %14 = arith.truncf %13 : vector<2x128xf32> to vector<2x128xbf16>
    %cst = arith.constant dense<0.000000e+00> : vector<2x384xf32>
    %15 = tpu.matmul %14, %5, %cst {dimension_numbers = #tpu.dot_dimension_numbers<[1], [0], [0], [1], [0, 0, 1, 1], [], []>} : vector<2x128xbf16>, vector<128x384xbf16>, vector<2x384xf32> -> vector<2x384xf32>
    %16 = vector.extract_strided_slice %12 {offsets = [0, 0], sizes = [2, 128], strides = [1, 1]} : vector<2x384xf32> to vector<2x128xf32>
    %17 = vector.extract_strided_slice %15 {offsets = [0, 0], sizes = [2, 128], strides = [1, 1]} : vector<2x384xf32> to vector<2x128xf32>
    %18 = arith.addf %16, %17 : vector<2x128xf32>
    %19 = arith.negf %18 : vector<2x128xf32>
    %20 = math.exp %19 : vector<2x128xf32>
    %cst_17 = arith.constant 1.000000e+00 : f32
    %21 = vector.broadcast %cst_17 : f32 to vector<2x128xf32>
    %22 = arith.addf %21, %20 : vector<2x128xf32>
    %23 = arith.divf %21, %22 : vector<2x128xf32>
    %24 = vector.extract_strided_slice %12 {offsets = [0, 128], sizes = [2, 128], strides = [1, 1]} : vector<2x384xf32> to vector<2x128xf32>
    %25 = vector.extract_strided_slice %15 {offsets = [0, 128], sizes = [2, 128], strides = [1, 1]} : vector<2x384xf32> to vector<2x128xf32>
    %26 = arith.addf %24, %25 : vector<2x128xf32>
    %27 = arith.negf %26 : vector<2x128xf32>
    %28 = math.exp %27 : vector<2x128xf32>
    %cst_18 = arith.constant 1.000000e+00 : f32
    %29 = vector.broadcast %cst_18 : f32 to vector<2x128xf32>
    %30 = arith.addf %29, %28 : vector<2x128xf32>
    %31 = arith.divf %29, %30 : vector<2x128xf32>
    %32 = vector.extract_strided_slice %12 {offsets = [0, 256], sizes = [2, 128], strides = [1, 1]} : vector<2x384xf32> to vector<2x128xf32>
    %33 = vector.extract_strided_slice %15 {offsets = [0, 256], sizes = [2, 128], strides = [1, 1]} : vector<2x384xf32> to vector<2x128xf32>
    %34 = vector.broadcast %8 : vector<1x128xf32> to vector<2x128xf32>
    %35 = arith.addf %33, %34 : vector<2x128xf32>
    %36 = arith.mulf %23, %35 : vector<2x128xf32>
    %37 = arith.addf %32, %36 : vector<2x128xf32>
    %38 = math.tanh %37 : vector<2x128xf32>
    %cst_19 = arith.constant 1.000000e+00 : f32
    %39 = vector.broadcast %cst_19 : f32 to vector<2x128xf32>
    %40 = arith.subf %39, %31 : vector<2x128xf32>
    %41 = arith.mulf %40, %38 : vector<2x128xf32>
    %42 = arith.mulf %31, %13 : vector<2x128xf32>
    %43 = arith.addf %41, %42 : vector<2x128xf32>
    %44 = vector.extract_strided_slice %4 {offsets = [0, 7, 0], sizes = [2, 1, 384], strides = [1, 1, 1]} : vector<2x8x384xf32> to vector<2x1x384xf32>
    %45 = vector.shape_cast %44 : vector<2x1x384xf32> to vector<2x384xf32>
    %c0_20 = arith.constant 0 : index
    %c0_21 = arith.constant 0 : index
    %46 = vector.load %arg9[%c0_20, %c0_21] : memref<2x128xf32, #tpu.memory_space<vmem>>, vector<2x128xf32>
    %47 = arith.truncf %46 : vector<2x128xf32> to vector<2x128xbf16>
    %cst_22 = arith.constant dense<0.000000e+00> : vector<2x384xf32>
    %48 = tpu.matmul %47, %6, %cst_22 {dimension_numbers = #tpu.dot_dimension_numbers<[1], [0], [0], [1], [0, 0, 1, 1], [], []>} : vector<2x128xbf16>, vector<128x384xbf16>, vector<2x384xf32> -> vector<2x384xf32>
    %49 = vector.extract_strided_slice %45 {offsets = [0, 0], sizes = [2, 128], strides = [1, 1]} : vector<2x384xf32> to vector<2x128xf32>
    %50 = vector.extract_strided_slice %48 {offsets = [0, 0], sizes = [2, 128], strides = [1, 1]} : vector<2x384xf32> to vector<2x128xf32>
    %51 = arith.addf %49, %50 : vector<2x128xf32>
    %52 = arith.negf %51 : vector<2x128xf32>
    %53 = math.exp %52 : vector<2x128xf32>
    %cst_23 = arith.constant 1.000000e+00 : f32
    %54 = vector.broadcast %cst_23 : f32 to vector<2x128xf32>
    %55 = arith.addf %54, %53 : vector<2x128xf32>
    %56 = arith.divf %54, %55 : vector<2x128xf32>
    %57 = vector.extract_strided_slice %45 {offsets = [0, 128], sizes = [2, 128], strides = [1, 1]} : vector<2x384xf32> to vector<2x128xf32>
    %58 = vector.extract_strided_slice %48 {offsets = [0, 128], sizes = [2, 128], strides = [1, 1]} : vector<2x384xf32> to vector<2x128xf32>
    %59 = arith.addf %57, %58 : vector<2x128xf32>
    %60 = arith.negf %59 : vector<2x128xf32>
    %61 = math.exp %60 : vector<2x128xf32>
    %cst_24 = arith.constant 1.000000e+00 : f32
    %62 = vector.broadcast %cst_24 : f32 to vector<2x128xf32>
    %63 = arith.addf %62, %61 : vector<2x128xf32>
    %64 = arith.divf %62, %63 : vector<2x128xf32>
    %65 = vector.extract_strided_slice %45 {offsets = [0, 256], sizes = [2, 128], strides = [1, 1]} : vector<2x384xf32> to vector<2x128xf32>
    %66 = vector.extract_strided_slice %48 {offsets = [0, 256], sizes = [2, 128], strides = [1, 1]} : vector<2x384xf32> to vector<2x128xf32>
    %67 = vector.broadcast %10 : vector<1x128xf32> to vector<2x128xf32>
    %68 = arith.addf %66, %67 : vector<2x128xf32>
    %69 = arith.mulf %56, %68 : vector<2x128xf32>
    %70 = arith.addf %65, %69 : vector<2x128xf32>
    %71 = math.tanh %70 : vector<2x128xf32>
    %cst_25 = arith.constant 1.000000e+00 : f32
    %72 = vector.broadcast %cst_25 : f32 to vector<2x128xf32>
    %73 = arith.subf %72, %64 : vector<2x128xf32>
    %74 = arith.mulf %73, %71 : vector<2x128xf32>
    %75 = arith.mulf %64, %46 : vector<2x128xf32>
    %76 = arith.addf %74, %75 : vector<2x128xf32>
    %c0_26 = arith.constant 0 : index
    %c0_27 = arith.constant 0 : index
    %77 = vector.load %arg8[%c0_26, %c0_27] : memref<2x128xf32, #tpu.memory_space<vmem>>, vector<2x128xf32>
    tpu.vector_store %arg8[%c0_26, %c0_27], %43 {strides = array<i32>} : memref<2x128xf32, #tpu.memory_space<vmem>>, vector<2x128xf32>,
    %c0_28 = arith.constant 0 : index
    %c0_29 = arith.constant 0 : index
    %78 = vector.load %arg9[%c0_28, %c0_29] : memref<2x128xf32, #tpu.memory_space<vmem>>, vector<2x128xf32>
    tpu.vector_store %arg9[%c0_28, %c0_29], %76 {strides = array<i32>} : memref<2x128xf32, #tpu.memory_space<vmem>>, vector<2x128xf32>,
    %79 = vector.shape_cast %43 : vector<2x128xf32> to vector<2x1x128xf32>
    %c0_30 = arith.constant 0 : index
    %c0_31 = arith.constant 0 : index
    %c0_32 = arith.constant 0 : index
    %80 = vector.load %arg6[%c0_30, %c0_31, %c0_32] : memref<2x8x128xf32, #tpu.memory_space<vmem>>, vector<2x1x128xf32>
    tpu.vector_store %arg6[%c0_30, %c0_31, %c0_32], %79 {strides = array<i32>} : memref<2x8x128xf32, #tpu.memory_space<vmem>>, vector<2x1x128xf32>,
    %81 = vector.shape_cast %76 : vector<2x128xf32> to vector<2x1x128xf32>
    %c0_33 = arith.constant 0 : index
    %c7 = arith.constant 7 : index
    %c0_34 = arith.constant 0 : index
    %82 = vector.load %arg7[%c0_33, %c7, %c0_34] : memref<2x8x128xf32, #tpu.memory_space<vmem>>, vector<2x1x128xf32>
    tpu.vector_store %arg7[%c0_33, %c7, %c0_34], %81 {strides = array<i32>} : memref<2x8x128xf32, #tpu.memory_space<vmem>>, vector<2x1x128xf32>,
    %83 = vector.extract_strided_slice %3 {offsets = [0, 1, 0], sizes = [2, 1, 384], strides = [1, 1, 1]} : vector<2x8x384xf32> to vector<2x1x384xf32>
    %84 = vector.shape_cast %83 : vector<2x1x384xf32> to vector<2x384xf32>
    %c0_35 = arith.constant 0 : index
    %c0_36 = arith.constant 0 : index
    %85 = vector.load %arg8[%c0_35, %c0_36] : memref<2x128xf32, #tpu.memory_space<vmem>>, vector<2x128xf32>
    %86 = arith.truncf %85 : vector<2x128xf32> to vector<2x128xbf16>
    %cst_37 = arith.constant dense<0.000000e+00> : vector<2x384xf32>
    %87 = tpu.matmul %86, %5, %cst_37 {dimension_numbers = #tpu.dot_dimension_numbers<[1], [0], [0], [1], [0, 0, 1, 1], [], []>} : vector<2x128xbf16>, vector<128x384xbf16>, vector<2x384xf32> -> vector<2x384xf32>
    %88 = vector.extract_strided_slice %84 {offsets = [0, 0], sizes = [2, 128], strides = [1, 1]} : vector<2x384xf32> to vector<2x128xf32>
    %89 = vector.extract_strided_slice %87 {offsets = [0, 0], sizes = [2, 128], strides = [1, 1]} : vector<2x384xf32> to vector<2x128xf32>
    %90 = arith.addf %88, %89 : vector<2x128xf32>
    %91 = arith.negf %90 : vector<2x128xf32>
    %92 = math.exp %91 : vector<2x128xf32>
    %cst_38 = arith.constant 1.000000e+00 : f32
    %93 = vector.broadcast %cst_38 : f32 to vector<2x128xf32>
    %94 = arith.addf %93, %92 : vector<2x128xf32>
    %95 = arith.divf %93, %94 : vector<2x128xf32>
    %96 = vector.extract_strided_slice %84 {offsets = [0, 128], sizes = [2, 128], strides = [1, 1]} : vector<2x384xf32> to vector<2x128xf32>
    %97 = vector.extract_strided_slice %87 {offsets = [0, 128], sizes = [2, 128], strides = [1, 1]} : vector<2x384xf32> to vector<2x128xf32>
    %98 = arith.addf %96, %97 : vector<2x128xf32>
    %99 = arith.negf %98 : vector<2x128xf32>
    %100 = math.exp %99 : vector<2x128xf32>
    %cst_39 = arith.constant 1.000000e+00 : f32
    %101 = vector.broadcast %cst_39 : f32 to vector<2x128xf32>
    %102 = arith.addf %101, %100 : vector<2x128xf32>
    %103 = arith.divf %101, %102 : vector<2x128xf32>
    %104 = vector.extract_strided_slice %84 {offsets = [0, 256], sizes = [2, 128], strides = [1, 1]} : vector<2x384xf32> to vector<2x128xf32>
    %105 = vector.extract_strided_slice %87 {offsets = [0, 256], sizes = [2, 128], strides = [1, 1]} : vector<2x384xf32> to vector<2x128xf32>
    %106 = vector.broadcast %8 : vector<1x128xf32> to vector<2x128xf32>
    %107 = arith.addf %105, %106 : vector<2x128xf32>
    %108 = arith.mulf %95, %107 : vector<2x128xf32>
    %109 = arith.addf %104, %108 : vector<2x128xf32>
    %110 = math.tanh %109 : vector<2x128xf32>
    %cst_40 = arith.constant 1.000000e+00 : f32
    %111 = vector.broadcast %cst_40 : f32 to vector<2x128xf32>
    %112 = arith.subf %111, %103 : vector<2x128xf32>
    %113 = arith.mulf %112, %110 : vector<2x128xf32>
    %114 = arith.mulf %103, %85 : vector<2x128xf32>
    %115 = arith.addf %113, %114 : vector<2x128xf32>
    %116 = vector.extract_strided_slice %4 {offsets = [0, 6, 0], sizes = [2, 1, 384], strides = [1, 1, 1]} : vector<2x8x384xf32> to vector<2x1x384xf32>
    %117 = vector.shape_cast %116 : vector<2x1x384xf32> to vector<2x384xf32>
    %c0_41 = arith.constant 0 : index
    %c0_42 = arith.constant 0 : index
    %118 = vector.load %arg9[%c0_41, %c0_42] : memref<2x128xf32, #tpu.memory_space<vmem>>, vector<2x128xf32>
    %119 = arith.truncf %118 : vector<2x128xf32> to vector<2x128xbf16>
    %cst_43 = arith.constant dense<0.000000e+00> : vector<2x384xf32>
    %120 = tpu.matmul %119, %6, %cst_43 {dimension_numbers = #tpu.dot_dimension_numbers<[1], [0], [0], [1], [0, 0, 1, 1], [], []>} : vector<2x128xbf16>, vector<128x384xbf16>, vector<2x384xf32> -> vector<2x384xf32>
    %121 = vector.extract_strided_slice %117 {offsets = [0, 0], sizes = [2, 128], strides = [1, 1]} : vector<2x384xf32> to vector<2x128xf32>
    %122 = vector.extract_strided_slice %120 {offsets = [0, 0], sizes = [2, 128], strides = [1, 1]} : vector<2x384xf32> to vector<2x128xf32>
    %123 = arith.addf %121, %122 : vector<2x128xf32>
    %124 = arith.negf %123 : vector<2x128xf32>
    %125 = math.exp %124 : vector<2x128xf32>
    %cst_44 = arith.constant 1.000000e+00 : f32
    %126 = vector.broadcast %cst_44 : f32 to vector<2x128xf32>
    %127 = arith.addf %126, %125 : vector<2x128xf32>
    %128 = arith.divf %126, %127 : vector<2x128xf32>
    %129 = vector.extract_strided_slice %117 {offsets = [0, 128], sizes = [2, 128], strides = [1, 1]} : vector<2x384xf32> to vector<2x128xf32>
    %130 = vector.extract_strided_slice %120 {offsets = [0, 128], sizes = [2, 128], strides = [1, 1]} : vector<2x384xf32> to vector<2x128xf32>
    %131 = arith.addf %129, %130 : vector<2x128xf32>
    %132 = arith.negf %131 : vector<2x128xf32>
    %133 = math.exp %132 : vector<2x128xf32>
    %cst_45 = arith.constant 1.000000e+00 : f32
    %134 = vector.broadcast %cst_45 : f32 to vector<2x128xf32>
    %135 = arith.addf %134, %133 : vector<2x128xf32>
    %136 = arith.divf %134, %135 : vector<2x128xf32>
    %137 = vector.extract_strided_slice %117 {offsets = [0, 256], sizes = [2, 128], strides = [1, 1]} : vector<2x384xf32> to vector<2x128xf32>
    %138 = vector.extract_strided_slice %120 {offsets = [0, 256], sizes = [2, 128], strides = [1, 1]} : vector<2x384xf32> to vector<2x128xf32>
    %139 = vector.broadcast %10 : vector<1x128xf32> to vector<2x128xf32>
    %140 = arith.addf %138, %139 : vector<2x128xf32>
    %141 = arith.mulf %128, %140 : vector<2x128xf32>
    %142 = arith.addf %137, %141 : vector<2x128xf32>
    %143 = math.tanh %142 : vector<2x128xf32>
    %cst_46 = arith.constant 1.000000e+00 : f32
    %144 = vector.broadcast %cst_46 : f32 to vector<2x128xf32>
    %145 = arith.subf %144, %136 : vector<2x128xf32>
    %146 = arith.mulf %145, %143 : vector<2x128xf32>
    %147 = arith.mulf %136, %118 : vector<2x128xf32>
    %148 = arith.addf %146, %147 : vector<2x128xf32>
    %c0_47 = arith.constant 0 : index
    %c0_48 = arith.constant 0 : index
    %149 = vector.load %arg8[%c0_47, %c0_48] : memref<2x128xf32, #tpu.memory_space<vmem>>, vector<2x128xf32>
    tpu.vector_store %arg8[%c0_47, %c0_48], %115 {strides = array<i32>} : memref<2x128xf32, #tpu.memory_space<vmem>>, vector<2x128xf32>,
    %c0_49 = arith.constant 0 : index
    %c0_50 = arith.constant 0 : index
    %150 = vector.load %arg9[%c0_49, %c0_50] : memref<2x128xf32, #tpu.memory_space<vmem>>, vector<2x128xf32>
    tpu.vector_store %arg9[%c0_49, %c0_50], %148 {strides = array<i32>} : memref<2x128xf32, #tpu.memory_space<vmem>>, vector<2x128xf32>,
    %151 = vector.shape_cast %115 : vector<2x128xf32> to vector<2x1x128xf32>
    %c0_51 = arith.constant 0 : index
    %c1_52 = arith.constant 1 : index
    %c0_53 = arith.constant 0 : index
    %152 = vector.load %arg6[%c0_51, %c1_52, %c0_53] : memref<2x8x128xf32, #tpu.memory_space<vmem>>, vector<2x1x128xf32>
    tpu.vector_store %arg6[%c0_51, %c1_52, %c0_53], %151 {strides = array<i32>} : memref<2x8x128xf32, #tpu.memory_space<vmem>>, vector<2x1x128xf32>,
    %153 = vector.shape_cast %148 : vector<2x128xf32> to vector<2x1x128xf32>
    %c0_54 = arith.constant 0 : index
    %c6 = arith.constant 6 : index
    %c0_55 = arith.constant 0 : index
    %154 = vector.load %arg7[%c0_54, %c6, %c0_55] : memref<2x8x128xf32, #tpu.memory_space<vmem>>, vector<2x1x128xf32>
    tpu.vector_store %arg7[%c0_54, %c6, %c0_55], %153 {strides = array<i32>} : memref<2x8x128xf32, #tpu.memory_space<vmem>>, vector<2x1x128xf32>,
    %155 = vector.extract_strided_slice %3 {offsets = [0, 2, 0], sizes = [2, 1, 384], strides = [1, 1, 1]} : vector<2x8x384xf32> to vector<2x1x384xf32>
    %156 = vector.shape_cast %155 : vector<2x1x384xf32> to vector<2x384xf32>
    %c0_56 = arith.constant 0 : index
    %c0_57 = arith.constant 0 : index
    %157 = vector.load %arg8[%c0_56, %c0_57] : memref<2x128xf32, #tpu.memory_space<vmem>>, vector<2x128xf32>
    %158 = arith.truncf %157 : vector<2x128xf32> to vector<2x128xbf16>
    %cst_58 = arith.constant dense<0.000000e+00> : vector<2x384xf32>
    %159 = tpu.matmul %158, %5, %cst_58 {dimension_numbers = #tpu.dot_dimension_numbers<[1], [0], [0], [1], [0, 0, 1, 1], [], []>} : vector<2x128xbf16>, vector<128x384xbf16>, vector<2x384xf32> -> vector<2x384xf32>
    %160 = vector.extract_strided_slice %156 {offsets = [0, 0], sizes = [2, 128], strides = [1, 1]} : vector<2x384xf32> to vector<2x128xf32>
    %161 = vector.extract_strided_slice %159 {offsets = [0, 0], sizes = [2, 128], strides = [1, 1]} : vector<2x384xf32> to vector<2x128xf32>
    %162 = arith.addf %160, %161 : vector<2x128xf32>
    %163 = arith.negf %162 : vector<2x128xf32>
    %164 = math.exp %163 : vector<2x128xf32>
    %cst_59 = arith.constant 1.000000e+00 : f32
    %165 = vector.broadcast %cst_59 : f32 to vector<2x128xf32>
    %166 = arith.addf %165, %164 : vector<2x128xf32>
    %167 = arith.divf %165, %166 : vector<2x128xf32>
    %168 = vector.extract_strided_slice %156 {offsets = [0, 128], sizes = [2, 128], strides = [1, 1]} : vector<2x384xf32> to vector<2x128xf32>
    %169 = vector.extract_strided_slice %159 {offsets = [0, 128], sizes = [2, 128], strides = [1, 1]} : vector<2x384xf32> to vector<2x128xf32>
    %170 = arith.addf %168, %169 : vector<2x128xf32>
    %171 = arith.negf %170 : vector<2x128xf32>
    %172 = math.exp %171 : vector<2x128xf32>
    %cst_60 = arith.constant 1.000000e+00 : f32
    %173 = vector.broadcast %cst_60 : f32 to vector<2x128xf32>
    %174 = arith.addf %173, %172 : vector<2x128xf32>
    %175 = arith.divf %173, %174 : vector<2x128xf32>
    %176 = vector.extract_strided_slice %156 {offsets = [0, 256], sizes = [2, 128], strides = [1, 1]} : vector<2x384xf32> to vector<2x128xf32>
    %177 = vector.extract_strided_slice %159 {offsets = [0, 256], sizes = [2, 128], strides = [1, 1]} : vector<2x384xf32> to vector<2x128xf32>
    %178 = vector.broadcast %8 : vector<1x128xf32> to vector<2x128xf32>
    %179 = arith.addf %177, %178 : vector<2x128xf32>
    %180 = arith.mulf %167, %179 : vector<2x128xf32>
    %181 = arith.addf %176, %180 : vector<2x128xf32>
    %182 = math.tanh %181 : vector<2x128xf32>
    %cst_61 = arith.constant 1.000000e+00 : f32
    %183 = vector.broadcast %cst_61 : f32 to vector<2x128xf32>
    %184 = arith.subf %183, %175 : vector<2x128xf32>
    %185 = arith.mulf %184, %182 : vector<2x128xf32>
    %186 = arith.mulf %175, %157 : vector<2x128xf32>
    %187 = arith.addf %185, %186 : vector<2x128xf32>
    %188 = vector.extract_strided_slice %4 {offsets = [0, 5, 0], sizes = [2, 1, 384], strides = [1, 1, 1]} : vector<2x8x384xf32> to vector<2x1x384xf32>
    %189 = vector.shape_cast %188 : vector<2x1x384xf32> to vector<2x384xf32>
    %c0_62 = arith.constant 0 : index
    %c0_63 = arith.constant 0 : index
    %190 = vector.load %arg9[%c0_62, %c0_63] : memref<2x128xf32, #tpu.memory_space<vmem>>, vector<2x128xf32>
    %191 = arith.truncf %190 : vector<2x128xf32> to vector<2x128xbf16>
    %cst_64 = arith.constant dense<0.000000e+00> : vector<2x384xf32>
    %192 = tpu.matmul %191, %6, %cst_64 {dimension_numbers = #tpu.dot_dimension_numbers<[1], [0], [0], [1], [0, 0, 1, 1], [], []>} : vector<2x128xbf16>, vector<128x384xbf16>, vector<2x384xf32> -> vector<2x384xf32>
    %193 = vector.extract_strided_slice %189 {offsets = [0, 0], sizes = [2, 128], strides = [1, 1]} : vector<2x384xf32> to vector<2x128xf32>
    %194 = vector.extract_strided_slice %192 {offsets = [0, 0], sizes = [2, 128], strides = [1, 1]} : vector<2x384xf32> to vector<2x128xf32>
    %195 = arith.addf %193, %194 : vector<2x128xf32>
    %196 = arith.negf %195 : vector<2x128xf32>
    %197 = math.exp %196 : vector<2x128xf32>
    %cst_65 = arith.constant 1.000000e+00 : f32
    %198 = vector.broadcast %cst_65 : f32 to vector<2x128xf32>
    %199 = arith.addf %198, %197 : vector<2x128xf32>
    %200 = arith.divf %198, %199 : vector<2x128xf32>
    %201 = vector.extract_strided_slice %189 {offsets = [0, 128], sizes = [2, 128], strides = [1, 1]} : vector<2x384xf32> to vector<2x128xf32>
    %202 = vector.extract_strided_slice %192 {offsets = [0, 128], sizes = [2, 128], strides = [1, 1]} : vector<2x384xf32> to vector<2x128xf32>
    %203 = arith.addf %201, %202 : vector<2x128xf32>
    %204 = arith.negf %203 : vector<2x128xf32>
    %205 = math.exp %204 : vector<2x128xf32>
    %cst_66 = arith.constant 1.000000e+00 : f32
    %206 = vector.broadcast %cst_66 : f32 to vector<2x128xf32>
    %207 = arith.addf %206, %205 : vector<2x128xf32>
    %208 = arith.divf %206, %207 : vector<2x128xf32>
    %209 = vector.extract_strided_slice %189 {offsets = [0, 256], sizes = [2, 128], strides = [1, 1]} : vector<2x384xf32> to vector<2x128xf32>
    %210 = vector.extract_strided_slice %192 {offsets = [0, 256], sizes = [2, 128], strides = [1, 1]} : vector<2x384xf32> to vector<2x128xf32>
    %211 = vector.broadcast %10 : vector<1x128xf32> to vector<2x128xf32>
    %212 = arith.addf %210, %211 : vector<2x128xf32>
    %213 = arith.mulf %200, %212 : vector<2x128xf32>
    %214 = arith.addf %209, %213 : vector<2x128xf32>
    %215 = math.tanh %214 : vector<2x128xf32>
    %cst_67 = arith.constant 1.000000e+00 : f32
    %216 = vector.broadcast %cst_67 : f32 to vector<2x128xf32>
    %217 = arith.subf %216, %208 : vector<2x128xf32>
    %218 = arith.mulf %217, %215 : vector<2x128xf32>
    %219 = arith.mulf %208, %190 : vector<2x128xf32>
    %220 = arith.addf %218, %219 : vector<2x128xf32>
    %c0_68 = arith.constant 0 : index
    %c0_69 = arith.constant 0 : index
    %221 = vector.load %arg8[%c0_68, %c0_69] : memref<2x128xf32, #tpu.memory_space<vmem>>, vector<2x128xf32>
    tpu.vector_store %arg8[%c0_68, %c0_69], %187 {strides = array<i32>} : memref<2x128xf32, #tpu.memory_space<vmem>>, vector<2x128xf32>,
    %c0_70 = arith.constant 0 : index
    %c0_71 = arith.constant 0 : index
    %222 = vector.load %arg9[%c0_70, %c0_71] : memref<2x128xf32, #tpu.memory_space<vmem>>, vector<2x128xf32>
    tpu.vector_store %arg9[%c0_70, %c0_71], %220 {strides = array<i32>} : memref<2x128xf32, #tpu.memory_space<vmem>>, vector<2x128xf32>,
    %223 = vector.shape_cast %187 : vector<2x128xf32> to vector<2x1x128xf32>
    %c0_72 = arith.constant 0 : index
    %c2 = arith.constant 2 : index
    %c0_73 = arith.constant 0 : index
    %224 = vector.load %arg6[%c0_72, %c2, %c0_73] : memref<2x8x128xf32, #tpu.memory_space<vmem>>, vector<2x1x128xf32>
    tpu.vector_store %arg6[%c0_72, %c2, %c0_73], %223 {strides = array<i32>} : memref<2x8x128xf32, #tpu.memory_space<vmem>>, vector<2x1x128xf32>,
    %225 = vector.shape_cast %220 : vector<2x128xf32> to vector<2x1x128xf32>
    %c0_74 = arith.constant 0 : index
    %c5 = arith.constant 5 : index
    %c0_75 = arith.constant 0 : index
    %226 = vector.load %arg7[%c0_74, %c5, %c0_75] : memref<2x8x128xf32, #tpu.memory_space<vmem>>, vector<2x1x128xf32>
    tpu.vector_store %arg7[%c0_74, %c5, %c0_75], %225 {strides = array<i32>} : memref<2x8x128xf32, #tpu.memory_space<vmem>>, vector<2x1x128xf32>,
    %227 = vector.extract_strided_slice %3 {offsets = [0, 3, 0], sizes = [2, 1, 384], strides = [1, 1, 1]} : vector<2x8x384xf32> to vector<2x1x384xf32>
    %228 = vector.shape_cast %227 : vector<2x1x384xf32> to vector<2x384xf32>
    %c0_76 = arith.constant 0 : index
    %c0_77 = arith.constant 0 : index
    %229 = vector.load %arg8[%c0_76, %c0_77] : memref<2x128xf32, #tpu.memory_space<vmem>>, vector<2x128xf32>
    %230 = arith.truncf %229 : vector<2x128xf32> to vector<2x128xbf16>
    %cst_78 = arith.constant dense<0.000000e+00> : vector<2x384xf32>
    %231 = tpu.matmul %230, %5, %cst_78 {dimension_numbers = #tpu.dot_dimension_numbers<[1], [0], [0], [1], [0, 0, 1, 1], [], []>} : vector<2x128xbf16>, vector<128x384xbf16>, vector<2x384xf32> -> vector<2x384xf32>
    %232 = vector.extract_strided_slice %228 {offsets = [0, 0], sizes = [2, 128], strides = [1, 1]} : vector<2x384xf32> to vector<2x128xf32>
    %233 = vector.extract_strided_slice %231 {offsets = [0, 0], sizes = [2, 128], strides = [1, 1]} : vector<2x384xf32> to vector<2x128xf32>
    %234 = arith.addf %232, %233 : vector<2x128xf32>
    %235 = arith.negf %234 : vector<2x128xf32>
    %236 = math.exp %235 : vector<2x128xf32>
    %cst_79 = arith.constant 1.000000e+00 : f32
    %237 = vector.broadcast %cst_79 : f32 to vector<2x128xf32>
    %238 = arith.addf %237, %236 : vector<2x128xf32>
    %239 = arith.divf %237, %238 : vector<2x128xf32>
    %240 = vector.extract_strided_slice %228 {offsets = [0, 128], sizes = [2, 128], strides = [1, 1]} : vector<2x384xf32> to vector<2x128xf32>
    %241 = vector.extract_strided_slice %231 {offsets = [0, 128], sizes = [2, 128], strides = [1, 1]} : vector<2x384xf32> to vector<2x128xf32>
    %242 = arith.addf %240, %241 : vector<2x128xf32>
    %243 = arith.negf %242 : vector<2x128xf32>
    %244 = math.exp %243 : vector<2x128xf32>
    %cst_80 = arith.constant 1.000000e+00 : f32
    %245 = vector.broadcast %cst_80 : f32 to vector<2x128xf32>
    %246 = arith.addf %245, %244 : vector<2x128xf32>
    %247 = arith.divf %245, %246 : vector<2x128xf32>
    %248 = vector.extract_strided_slice %228 {offsets = [0, 256], sizes = [2, 128], strides = [1, 1]} : vector<2x384xf32> to vector<2x128xf32>
    %249 = vector.extract_strided_slice %231 {offsets = [0, 256], sizes = [2, 128], strides = [1, 1]} : vector<2x384xf32> to vector<2x128xf32>
    %250 = vector.broadcast %8 : vector<1x128xf32> to vector<2x128xf32>
    %251 = arith.addf %249, %250 : vector<2x128xf32>
    %252 = arith.mulf %239, %251 : vector<2x128xf32>
    %253 = arith.addf %248, %252 : vector<2x128xf32>
    %254 = math.tanh %253 : vector<2x128xf32>
    %cst_81 = arith.constant 1.000000e+00 : f32
    %255 = vector.broadcast %cst_81 : f32 to vector<2x128xf32>
    %256 = arith.subf %255, %247 : vector<2x128xf32>
    %257 = arith.mulf %256, %254 : vector<2x128xf32>
    %258 = arith.mulf %247, %229 : vector<2x128xf32>
    %259 = arith.addf %257, %258 : vector<2x128xf32>
    %260 = vector.extract_strided_slice %4 {offsets = [0, 4, 0], sizes = [2, 1, 384], strides = [1, 1, 1]} : vector<2x8x384xf32> to vector<2x1x384xf32>
    %261 = vector.shape_cast %260 : vector<2x1x384xf32> to vector<2x384xf32>
    %c0_82 = arith.constant 0 : index
    %c0_83 = arith.constant 0 : index
    %262 = vector.load %arg9[%c0_82, %c0_83] : memref<2x128xf32, #tpu.memory_space<vmem>>, vector<2x128xf32>
    %263 = arith.truncf %262 : vector<2x128xf32> to vector<2x128xbf16>
    %cst_84 = arith.constant dense<0.000000e+00> : vector<2x384xf32>
    %264 = tpu.matmul %263, %6, %cst_84 {dimension_numbers = #tpu.dot_dimension_numbers<[1], [0], [0], [1], [0, 0, 1, 1], [], []>} : vector<2x128xbf16>, vector<128x384xbf16>, vector<2x384xf32> -> vector<2x384xf32>
    %265 = vector.extract_strided_slice %261 {offsets = [0, 0], sizes = [2, 128], strides = [1, 1]} : vector<2x384xf32> to vector<2x128xf32>
    %266 = vector.extract_strided_slice %264 {offsets = [0, 0], sizes = [2, 128], strides = [1, 1]} : vector<2x384xf32> to vector<2x128xf32>
    %267 = arith.addf %265, %266 : vector<2x128xf32>
    %268 = arith.negf %267 : vector<2x128xf32>
    %269 = math.exp %268 : vector<2x128xf32>
    %cst_85 = arith.constant 1.000000e+00 : f32
    %270 = vector.broadcast %cst_85 : f32 to vector<2x128xf32>
    %271 = arith.addf %270, %269 : vector<2x128xf32>
    %272 = arith.divf %270, %271 : vector<2x128xf32>
    %273 = vector.extract_strided_slice %261 {offsets = [0, 128], sizes = [2, 128], strides = [1, 1]} : vector<2x384xf32> to vector<2x128xf32>
    %274 = vector.extract_strided_slice %264 {offsets = [0, 128], sizes = [2, 128], strides = [1, 1]} : vector<2x384xf32> to vector<2x128xf32>
    %275 = arith.addf %273, %274 : vector<2x128xf32>
    %276 = arith.negf %275 : vector<2x128xf32>
    %277 = math.exp %276 : vector<2x128xf32>
    %cst_86 = arith.constant 1.000000e+00 : f32
    %278 = vector.broadcast %cst_86 : f32 to vector<2x128xf32>
    %279 = arith.addf %278, %277 : vector<2x128xf32>
    %280 = arith.divf %278, %279 : vector<2x128xf32>
    %281 = vector.extract_strided_slice %261 {offsets = [0, 256], sizes = [2, 128], strides = [1, 1]} : vector<2x384xf32> to vector<2x128xf32>
    %282 = vector.extract_strided_slice %264 {offsets = [0, 256], sizes = [2, 128], strides = [1, 1]} : vector<2x384xf32> to vector<2x128xf32>
    %283 = vector.broadcast %10 : vector<1x128xf32> to vector<2x128xf32>
    %284 = arith.addf %282, %283 : vector<2x128xf32>
    %285 = arith.mulf %272, %284 : vector<2x128xf32>
    %286 = arith.addf %281, %285 : vector<2x128xf32>
    %287 = math.tanh %286 : vector<2x128xf32>
    %cst_87 = arith.constant 1.000000e+00 : f32
    %288 = vector.broadcast %cst_87 : f32 to vector<2x128xf32>
    %289 = arith.subf %288, %280 : vector<2x128xf32>
    %290 = arith.mulf %289, %287 : vector<2x128xf32>
    %291 = arith.mulf %280, %262 : vector<2x128xf32>
    %292 = arith.addf %290, %291 : vector<2x128xf32>
    %c0_88 = arith.constant 0 : index
    %c0_89 = arith.constant 0 : index
    %293 = vector.load %arg8[%c0_88, %c0_89] : memref<2x128xf32, #tpu.memory_space<vmem>>, vector<2x128xf32>
    tpu.vector_store %arg8[%c0_88, %c0_89], %259 {strides = array<i32>} : memref<2x128xf32, #tpu.memory_space<vmem>>, vector<2x128xf32>,
    %c0_90 = arith.constant 0 : index
    %c0_91 = arith.constant 0 : index
    %294 = vector.load %arg9[%c0_90, %c0_91] : memref<2x128xf32, #tpu.memory_space<vmem>>, vector<2x128xf32>
    tpu.vector_store %arg9[%c0_90, %c0_91], %292 {strides = array<i32>} : memref<2x128xf32, #tpu.memory_space<vmem>>, vector<2x128xf32>,
    %295 = vector.shape_cast %259 : vector<2x128xf32> to vector<2x1x128xf32>
    %c0_92 = arith.constant 0 : index
    %c3 = arith.constant 3 : index
    %c0_93 = arith.constant 0 : index
    %296 = vector.load %arg6[%c0_92, %c3, %c0_93] : memref<2x8x128xf32, #tpu.memory_space<vmem>>, vector<2x1x128xf32>
    tpu.vector_store %arg6[%c0_92, %c3, %c0_93], %295 {strides = array<i32>} : memref<2x8x128xf32, #tpu.memory_space<vmem>>, vector<2x1x128xf32>,
    %297 = vector.shape_cast %292 : vector<2x128xf32> to vector<2x1x128xf32>
    %c0_94 = arith.constant 0 : index
    %c4 = arith.constant 4 : index
    %c0_95 = arith.constant 0 : index
    %298 = vector.load %arg7[%c0_94, %c4, %c0_95] : memref<2x8x128xf32, #tpu.memory_space<vmem>>, vector<2x1x128xf32>
    tpu.vector_store %arg7[%c0_94, %c4, %c0_95], %297 {strides = array<i32>} : memref<2x8x128xf32, #tpu.memory_space<vmem>>, vector<2x1x128xf32>,
    %299 = vector.extract_strided_slice %3 {offsets = [0, 4, 0], sizes = [2, 1, 384], strides = [1, 1, 1]} : vector<2x8x384xf32> to vector<2x1x384xf32>
    %300 = vector.shape_cast %299 : vector<2x1x384xf32> to vector<2x384xf32>
    %c0_96 = arith.constant 0 : index
    %c0_97 = arith.constant 0 : index
    %301 = vector.load %arg8[%c0_96, %c0_97] : memref<2x128xf32, #tpu.memory_space<vmem>>, vector<2x128xf32>
    %302 = arith.truncf %301 : vector<2x128xf32> to vector<2x128xbf16>
    %cst_98 = arith.constant dense<0.000000e+00> : vector<2x384xf32>
    %303 = tpu.matmul %302, %5, %cst_98 {dimension_numbers = #tpu.dot_dimension_numbers<[1], [0], [0], [1], [0, 0, 1, 1], [], []>} : vector<2x128xbf16>, vector<128x384xbf16>, vector<2x384xf32> -> vector<2x384xf32>
    %304 = vector.extract_strided_slice %300 {offsets = [0, 0], sizes = [2, 128], strides = [1, 1]} : vector<2x384xf32> to vector<2x128xf32>
    %305 = vector.extract_strided_slice %303 {offsets = [0, 0], sizes = [2, 128], strides = [1, 1]} : vector<2x384xf32> to vector<2x128xf32>
    %306 = arith.addf %304, %305 : vector<2x128xf32>
    %307 = arith.negf %306 : vector<2x128xf32>
    %308 = math.exp %307 : vector<2x128xf32>
    %cst_99 = arith.constant 1.000000e+00 : f32
    %309 = vector.broadcast %cst_99 : f32 to vector<2x128xf32>
    %310 = arith.addf %309, %308 : vector<2x128xf32>
    %311 = arith.divf %309, %310 : vector<2x128xf32>
    %312 = vector.extract_strided_slice %300 {offsets = [0, 128], sizes = [2, 128], strides = [1, 1]} : vector<2x384xf32> to vector<2x128xf32>
    %313 = vector.extract_strided_slice %303 {offsets = [0, 128], sizes = [2, 128], strides = [1, 1]} : vector<2x384xf32> to vector<2x128xf32>
    %314 = arith.addf %312, %313 : vector<2x128xf32>
    %315 = arith.negf %314 : vector<2x128xf32>
    %316 = math.exp %315 : vector<2x128xf32>
    %cst_100 = arith.constant 1.000000e+00 : f32
    %317 = vector.broadcast %cst_100 : f32 to vector<2x128xf32>
    %318 = arith.addf %317, %316 : vector<2x128xf32>
    %319 = arith.divf %317, %318 : vector<2x128xf32>
    %320 = vector.extract_strided_slice %300 {offsets = [0, 256], sizes = [2, 128], strides = [1, 1]} : vector<2x384xf32> to vector<2x128xf32>
    %321 = vector.extract_strided_slice %303 {offsets = [0, 256], sizes = [2, 128], strides = [1, 1]} : vector<2x384xf32> to vector<2x128xf32>
    %322 = vector.broadcast %8 : vector<1x128xf32> to vector<2x128xf32>
    %323 = arith.addf %321, %322 : vector<2x128xf32>
    %324 = arith.mulf %311, %323 : vector<2x128xf32>
    %325 = arith.addf %320, %324 : vector<2x128xf32>
    %326 = math.tanh %325 : vector<2x128xf32>
    %cst_101 = arith.constant 1.000000e+00 : f32
    %327 = vector.broadcast %cst_101 : f32 to vector<2x128xf32>
    %328 = arith.subf %327, %319 : vector<2x128xf32>
    %329 = arith.mulf %328, %326 : vector<2x128xf32>
    %330 = arith.mulf %319, %301 : vector<2x128xf32>
    %331 = arith.addf %329, %330 : vector<2x128xf32>
    %332 = vector.extract_strided_slice %4 {offsets = [0, 3, 0], sizes = [2, 1, 384], strides = [1, 1, 1]} : vector<2x8x384xf32> to vector<2x1x384xf32>
    %333 = vector.shape_cast %332 : vector<2x1x384xf32> to vector<2x384xf32>
    %c0_102 = arith.constant 0 : index
    %c0_103 = arith.constant 0 : index
    %334 = vector.load %arg9[%c0_102, %c0_103] : memref<2x128xf32, #tpu.memory_space<vmem>>, vector<2x128xf32>
    %335 = arith.truncf %334 : vector<2x128xf32> to vector<2x128xbf16>
    %cst_104 = arith.constant dense<0.000000e+00> : vector<2x384xf32>
    %336 = tpu.matmul %335, %6, %cst_104 {dimension_numbers = #tpu.dot_dimension_numbers<[1], [0], [0], [1], [0, 0, 1, 1], [], []>} : vector<2x128xbf16>, vector<128x384xbf16>, vector<2x384xf32> -> vector<2x384xf32>
    %337 = vector.extract_strided_slice %333 {offsets = [0, 0], sizes = [2, 128], strides = [1, 1]} : vector<2x384xf32> to vector<2x128xf32>
    %338 = vector.extract_strided_slice %336 {offsets = [0, 0], sizes = [2, 128], strides = [1, 1]} : vector<2x384xf32> to vector<2x128xf32>
    %339 = arith.addf %337, %338 : vector<2x128xf32>
    %340 = arith.negf %339 : vector<2x128xf32>
    %341 = math.exp %340 : vector<2x128xf32>
    %cst_105 = arith.constant 1.000000e+00 : f32
    %342 = vector.broadcast %cst_105 : f32 to vector<2x128xf32>
    %343 = arith.addf %342, %341 : vector<2x128xf32>
    %344 = arith.divf %342, %343 : vector<2x128xf32>
    %345 = vector.extract_strided_slice %333 {offsets = [0, 128], sizes = [2, 128], strides = [1, 1]} : vector<2x384xf32> to vector<2x128xf32>
    %346 = vector.extract_strided_slice %336 {offsets = [0, 128], sizes = [2, 128], strides = [1, 1]} : vector<2x384xf32> to vector<2x128xf32>
    %347 = arith.addf %345, %346 : vector<2x128xf32>
    %348 = arith.negf %347 : vector<2x128xf32>
    %349 = math.exp %348 : vector<2x128xf32>
    %cst_106 = arith.constant 1.000000e+00 : f32
    %350 = vector.broadcast %cst_106 : f32 to vector<2x128xf32>
    %351 = arith.addf %350, %349 : vector<2x128xf32>
    %352 = arith.divf %350, %351 : vector<2x128xf32>
    %353 = vector.extract_strided_slice %333 {offsets = [0, 256], sizes = [2, 128], strides = [1, 1]} : vector<2x384xf32> to vector<2x128xf32>
    %354 = vector.extract_strided_slice %336 {offsets = [0, 256], sizes = [2, 128], strides = [1, 1]} : vector<2x384xf32> to vector<2x128xf32>
    %355 = vector.broadcast %10 : vector<1x128xf32> to vector<2x128xf32>
    %356 = arith.addf %354, %355 : vector<2x128xf32>
    %357 = arith.mulf %344, %356 : vector<2x128xf32>
    %358 = arith.addf %353, %357 : vector<2x128xf32>
    %359 = math.tanh %358 : vector<2x128xf32>
    %cst_107 = arith.constant 1.000000e+00 : f32
    %360 = vector.broadcast %cst_107 : f32 to vector<2x128xf32>
    %361 = arith.subf %360, %352 : vector<2x128xf32>
    %362 = arith.mulf %361, %359 : vector<2x128xf32>
    %363 = arith.mulf %352, %334 : vector<2x128xf32>
    %364 = arith.addf %362, %363 : vector<2x128xf32>
    %c0_108 = arith.constant 0 : index
    %c0_109 = arith.constant 0 : index
    %365 = vector.load %arg8[%c0_108, %c0_109] : memref<2x128xf32, #tpu.memory_space<vmem>>, vector<2x128xf32>
    tpu.vector_store %arg8[%c0_108, %c0_109], %331 {strides = array<i32>} : memref<2x128xf32, #tpu.memory_space<vmem>>, vector<2x128xf32>,
    %c0_110 = arith.constant 0 : index
    %c0_111 = arith.constant 0 : index
    %366 = vector.load %arg9[%c0_110, %c0_111] : memref<2x128xf32, #tpu.memory_space<vmem>>, vector<2x128xf32>
    tpu.vector_store %arg9[%c0_110, %c0_111], %364 {strides = array<i32>} : memref<2x128xf32, #tpu.memory_space<vmem>>, vector<2x128xf32>,
    %367 = vector.shape_cast %331 : vector<2x128xf32> to vector<2x1x128xf32>
    %c0_112 = arith.constant 0 : index
    %c4_113 = arith.constant 4 : index
    %c0_114 = arith.constant 0 : index
    %368 = vector.load %arg6[%c0_112, %c4_113, %c0_114] : memref<2x8x128xf32, #tpu.memory_space<vmem>>, vector<2x1x128xf32>
    tpu.vector_store %arg6[%c0_112, %c4_113, %c0_114], %367 {strides = array<i32>} : memref<2x8x128xf32, #tpu.memory_space<vmem>>, vector<2x1x128xf32>,
    %369 = vector.shape_cast %364 : vector<2x128xf32> to vector<2x1x128xf32>
    %c0_115 = arith.constant 0 : index
    %c3_116 = arith.constant 3 : index
    %c0_117 = arith.constant 0 : index
    %370 = vector.load %arg7[%c0_115, %c3_116, %c0_117] : memref<2x8x128xf32, #tpu.memory_space<vmem>>, vector<2x1x128xf32>
    tpu.vector_store %arg7[%c0_115, %c3_116, %c0_117], %369 {strides = array<i32>} : memref<2x8x128xf32, #tpu.memory_space<vmem>>, vector<2x1x128xf32>,
    %371 = vector.extract_strided_slice %3 {offsets = [0, 5, 0], sizes = [2, 1, 384], strides = [1, 1, 1]} : vector<2x8x384xf32> to vector<2x1x384xf32>
    %372 = vector.shape_cast %371 : vector<2x1x384xf32> to vector<2x384xf32>
    %c0_118 = arith.constant 0 : index
    %c0_119 = arith.constant 0 : index
    %373 = vector.load %arg8[%c0_118, %c0_119] : memref<2x128xf32, #tpu.memory_space<vmem>>, vector<2x128xf32>
    %374 = arith.truncf %373 : vector<2x128xf32> to vector<2x128xbf16>
    %cst_120 = arith.constant dense<0.000000e+00> : vector<2x384xf32>
    %375 = tpu.matmul %374, %5, %cst_120 {dimension_numbers = #tpu.dot_dimension_numbers<[1], [0], [0], [1], [0, 0, 1, 1], [], []>} : vector<2x128xbf16>, vector<128x384xbf16>, vector<2x384xf32> -> vector<2x384xf32>
    %376 = vector.extract_strided_slice %372 {offsets = [0, 0], sizes = [2, 128], strides = [1, 1]} : vector<2x384xf32> to vector<2x128xf32>
    %377 = vector.extract_strided_slice %375 {offsets = [0, 0], sizes = [2, 128], strides = [1, 1]} : vector<2x384xf32> to vector<2x128xf32>
    %378 = arith.addf %376, %377 : vector<2x128xf32>
    %379 = arith.negf %378 : vector<2x128xf32>
    %380 = math.exp %379 : vector<2x128xf32>
    %cst_121 = arith.constant 1.000000e+00 : f32
    %381 = vector.broadcast %cst_121 : f32 to vector<2x128xf32>
    %382 = arith.addf %381, %380 : vector<2x128xf32>
    %383 = arith.divf %381, %382 : vector<2x128xf32>
    %384 = vector.extract_strided_slice %372 {offsets = [0, 128], sizes = [2, 128], strides = [1, 1]} : vector<2x384xf32> to vector<2x128xf32>
    %385 = vector.extract_strided_slice %375 {offsets = [0, 128], sizes = [2, 128], strides = [1, 1]} : vector<2x384xf32> to vector<2x128xf32>
    %386 = arith.addf %384, %385 : vector<2x128xf32>
    %387 = arith.negf %386 : vector<2x128xf32>
    %388 = math.exp %387 : vector<2x128xf32>
    %cst_122 = arith.constant 1.000000e+00 : f32
    %389 = vector.broadcast %cst_122 : f32 to vector<2x128xf32>
    %390 = arith.addf %389, %388 : vector<2x128xf32>
    %391 = arith.divf %389, %390 : vector<2x128xf32>
    %392 = vector.extract_strided_slice %372 {offsets = [0, 256], sizes = [2, 128], strides = [1, 1]} : vector<2x384xf32> to vector<2x128xf32>
    %393 = vector.extract_strided_slice %375 {offsets = [0, 256], sizes = [2, 128], strides = [1, 1]} : vector<2x384xf32> to vector<2x128xf32>
    %394 = vector.broadcast %8 : vector<1x128xf32> to vector<2x128xf32>
    %395 = arith.addf %393, %394 : vector<2x128xf32>
    %396 = arith.mulf %383, %395 : vector<2x128xf32>
    %397 = arith.addf %392, %396 : vector<2x128xf32>
    %398 = math.tanh %397 : vector<2x128xf32>
    %cst_123 = arith.constant 1.000000e+00 : f32
    %399 = vector.broadcast %cst_123 : f32 to vector<2x128xf32>
    %400 = arith.subf %399, %391 : vector<2x128xf32>
    %401 = arith.mulf %400, %398 : vector<2x128xf32>
    %402 = arith.mulf %391, %373 : vector<2x128xf32>
    %403 = arith.addf %401, %402 : vector<2x128xf32>
    %404 = vector.extract_strided_slice %4 {offsets = [0, 2, 0], sizes = [2, 1, 384], strides = [1, 1, 1]} : vector<2x8x384xf32> to vector<2x1x384xf32>
    %405 = vector.shape_cast %404 : vector<2x1x384xf32> to vector<2x384xf32>
    %c0_124 = arith.constant 0 : index
    %c0_125 = arith.constant 0 : index
    %406 = vector.load %arg9[%c0_124, %c0_125] : memref<2x128xf32, #tpu.memory_space<vmem>>, vector<2x128xf32>
    %407 = arith.truncf %406 : vector<2x128xf32> to vector<2x128xbf16>
    %cst_126 = arith.constant dense<0.000000e+00> : vector<2x384xf32>
    %408 = tpu.matmul %407, %6, %cst_126 {dimension_numbers = #tpu.dot_dimension_numbers<[1], [0], [0], [1], [0, 0, 1, 1], [], []>} : vector<2x128xbf16>, vector<128x384xbf16>, vector<2x384xf32> -> vector<2x384xf32>
    %409 = vector.extract_strided_slice %405 {offsets = [0, 0], sizes = [2, 128], strides = [1, 1]} : vector<2x384xf32> to vector<2x128xf32>
    %410 = vector.extract_strided_slice %408 {offsets = [0, 0], sizes = [2, 128], strides = [1, 1]} : vector<2x384xf32> to vector<2x128xf32>
    %411 = arith.addf %409, %410 : vector<2x128xf32>
    %412 = arith.negf %411 : vector<2x128xf32>
    %413 = math.exp %412 : vector<2x128xf32>
    %cst_127 = arith.constant 1.000000e+00 : f32
    %414 = vector.broadcast %cst_127 : f32 to vector<2x128xf32>
    %415 = arith.addf %414, %413 : vector<2x128xf32>
    %416 = arith.divf %414, %415 : vector<2x128xf32>
    %417 = vector.extract_strided_slice %405 {offsets = [0, 128], sizes = [2, 128], strides = [1, 1]} : vector<2x384xf32> to vector<2x128xf32>
    %418 = vector.extract_strided_slice %408 {offsets = [0, 128], sizes = [2, 128], strides = [1, 1]} : vector<2x384xf32> to vector<2x128xf32>
    %419 = arith.addf %417, %418 : vector<2x128xf32>
    %420 = arith.negf %419 : vector<2x128xf32>
    %421 = math.exp %420 : vector<2x128xf32>
    %cst_128 = arith.constant 1.000000e+00 : f32
    %422 = vector.broadcast %cst_128 : f32 to vector<2x128xf32>
    %423 = arith.addf %422, %421 : vector<2x128xf32>
    %424 = arith.divf %422, %423 : vector<2x128xf32>
    %425 = vector.extract_strided_slice %405 {offsets = [0, 256], sizes = [2, 128], strides = [1, 1]} : vector<2x384xf32> to vector<2x128xf32>
    %426 = vector.extract_strided_slice %408 {offsets = [0, 256], sizes = [2, 128], strides = [1, 1]} : vector<2x384xf32> to vector<2x128xf32>
    %427 = vector.broadcast %10 : vector<1x128xf32> to vector<2x128xf32>
    %428 = arith.addf %426, %427 : vector<2x128xf32>
    %429 = arith.mulf %416, %428 : vector<2x128xf32>
    %430 = arith.addf %425, %429 : vector<2x128xf32>
    %431 = math.tanh %430 : vector<2x128xf32>
    %cst_129 = arith.constant 1.000000e+00 : f32
    %432 = vector.broadcast %cst_129 : f32 to vector<2x128xf32>
    %433 = arith.subf %432, %424 : vector<2x128xf32>
    %434 = arith.mulf %433, %431 : vector<2x128xf32>
    %435 = arith.mulf %424, %406 : vector<2x128xf32>
    %436 = arith.addf %434, %435 : vector<2x128xf32>
    %c0_130 = arith.constant 0 : index
    %c0_131 = arith.constant 0 : index
    %437 = vector.load %arg8[%c0_130, %c0_131] : memref<2x128xf32, #tpu.memory_space<vmem>>, vector<2x128xf32>
    tpu.vector_store %arg8[%c0_130, %c0_131], %403 {strides = array<i32>} : memref<2x128xf32, #tpu.memory_space<vmem>>, vector<2x128xf32>,
    %c0_132 = arith.constant 0 : index
    %c0_133 = arith.constant 0 : index
    %438 = vector.load %arg9[%c0_132, %c0_133] : memref<2x128xf32, #tpu.memory_space<vmem>>, vector<2x128xf32>
    tpu.vector_store %arg9[%c0_132, %c0_133], %436 {strides = array<i32>} : memref<2x128xf32, #tpu.memory_space<vmem>>, vector<2x128xf32>,
    %439 = vector.shape_cast %403 : vector<2x128xf32> to vector<2x1x128xf32>
    %c0_134 = arith.constant 0 : index
    %c5_135 = arith.constant 5 : index
    %c0_136 = arith.constant 0 : index
    %440 = vector.load %arg6[%c0_134, %c5_135, %c0_136] : memref<2x8x128xf32, #tpu.memory_space<vmem>>, vector<2x1x128xf32>
    tpu.vector_store %arg6[%c0_134, %c5_135, %c0_136], %439 {strides = array<i32>} : memref<2x8x128xf32, #tpu.memory_space<vmem>>, vector<2x1x128xf32>,
    %441 = vector.shape_cast %436 : vector<2x128xf32> to vector<2x1x128xf32>
    %c0_137 = arith.constant 0 : index
    %c2_138 = arith.constant 2 : index
    %c0_139 = arith.constant 0 : index
    %442 = vector.load %arg7[%c0_137, %c2_138, %c0_139] : memref<2x8x128xf32, #tpu.memory_space<vmem>>, vector<2x1x128xf32>
    tpu.vector_store %arg7[%c0_137, %c2_138, %c0_139], %441 {strides = array<i32>} : memref<2x8x128xf32, #tpu.memory_space<vmem>>, vector<2x1x128xf32>,
    %443 = vector.extract_strided_slice %3 {offsets = [0, 6, 0], sizes = [2, 1, 384], strides = [1, 1, 1]} : vector<2x8x384xf32> to vector<2x1x384xf32>
    %444 = vector.shape_cast %443 : vector<2x1x384xf32> to vector<2x384xf32>
    %c0_140 = arith.constant 0 : index
    %c0_141 = arith.constant 0 : index
    %445 = vector.load %arg8[%c0_140, %c0_141] : memref<2x128xf32, #tpu.memory_space<vmem>>, vector<2x128xf32>
    %446 = arith.truncf %445 : vector<2x128xf32> to vector<2x128xbf16>
    %cst_142 = arith.constant dense<0.000000e+00> : vector<2x384xf32>
    %447 = tpu.matmul %446, %5, %cst_142 {dimension_numbers = #tpu.dot_dimension_numbers<[1], [0], [0], [1], [0, 0, 1, 1], [], []>} : vector<2x128xbf16>, vector<128x384xbf16>, vector<2x384xf32> -> vector<2x384xf32>
    %448 = vector.extract_strided_slice %444 {offsets = [0, 0], sizes = [2, 128], strides = [1, 1]} : vector<2x384xf32> to vector<2x128xf32>
    %449 = vector.extract_strided_slice %447 {offsets = [0, 0], sizes = [2, 128], strides = [1, 1]} : vector<2x384xf32> to vector<2x128xf32>
    %450 = arith.addf %448, %449 : vector<2x128xf32>
    %451 = arith.negf %450 : vector<2x128xf32>
    %452 = math.exp %451 : vector<2x128xf32>
    %cst_143 = arith.constant 1.000000e+00 : f32
    %453 = vector.broadcast %cst_143 : f32 to vector<2x128xf32>
    %454 = arith.addf %453, %452 : vector<2x128xf32>
    %455 = arith.divf %453, %454 : vector<2x128xf32>
    %456 = vector.extract_strided_slice %444 {offsets = [0, 128], sizes = [2, 128], strides = [1, 1]} : vector<2x384xf32> to vector<2x128xf32>
    %457 = vector.extract_strided_slice %447 {offsets = [0, 128], sizes = [2, 128], strides = [1, 1]} : vector<2x384xf32> to vector<2x128xf32>
    %458 = arith.addf %456, %457 : vector<2x128xf32>
    %459 = arith.negf %458 : vector<2x128xf32>
    %460 = math.exp %459 : vector<2x128xf32>
    %cst_144 = arith.constant 1.000000e+00 : f32
    %461 = vector.broadcast %cst_144 : f32 to vector<2x128xf32>
    %462 = arith.addf %461, %460 : vector<2x128xf32>
    %463 = arith.divf %461, %462 : vector<2x128xf32>
    %464 = vector.extract_strided_slice %444 {offsets = [0, 256], sizes = [2, 128], strides = [1, 1]} : vector<2x384xf32> to vector<2x128xf32>
    %465 = vector.extract_strided_slice %447 {offsets = [0, 256], sizes = [2, 128], strides = [1, 1]} : vector<2x384xf32> to vector<2x128xf32>
    %466 = vector.broadcast %8 : vector<1x128xf32> to vector<2x128xf32>
    %467 = arith.addf %465, %466 : vector<2x128xf32>
    %468 = arith.mulf %455, %467 : vector<2x128xf32>
    %469 = arith.addf %464, %468 : vector<2x128xf32>
    %470 = math.tanh %469 : vector<2x128xf32>
    %cst_145 = arith.constant 1.000000e+00 : f32
    %471 = vector.broadcast %cst_145 : f32 to vector<2x128xf32>
    %472 = arith.subf %471, %463 : vector<2x128xf32>
    %473 = arith.mulf %472, %470 : vector<2x128xf32>
    %474 = arith.mulf %463, %445 : vector<2x128xf32>
    %475 = arith.addf %473, %474 : vector<2x128xf32>
    %476 = vector.extract_strided_slice %4 {offsets = [0, 1, 0], sizes = [2, 1, 384], strides = [1, 1, 1]} : vector<2x8x384xf32> to vector<2x1x384xf32>
    %477 = vector.shape_cast %476 : vector<2x1x384xf32> to vector<2x384xf32>
    %c0_146 = arith.constant 0 : index
    %c0_147 = arith.constant 0 : index
    %478 = vector.load %arg9[%c0_146, %c0_147] : memref<2x128xf32, #tpu.memory_space<vmem>>, vector<2x128xf32>
    %479 = arith.truncf %478 : vector<2x128xf32> to vector<2x128xbf16>
    %cst_148 = arith.constant dense<0.000000e+00> : vector<2x384xf32>
    %480 = tpu.matmul %479, %6, %cst_148 {dimension_numbers = #tpu.dot_dimension_numbers<[1], [0], [0], [1], [0, 0, 1, 1], [], []>} : vector<2x128xbf16>, vector<128x384xbf16>, vector<2x384xf32> -> vector<2x384xf32>
    %481 = vector.extract_strided_slice %477 {offsets = [0, 0], sizes = [2, 128], strides = [1, 1]} : vector<2x384xf32> to vector<2x128xf32>
    %482 = vector.extract_strided_slice %480 {offsets = [0, 0], sizes = [2, 128], strides = [1, 1]} : vector<2x384xf32> to vector<2x128xf32>
    %483 = arith.addf %481, %482 : vector<2x128xf32>
    %484 = arith.negf %483 : vector<2x128xf32>
    %485 = math.exp %484 : vector<2x128xf32>
    %cst_149 = arith.constant 1.000000e+00 : f32
    %486 = vector.broadcast %cst_149 : f32 to vector<2x128xf32>
    %487 = arith.addf %486, %485 : vector<2x128xf32>
    %488 = arith.divf %486, %487 : vector<2x128xf32>
    %489 = vector.extract_strided_slice %477 {offsets = [0, 128], sizes = [2, 128], strides = [1, 1]} : vector<2x384xf32> to vector<2x128xf32>
    %490 = vector.extract_strided_slice %480 {offsets = [0, 128], sizes = [2, 128], strides = [1, 1]} : vector<2x384xf32> to vector<2x128xf32>
    %491 = arith.addf %489, %490 : vector<2x128xf32>
    %492 = arith.negf %491 : vector<2x128xf32>
    %493 = math.exp %492 : vector<2x128xf32>
    %cst_150 = arith.constant 1.000000e+00 : f32
    %494 = vector.broadcast %cst_150 : f32 to vector<2x128xf32>
    %495 = arith.addf %494, %493 : vector<2x128xf32>
    %496 = arith.divf %494, %495 : vector<2x128xf32>
    %497 = vector.extract_strided_slice %477 {offsets = [0, 256], sizes = [2, 128], strides = [1, 1]} : vector<2x384xf32> to vector<2x128xf32>
    %498 = vector.extract_strided_slice %480 {offsets = [0, 256], sizes = [2, 128], strides = [1, 1]} : vector<2x384xf32> to vector<2x128xf32>
    %499 = vector.broadcast %10 : vector<1x128xf32> to vector<2x128xf32>
    %500 = arith.addf %498, %499 : vector<2x128xf32>
    %501 = arith.mulf %488, %500 : vector<2x128xf32>
    %502 = arith.addf %497, %501 : vector<2x128xf32>
    %503 = math.tanh %502 : vector<2x128xf32>
    %cst_151 = arith.constant 1.000000e+00 : f32
    %504 = vector.broadcast %cst_151 : f32 to vector<2x128xf32>
    %505 = arith.subf %504, %496 : vector<2x128xf32>
    %506 = arith.mulf %505, %503 : vector<2x128xf32>
    %507 = arith.mulf %496, %478 : vector<2x128xf32>
    %508 = arith.addf %506, %507 : vector<2x128xf32>
    %c0_152 = arith.constant 0 : index
    %c0_153 = arith.constant 0 : index
    %509 = vector.load %arg8[%c0_152, %c0_153] : memref<2x128xf32, #tpu.memory_space<vmem>>, vector<2x128xf32>
    tpu.vector_store %arg8[%c0_152, %c0_153], %475 {strides = array<i32>} : memref<2x128xf32, #tpu.memory_space<vmem>>, vector<2x128xf32>,
    %c0_154 = arith.constant 0 : index
    %c0_155 = arith.constant 0 : index
    %510 = vector.load %arg9[%c0_154, %c0_155] : memref<2x128xf32, #tpu.memory_space<vmem>>, vector<2x128xf32>
    tpu.vector_store %arg9[%c0_154, %c0_155], %508 {strides = array<i32>} : memref<2x128xf32, #tpu.memory_space<vmem>>, vector<2x128xf32>,
    %511 = vector.shape_cast %475 : vector<2x128xf32> to vector<2x1x128xf32>
    %c0_156 = arith.constant 0 : index
    %c6_157 = arith.constant 6 : index
    %c0_158 = arith.constant 0 : index
    %512 = vector.load %arg6[%c0_156, %c6_157, %c0_158] : memref<2x8x128xf32, #tpu.memory_space<vmem>>, vector<2x1x128xf32>
    tpu.vector_store %arg6[%c0_156, %c6_157, %c0_158], %511 {strides = array<i32>} : memref<2x8x128xf32, #tpu.memory_space<vmem>>, vector<2x1x128xf32>,
    %513 = vector.shape_cast %508 : vector<2x128xf32> to vector<2x1x128xf32>
    %c0_159 = arith.constant 0 : index
    %c1_160 = arith.constant 1 : index
    %c0_161 = arith.constant 0 : index
    %514 = vector.load %arg7[%c0_159, %c1_160, %c0_161] : memref<2x8x128xf32, #tpu.memory_space<vmem>>, vector<2x1x128xf32>
    tpu.vector_store %arg7[%c0_159, %c1_160, %c0_161], %513 {strides = array<i32>} : memref<2x8x128xf32, #tpu.memory_space<vmem>>, vector<2x1x128xf32>,
    %515 = vector.extract_strided_slice %3 {offsets = [0, 7, 0], sizes = [2, 1, 384], strides = [1, 1, 1]} : vector<2x8x384xf32> to vector<2x1x384xf32>
    %516 = vector.shape_cast %515 : vector<2x1x384xf32> to vector<2x384xf32>
    %c0_162 = arith.constant 0 : index
    %c0_163 = arith.constant 0 : index
    %517 = vector.load %arg8[%c0_162, %c0_163] : memref<2x128xf32, #tpu.memory_space<vmem>>, vector<2x128xf32>
    %518 = arith.truncf %517 : vector<2x128xf32> to vector<2x128xbf16>
    %cst_164 = arith.constant dense<0.000000e+00> : vector<2x384xf32>
    %519 = tpu.matmul %518, %5, %cst_164 {dimension_numbers = #tpu.dot_dimension_numbers<[1], [0], [0], [1], [0, 0, 1, 1], [], []>} : vector<2x128xbf16>, vector<128x384xbf16>, vector<2x384xf32> -> vector<2x384xf32>
    %520 = vector.extract_strided_slice %516 {offsets = [0, 0], sizes = [2, 128], strides = [1, 1]} : vector<2x384xf32> to vector<2x128xf32>
    %521 = vector.extract_strided_slice %519 {offsets = [0, 0], sizes = [2, 128], strides = [1, 1]} : vector<2x384xf32> to vector<2x128xf32>
    %522 = arith.addf %520, %521 : vector<2x128xf32>
    %523 = arith.negf %522 : vector<2x128xf32>
    %524 = math.exp %523 : vector<2x128xf32>
    %cst_165 = arith.constant 1.000000e+00 : f32
    %525 = vector.broadcast %cst_165 : f32 to vector<2x128xf32>
    %526 = arith.addf %525, %524 : vector<2x128xf32>
    %527 = arith.divf %525, %526 : vector<2x128xf32>
    %528 = vector.extract_strided_slice %516 {offsets = [0, 128], sizes = [2, 128], strides = [1, 1]} : vector<2x384xf32> to vector<2x128xf32>
    %529 = vector.extract_strided_slice %519 {offsets = [0, 128], sizes = [2, 128], strides = [1, 1]} : vector<2x384xf32> to vector<2x128xf32>
    %530 = arith.addf %528, %529 : vector<2x128xf32>
    %531 = arith.negf %530 : vector<2x128xf32>
    %532 = math.exp %531 : vector<2x128xf32>
    %cst_166 = arith.constant 1.000000e+00 : f32
    %533 = vector.broadcast %cst_166 : f32 to vector<2x128xf32>
    %534 = arith.addf %533, %532 : vector<2x128xf32>
    %535 = arith.divf %533, %534 : vector<2x128xf32>
    %536 = vector.extract_strided_slice %516 {offsets = [0, 256], sizes = [2, 128], strides = [1, 1]} : vector<2x384xf32> to vector<2x128xf32>
    %537 = vector.extract_strided_slice %519 {offsets = [0, 256], sizes = [2, 128], strides = [1, 1]} : vector<2x384xf32> to vector<2x128xf32>
    %538 = vector.broadcast %8 : vector<1x128xf32> to vector<2x128xf32>
    %539 = arith.addf %537, %538 : vector<2x128xf32>
    %540 = arith.mulf %527, %539 : vector<2x128xf32>
    %541 = arith.addf %536, %540 : vector<2x128xf32>
    %542 = math.tanh %541 : vector<2x128xf32>
    %cst_167 = arith.constant 1.000000e+00 : f32
    %543 = vector.broadcast %cst_167 : f32 to vector<2x128xf32>
    %544 = arith.subf %543, %535 : vector<2x128xf32>
    %545 = arith.mulf %544, %542 : vector<2x128xf32>
    %546 = arith.mulf %535, %517 : vector<2x128xf32>
    %547 = arith.addf %545, %546 : vector<2x128xf32>
    %548 = vector.extract_strided_slice %4 {offsets = [0, 0, 0], sizes = [2, 1, 384], strides = [1, 1, 1]} : vector<2x8x384xf32> to vector<2x1x384xf32>
    %549 = vector.shape_cast %548 : vector<2x1x384xf32> to vector<2x384xf32>
    %c0_168 = arith.constant 0 : index
    %c0_169 = arith.constant 0 : index
    %550 = vector.load %arg9[%c0_168, %c0_169] : memref<2x128xf32, #tpu.memory_space<vmem>>, vector<2x128xf32>
    %551 = arith.truncf %550 : vector<2x128xf32> to vector<2x128xbf16>
    %cst_170 = arith.constant dense<0.000000e+00> : vector<2x384xf32>
    %552 = tpu.matmul %551, %6, %cst_170 {dimension_numbers = #tpu.dot_dimension_numbers<[1], [0], [0], [1], [0, 0, 1, 1], [], []>} : vector<2x128xbf16>, vector<128x384xbf16>, vector<2x384xf32> -> vector<2x384xf32>
    %553 = vector.extract_strided_slice %549 {offsets = [0, 0], sizes = [2, 128], strides = [1, 1]} : vector<2x384xf32> to vector<2x128xf32>
    %554 = vector.extract_strided_slice %552 {offsets = [0, 0], sizes = [2, 128], strides = [1, 1]} : vector<2x384xf32> to vector<2x128xf32>
    %555 = arith.addf %553, %554 : vector<2x128xf32>
    %556 = arith.negf %555 : vector<2x128xf32>
    %557 = math.exp %556 : vector<2x128xf32>
    %cst_171 = arith.constant 1.000000e+00 : f32
    %558 = vector.broadcast %cst_171 : f32 to vector<2x128xf32>
    %559 = arith.addf %558, %557 : vector<2x128xf32>
    %560 = arith.divf %558, %559 : vector<2x128xf32>
    %561 = vector.extract_strided_slice %549 {offsets = [0, 128], sizes = [2, 128], strides = [1, 1]} : vector<2x384xf32> to vector<2x128xf32>
    %562 = vector.extract_strided_slice %552 {offsets = [0, 128], sizes = [2, 128], strides = [1, 1]} : vector<2x384xf32> to vector<2x128xf32>
    %563 = arith.addf %561, %562 : vector<2x128xf32>
    %564 = arith.negf %563 : vector<2x128xf32>
    %565 = math.exp %564 : vector<2x128xf32>
    %cst_172 = arith.constant 1.000000e+00 : f32
    %566 = vector.broadcast %cst_172 : f32 to vector<2x128xf32>
    %567 = arith.addf %566, %565 : vector<2x128xf32>
    %568 = arith.divf %566, %567 : vector<2x128xf32>
    %569 = vector.extract_strided_slice %549 {offsets = [0, 256], sizes = [2, 128], strides = [1, 1]} : vector<2x384xf32> to vector<2x128xf32>
    %570 = vector.extract_strided_slice %552 {offsets = [0, 256], sizes = [2, 128], strides = [1, 1]} : vector<2x384xf32> to vector<2x128xf32>
    %571 = vector.broadcast %10 : vector<1x128xf32> to vector<2x128xf32>
    %572 = arith.addf %570, %571 : vector<2x128xf32>
    %573 = arith.mulf %560, %572 : vector<2x128xf32>
    %574 = arith.addf %569, %573 : vector<2x128xf32>
    %575 = math.tanh %574 : vector<2x128xf32>
    %cst_173 = arith.constant 1.000000e+00 : f32
    %576 = vector.broadcast %cst_173 : f32 to vector<2x128xf32>
    %577 = arith.subf %576, %568 : vector<2x128xf32>
    %578 = arith.mulf %577, %575 : vector<2x128xf32>
    %579 = arith.mulf %568, %550 : vector<2x128xf32>
    %580 = arith.addf %578, %579 : vector<2x128xf32>
    %c0_174 = arith.constant 0 : index
    %c0_175 = arith.constant 0 : index
    %581 = vector.load %arg8[%c0_174, %c0_175] : memref<2x128xf32, #tpu.memory_space<vmem>>, vector<2x128xf32>
    tpu.vector_store %arg8[%c0_174, %c0_175], %547 {strides = array<i32>} : memref<2x128xf32, #tpu.memory_space<vmem>>, vector<2x128xf32>,
    %c0_176 = arith.constant 0 : index
    %c0_177 = arith.constant 0 : index
    %582 = vector.load %arg9[%c0_176, %c0_177] : memref<2x128xf32, #tpu.memory_space<vmem>>, vector<2x128xf32>
    tpu.vector_store %arg9[%c0_176, %c0_177], %580 {strides = array<i32>} : memref<2x128xf32, #tpu.memory_space<vmem>>, vector<2x128xf32>,
    %583 = vector.shape_cast %547 : vector<2x128xf32> to vector<2x1x128xf32>
    %c0_178 = arith.constant 0 : index
    %c7_179 = arith.constant 7 : index
    %c0_180 = arith.constant 0 : index
    %584 = vector.load %arg6[%c0_178, %c7_179, %c0_180] : memref<2x8x128xf32, #tpu.memory_space<vmem>>, vector<2x1x128xf32>
    tpu.vector_store %arg6[%c0_178, %c7_179, %c0_180], %583 {strides = array<i32>} : memref<2x8x128xf32, #tpu.memory_space<vmem>>, vector<2x1x128xf32>,
    %585 = vector.shape_cast %580 : vector<2x128xf32> to vector<2x1x128xf32>
    %c0_181 = arith.constant 0 : index
    %c0_182 = arith.constant 0 : index
    %c0_183 = arith.constant 0 : index
    %586 = vector.load %arg7[%c0_181, %c0_182, %c0_183] : memref<2x8x128xf32, #tpu.memory_space<vmem>>, vector<2x1x128xf32>
    tpu.vector_store %arg7[%c0_181, %c0_182, %c0_183], %585 {strides = array<i32>} : memref<2x8x128xf32, #tpu.memory_space<vmem>>, vector<2x1x128xf32>,
    return
  }
  func.func @transform_0(%arg0: i32) -> (i32, i32, i32) {
    %c0_i32 = arith.constant 0 : i32
    %c0_i32_0 = arith.constant 0 : i32
    %c0_i32_1 = arith.constant 0 : i32
    return %c0_i32, %arg0, %c0_i32_0 : i32, i32, i32
  }
  func.func @transform_1(%arg0: i32) -> (i32, i32, i32) {
    %c0_i32 = arith.constant 0 : i32
    %0 = arith.subi %c0_i32, %arg0 : i32
    %c0_i32_0 = arith.constant 0 : i32
    %c1_i32 = arith.constant 1 : i32
    %c0_i32_1 = arith.constant 0 : i32
    return %c0_i32_0, %0, %c1_i32 : i32, i32, i32
  }
  func.func @transform_2(%arg0: i32) -> (i32, i32) {
    %c0_i32 = arith.constant 0 : i32
    %c0_i32_0 = arith.constant 0 : i32
    %c0_i32_1 = arith.constant 0 : i32
    return %c0_i32, %c0_i32_0 : i32, i32
  }
  func.func @transform_3(%arg0: i32) -> (i32, i32) {
    %c0_i32 = arith.constant 0 : i32
    %c0_i32_0 = arith.constant 0 : i32
    %c0_i32_1 = arith.constant 0 : i32
    return %c0_i32, %c0_i32_0 : i32, i32
  }
  func.func @transform_4(%arg0: i32) -> (i32, i32, i32) {
    %c0_i32 = arith.constant 0 : i32
    %c0_i32_0 = arith.constant 0 : i32
    %c0_i32_1 = arith.constant 0 : i32
    %c0_i32_2 = arith.constant 0 : i32
    return %c0_i32, %c0_i32_0, %c0_i32_1 : i32, i32, i32
  }
  func.func @transform_5(%arg0: i32) -> (i32, i32, i32) {
    %c0_i32 = arith.constant 0 : i32
    %c0_i32_0 = arith.constant 0 : i32
    %c0_i32_1 = arith.constant 0 : i32
    return %c0_i32, %arg0, %c0_i32_0 : i32, i32, i32
  }
  func.func @transform_6(%arg0: i32) -> (i32, i32, i32) {
    %c0_i32 = arith.constant 0 : i32
    %0 = arith.subi %c0_i32, %arg0 : i32
    %c0_i32_0 = arith.constant 0 : i32
    %c0_i32_1 = arith.constant 0 : i32
    %c0_i32_2 = arith.constant 0 : i32
    return %c0_i32_0, %0, %c0_i32_1 : i32, i32, i32
  }
}

module attributes {stable_mosaic.version = 11 : i64} {
  func.func @kernel(%arg0: i32, %arg1: memref<1x16x128xf32, #tpu.memory_space<vmem>>, %arg2: memref<1x16x128xf32, #tpu.memory_space<vmem>>, %arg3: memref<2x128x128xbf16, #tpu.memory_space<vmem>>, %arg4: memref<1x128xf32, #tpu.memory_space<vmem>>, %arg5: memref<16x128xf32, #tpu.memory_space<vmem>>) attributes {dimension_semantics = [#tpu.dimension_semantics<parallel>], iteration_bounds = array<i64: 1>, scalar_prefetch = 0 : i64, scratch_operands = 0 : i64, tpu.core_type = #tpu.core_type<tc>, window_params = [{transform_indices = @transform_0, window_bounds = array<i64: 1, 16, 128>}, {transform_indices = @transform_1, window_bounds = array<i64: 1, 16, 128>}, {pipeline_mode = #tpu.pipeline_mode<synchronous>, transform_indices = @transform_2, window_bounds = array<i64: 2, 128, 128>}, {pipeline_mode = #tpu.pipeline_mode<synchronous>, transform_indices = @transform_3, window_bounds = array<i64: 1, 128>}, {transform_indices = @transform_4, window_bounds = array<i64: 16, 128>}]} {
    %c0 = arith.constant 0 : index
    %c0_0 = arith.constant 0 : index
    %0 = vector.load %arg4[%c0, %c0_0] : memref<1x128xf32, #tpu.memory_space<vmem>>, vector<1x128xf32>
    %c0_1 = arith.constant 0 : index
    %c0_2 = arith.constant 0 : index
    %c0_3 = arith.constant 0 : index
    %1 = vector.load %arg1[%c0_1, %c0_2, %c0_3] : memref<1x16x128xf32, #tpu.memory_space<vmem>>, vector<1x16x128xf32>
    %2 = vector.shape_cast %1 : vector<1x16x128xf32> to vector<16x128xf32>
    %3 = arith.truncf %2 : vector<16x128xf32> to vector<16x128xbf16>
    %c0_4 = arith.constant 0 : index
    %c0_5 = arith.constant 0 : index
    %c0_6 = arith.constant 0 : index
    %4 = vector.load %arg3[%c0_4, %c0_5, %c0_6] : memref<2x128x128xbf16, #tpu.memory_space<vmem>>, vector<1x128x128xbf16>
    %5 = vector.shape_cast %4 : vector<1x128x128xbf16> to vector<128x128xbf16>
    %cst = arith.constant dense<0.000000e+00> : vector<16x128xf32>
    %6 = tpu.matmul %3, %5, %cst {dimension_numbers = #tpu.dot_dimension_numbers<[1], [0], [0], [1], [0, 0, 1, 1], [], []>} : vector<16x128xbf16>, vector<128x128xbf16>, vector<16x128xf32> -> vector<16x128xf32>
    %7 = vector.broadcast %0 : vector<1x128xf32> to vector<16x128xf32>
    %8 = arith.addf %7, %6 : vector<16x128xf32>
    %c0_7 = arith.constant 0 : index
    %c0_8 = arith.constant 0 : index
    %c0_9 = arith.constant 0 : index
    %9 = vector.load %arg2[%c0_7, %c0_8, %c0_9] : memref<1x16x128xf32, #tpu.memory_space<vmem>>, vector<1x16x128xf32>
    %10 = vector.shape_cast %9 : vector<1x16x128xf32> to vector<16x128xf32>
    %11 = arith.truncf %10 : vector<16x128xf32> to vector<16x128xbf16>
    %c1 = arith.constant 1 : index
    %c0_10 = arith.constant 0 : index
    %c0_11 = arith.constant 0 : index
    %12 = vector.load %arg3[%c1, %c0_10, %c0_11] : memref<2x128x128xbf16, #tpu.memory_space<vmem>>, vector<1x128x128xbf16>
    %13 = vector.shape_cast %12 : vector<1x128x128xbf16> to vector<128x128xbf16>
    %cst_12 = arith.constant dense<0.000000e+00> : vector<16x128xf32>
    %14 = tpu.matmul %11, %13, %cst_12 {dimension_numbers = #tpu.dot_dimension_numbers<[1], [0], [0], [1], [0, 0, 1, 1], [], []>} : vector<16x128xbf16>, vector<128x128xbf16>, vector<16x128xf32> -> vector<16x128xf32>
    %15 = arith.addf %8, %14 : vector<16x128xf32>
    %c0_13 = arith.constant 0 : index
    %c0_14 = arith.constant 0 : index
    %16 = vector.load %arg5[%c0_13, %c0_14] : memref<16x128xf32, #tpu.memory_space<vmem>>, vector<16x128xf32>
    tpu.vector_store %arg5[%c0_13, %c0_14], %15 {strides = array<i32>} : memref<16x128xf32, #tpu.memory_space<vmem>>, vector<16x128xf32>,
    return
  }
  func.func @transform_0(%arg0: i32) -> (i32, i32, i32) {
    %c0_i32 = arith.constant 0 : i32
    %c0_i32_0 = arith.constant 0 : i32
    %c0_i32_1 = arith.constant 0 : i32
    return %c0_i32, %arg0, %c0_i32_0 : i32, i32, i32
  }
  func.func @transform_1(%arg0: i32) -> (i32, i32, i32) {
    %c0_i32 = arith.constant 0 : i32
    %c0_i32_0 = arith.constant 0 : i32
    %c0_i32_1 = arith.constant 0 : i32
    return %c0_i32, %arg0, %c0_i32_0 : i32, i32, i32
  }
  func.func @transform_2(%arg0: i32) -> (i32, i32, i32) {
    %c0_i32 = arith.constant 0 : i32
    %c0_i32_0 = arith.constant 0 : i32
    %c0_i32_1 = arith.constant 0 : i32
    %c0_i32_2 = arith.constant 0 : i32
    return %c0_i32, %c0_i32_0, %c0_i32_1 : i32, i32, i32
  }
  func.func @transform_3(%arg0: i32) -> (i32, i32) {
    %c0_i32 = arith.constant 0 : i32
    %c0_i32_0 = arith.constant 0 : i32
    %c0_i32_1 = arith.constant 0 : i32
    return %c0_i32, %c0_i32_0 : i32, i32
  }
  func.func @transform_4(%arg0: i32) -> (i32, i32) {
    %c0_i32 = arith.constant 0 : i32
    %c0_i32_0 = arith.constant 0 : i32
    return %arg0, %c0_i32 : i32, i32
  }
}

</mosaic_0001>

<llo_original>
// kernel: _lambda_.7
$region0: #{_lambda_.7}
  #allocation0 [shape = 'u32[]', space=smem, size = 0x4, offset = 0x4, fixed_abs, tag = 'smem constant byte address 0x4 - core index']
  #allocation1 [shape = 'u32[72,128]{1,0:T(1,128)}', space=vmem, size = 0x9000, scoped, tag = 'internal scratch']
  %s0 = inlined_call_operand.vmem [shape: f32[1,16,128], index: 0, kind: input, shape index: {}]
  %s1 = inlined_call_operand.hbm [shape: bf16[1,128,768], index: 1, kind: input, shape index: {}]
  %s2 = inlined_call_operand.vmem [shape: f32[1,768], index: 2, kind: input, shape index: {}]
  %s3 = inlined_call_operand.vmem [shape: f32[16,768], index: 3, kind: output, shape index: {}]
  %s4 = sld [smem:[#allocation0]]
  $region26: #{_lambda_.7} parent=0
    _
  %s6 = ssub.s32 1, %s4
  %s7 = scalar_select 0, %s6, %s4
  $region1: #{_lambda_.7} parent=0
    #allocation2 [shape = 'u8[196608]{0}', space=vmem, size = 0x30000, scoped, tag = 'input window, operand 1, single buffered']
    #allocation3 [shape = 's32[1]{0}', space=sflag, size = 0x4, scoped, tag = 'scoped memory for _lambda_.7']
    %8 = vsyncpa [#allocation3], 0
    // Predicated region
    $region2: #{_lambda_.7} parent=1 // pred_check
      _
    $region3: #{_lambda_.7} parent=1 // pred_check_branch
      %10 = sbr.rel (0) target = $region5
    $region4: #{_lambda_.7} parent=1 // pred_region
      _
    $region5: #{_lambda_.7} parent=1 // pred_fallthru
      _
    // Predicated region
    $region6: #{_lambda_.7} parent=1 // pred_check
      _
    $region7: #{_lambda_.7} parent=1 // pred_check_branch
      %12 = sbr.rel (0) target = $region9
    $region8: #{_lambda_.7} parent=1 // pred_region
      %14 = vsyncadd [#allocation3], 0
      %s15 = sshll.u32 %s1, 4
      %s16 = int_to_ptr.hbm [resolvable:$true] %s15
      %s17 = sshll.u32 [#allocation2], 4
      %s18 = int_to_ptr.vmem [resolvable:$true] %s17
      %23 = dma.hbm_to_vmem [thread:$0]  %s16, 6144, %s18, [#allocation3], 384, 384, 24
    $region9: #{_lambda_.7} parent=1 // pred_fallthru
      _
    // Predicated region
    $region10: #{_lambda_.7} parent=1 // pred_check
      _
    $region11: #{_lambda_.7} parent=1 // pred_check_branch
      %25 = sbr.rel (0) target = $region13
    $region12: #{_lambda_.7} parent=1 // pred_region
      _
    $region13: #{_lambda_.7} parent=1 // pred_fallthru
      _
    // Predicated region
    $region14: #{_lambda_.7} parent=1 // pred_check
      _
    $region15: #{_lambda_.7} parent=1 // pred_check_branch
      %27 = sbr.rel (0) target = $region17
    $region16: #{_lambda_.7} parent=1 // pred_region
      %29 = dma.done [#allocation3], 6144
    $region17: #{_lambda_.7} parent=1 // pred_fallthru
      _
    %v30 = vld [vmem:[%s2] sm:$0x3f]
    %v31 = vld [vmem:[%s0] sm:$0xff]
    %v32 = vld [vmem:[%s0 + $0x8] sm:$0xff]
    %v33 = vpack.c.bf16 %v32, %v31
    %v34 = vld [vmem:[#allocation2] sm:$0xff]
    %v35 = vld [vmem:[#allocation2 + $0x8] sm:$0xff]
    %v36 = vld [vmem:[#allocation2 + $0x10] sm:$0xff]
    %v37 = vld [vmem:[#allocation2 + $0x18] sm:$0xff]
    %v38 = vld [vmem:[#allocation2 + $0x20] sm:$0xff]
    %v39 = vld [vmem:[#allocation2 + $0x28] sm:$0xff]
    %v40 = vld [vmem:[#allocation2 + $0x30] sm:$0xff]
    %v41 = vld [vmem:[#allocation2 + $0x38] sm:$0xff]
    %v42 = vld [vmem:[#allocation2 + $0x40] sm:$0xff]
    %v43 = vld [vmem:[#allocation2 + $0x48] sm:$0xff]
    %v44 = vld [vmem:[#allocation2 + $0x50] sm:$0xff]
    %v45 = vld [vmem:[#allocation2 + $0x58] sm:$0xff]
    %v46 = vld [vmem:[#allocation2 + $0x60] sm:$0xff]
    %v47 = vld [vmem:[#allocation2 + $0x68] sm:$0xff]
    %v48 = vld [vmem:[#allocation2 + $0x70] sm:$0xff]
    %v49 = vld [vmem:[#allocation2 + $0x78] sm:$0xff]
    %v50 = vld [vmem:[#allocation2 + $0x80] sm:$0xff]
    %v51 = vld [vmem:[#allocation2 + $0x88] sm:$0xff]
    %v52 = vld [vmem:[#allocation2 + $0x90] sm:$0xff]
    %v53 = vld [vmem:[#allocation2 + $0x98] sm:$0xff]
    %v54 = vld [vmem:[#allocation2 + $0xa0] sm:$0xff]
    %v55 = vld [vmem:[#allocation2 + $0xa8] sm:$0xff]
    %v56 = vld [vmem:[#allocation2 + $0xb0] sm:$0xff]
    %v57 = vld [vmem:[#allocation2 + $0xb8] sm:$0xff]
    %v58 = vld [vmem:[#allocation2 + $0xc0] sm:$0xff]
    %v59 = vld [vmem:[#allocation2 + $0xc8] sm:$0xff]
    %v60 = vld [vmem:[#allocation2 + $0xd0] sm:$0xff]
    %v61 = vld [vmem:[#allocation2 + $0xd8] sm:$0xff]
    %v62 = vld [vmem:[#allocation2 + $0xe0] sm:$0xff]
    %v63 = vld [vmem:[#allocation2 + $0xe8] sm:$0xff]
    %v64 = vld [vmem:[#allocation2 + $0xf0] sm:$0xff]
    %v65 = vld [vmem:[#allocation2 + $0xf8] sm:$0xff]
    %v66 = vld [vmem:[#allocation2 + $0x100] sm:$0xff]
    %v67 = vld [vmem:[#allocation2 + $0x108] sm:$0xff]
    %v68 = vld [vmem:[#allocation2 + $0x110] sm:$0xff]
    %v69 = vld [vmem:[#allocation2 + $0x118] sm:$0xff]
    %v70 = vld [vmem:[#allocation2 + $0x120] sm:$0xff]
    %v71 = vld [vmem:[#allocation2 + $0x128] sm:$0xff]
    %v72 = vld [vmem:[#allocation2 + $0x130] sm:$0xff]
    %v73 = vld [vmem:[#allocation2 + $0x138] sm:$0xff]
    %v74 = vld [vmem:[#allocation2 + $0x140] sm:$0xff]
    %v75 = vld [vmem:[#allocation2 + $0x148] sm:$0xff]
    %v76 = vld [vmem:[#allocation2 + $0x150] sm:$0xff]
    %v77 = vld [vmem:[#allocation2 + $0x158] sm:$0xff]
    %v78 = vld [vmem:[#allocation2 + $0x160] sm:$0xff]
    %v79 = vld [vmem:[#allocation2 + $0x168] sm:$0xff]
    %v80 = vld [vmem:[#allocation2 + $0x170] sm:$0xff]
    %v81 = vld [vmem:[#allocation2 + $0x178] sm:$0xff]
    %v130 = vunpack.c.l.b16 %v34
    %v131 = vunpack.c.h.b16 %v34
    %v132 = vunpack.c.l.b16 %v35
    %v133 = vunpack.c.h.b16 %v35
    %v134 = vunpack.c.l.b16 %v36
    %v135 = vunpack.c.h.b16 %v36
    %v136 = vunpack.c.l.b16 %v37
    %v137 = vunpack.c.h.b16 %v37
    %v138 = vunpack.c.l.b16 %v38
    %v139 = vunpack.c.h.b16 %v38
    %v140 = vunpack.c.l.b16 %v39
    %v141 = vunpack.c.h.b16 %v39
    %v142 = vunpack.c.l.b16 %v40
    %v143 = vunpack.c.h.b16 %v40
    %v144 = vunpack.c.l.b16 %v41
    %v145 = vunpack.c.h.b16 %v41
    %v146 = vunpack.c.l.b16 %v42
    %v147 = vunpack.c.h.b16 %v42
    %v148 = vunpack.c.l.b16 %v43
    %v149 = vunpack.c.h.b16 %v43
    %v150 = vunpack.c.l.b16 %v44
    %v151 = vunpack.c.h.b16 %v44
    %v152 = vunpack.c.l.b16 %v45
    %v153 = vunpack.c.h.b16 %v45
    %v154 = vunpack.c.l.b16 %v46
    %v155 = vunpack.c.h.b16 %v46
    %v156 = vunpack.c.l.b16 %v47
    %v157 = vunpack.c.h.b16 %v47
    %v158 = vunpack.c.l.b16 %v48
    %v159 = vunpack.c.h.b16 %v48
    %v160 = vunpack.c.l.b16 %v49
    %v161 = vunpack.c.h.b16 %v49
    %v162 = vunpack.c.l.b16 %v50
    %v163 = vunpack.c.h.b16 %v50
    %v164 = vunpack.c.l.b16 %v51
    %v165 = vunpack.c.h.b16 %v51
    %v166 = vunpack.c.l.b16 %v52
    %v167 = vunpack.c.h.b16 %v52
    %v168 = vunpack.c.l.b16 %v53
    %v169 = vunpack.c.h.b16 %v53
    %v170 = vunpack.c.l.b16 %v54
    %v171 = vunpack.c.h.b16 %v54
    %v172 = vunpack.c.l.b16 %v55
    %v173 = vunpack.c.h.b16 %v55
    %v174 = vunpack.c.l.b16 %v56
    %v175 = vunpack.c.h.b16 %v56
    %v176 = vunpack.c.l.b16 %v57
    %v177 = vunpack.c.h.b16 %v57
    %v178 = vunpack.c.l.b16 %v58
    %v179 = vunpack.c.h.b16 %v58
    %v180 = vunpack.c.l.b16 %v59
    %v181 = vunpack.c.h.b16 %v59
    %v182 = vunpack.c.l.b16 %v60
    %v183 = vunpack.c.h.b16 %v60
    %v184 = vunpack.c.l.b16 %v61
    %v185 = vunpack.c.h.b16 %v61
    %v186 = vunpack.c.l.b16 %v62
    %v187 = vunpack.c.h.b16 %v62
    %v188 = vunpack.c.l.b16 %v63
    %v189 = vunpack.c.h.b16 %v63
    %v190 = vunpack.c.l.b16 %v64
    %v191 = vunpack.c.h.b16 %v64
    %v192 = vunpack.c.l.b16 %v65
    %v193 = vunpack.c.h.b16 %v65
    %v194 = vunpack.c.l.b16 %v66
    %v195 = vunpack.c.h.b16 %v66
    %v196 = vunpack.c.l.b16 %v67
    %v197 = vunpack.c.h.b16 %v67
    %v198 = vunpack.c.l.b16 %v68
    %v199 = vunpack.c.h.b16 %v68
    %v200 = vunpack.c.l.b16 %v69
    %v201 = vunpack.c.h.b16 %v69
    %v202 = vunpack.c.l.b16 %v70
    %v203 = vunpack.c.h.b16 %v70
    %v204 = vunpack.c.l.b16 %v71
    %v205 = vunpack.c.h.b16 %v71
    %v206 = vunpack.c.l.b16 %v72
    %v207 = vunpack.c.h.b16 %v72
    %v208 = vunpack.c.l.b16 %v73
    %v209 = vunpack.c.h.b16 %v73
    %v210 = vunpack.c.l.b16 %v74
    %v211 = vunpack.c.h.b16 %v74
    %v212 = vunpack.c.l.b16 %v75
    %v213 = vunpack.c.h.b16 %v75
    %v214 = vunpack.c.l.b16 %v76
    %v215 = vunpack.c.h.b16 %v76
    %v216 = vunpack.c.l.b16 %v77
    %v217 = vunpack.c.h.b16 %v77
    %v218 = vunpack.c.l.b16 %v78
    %v219 = vunpack.c.h.b16 %v78
    %v220 = vunpack.c.l.b16 %v79
    %v221 = vunpack.c.h.b16 %v79
    %v222 = vunpack.c.l.b16 %v80
    %v223 = vunpack.c.h.b16 %v80
    %v224 = vunpack.c.l.b16 %v81
    %v225 = vunpack.c.h.b16 %v81
    %v226 = vpack.c.b16 %v136, %v130
    %v227 = vpack.c.b16 %v137, %v131
    %v228 = vpack.c.b16 %v138, %v132
    %v229 = vpack.c.b16 %v139, %v133
    %v230 = vpack.c.b16 %v140, %v134
    %v231 = vpack.c.b16 %v141, %v135
    %v232 = vpack.c.b16 %v148, %v142
    %v233 = vpack.c.b16 %v149, %v143
    %v234 = vpack.c.b16 %v150, %v144
    %v235 = vpack.c.b16 %v151, %v145
    %v236 = vpack.c.b16 %v152, %v146
    %v237 = vpack.c.b16 %v153, %v147
    %v238 = vpack.c.b16 %v160, %v154
    %v239 = vpack.c.b16 %v161, %v155
    %v240 = vpack.c.b16 %v162, %v156
    %v241 = vpack.c.b16 %v163, %v157
    %v242 = vpack.c.b16 %v164, %v158
    %v243 = vpack.c.b16 %v165, %v159
    %v244 = vpack.c.b16 %v172, %v166
    %v245 = vpack.c.b16 %v173, %v167
    %v246 = vpack.c.b16 %v174, %v168
    %v247 = vpack.c.b16 %v175, %v169
    %v248 = vpack.c.b16 %v176, %v170
    %v249 = vpack.c.b16 %v177, %v171
    %v250 = vpack.c.b16 %v184, %v178
    %v251 = vpack.c.b16 %v185, %v179
    %v252 = vpack.c.b16 %v186, %v180
    %v253 = vpack.c.b16 %v187, %v181
    %v254 = vpack.c.b16 %v188, %v182
    %v255 = vpack.c.b16 %v189, %v183
    %v256 = vpack.c.b16 %v196, %v190
    %v257 = vpack.c.b16 %v197, %v191
    %v258 = vpack.c.b16 %v198, %v192
    %v259 = vpack.c.b16 %v199, %v193
    %v260 = vpack.c.b16 %v200, %v194
    %v261 = vpack.c.b16 %v201, %v195
    %v262 = vpack.c.b16 %v208, %v202
    %v263 = vpack.c.b16 %v209, %v203
    %v264 = vpack.c.b16 %v210, %v204
    %v265 = vpack.c.b16 %v211, %v205
    %v266 = vpack.c.b16 %v212, %v206
    %v267 = vpack.c.b16 %v213, %v207
    %v268 = vpack.c.b16 %v220, %v214
    %v269 = vpack.c.b16 %v221, %v215
    %v270 = vpack.c.b16 %v222, %v216
    %v271 = vpack.c.b16 %v223, %v217
    %v272 = vpack.c.b16 %v224, %v218
    %v273 = vpack.c.b16 %v225, %v219
    %322 = vmatpush.bf16.msra.mxu0 %v268
    %323 = vmatpush.bf16.msra.mxu0 %v262
    %324 = vmatpush.bf16.msra.mxu0 %v256
    %325 = vmatpush.bf16.msra.mxu0 %v250
    %326 = vmatpush.bf16.msra.mxu0 %v244
    %327 = vmatpush.bf16.msra.mxu0 %v238
    %328 = vmatpush.bf16.msra.mxu0 %v232
    %329 = vmatpush.bf16.msra.mxu0 %v226
    %330 = vmatmul.bf16.gmra.mxu0 %v33
    %v331 = vpop.f32.mrf.mxu0
    %v332 = vadd.f32 0.0, %v331
    %v333 = vpop.f32.mrf.mxu0
    %v334 = vadd.f32 0.0, %v333
    %335 = vdwg.mxu0
    %336 = vmatpush.bf16.msra.mxu0 %v269
    %337 = vmatpush.bf16.msra.mxu0 %v263
    %338 = vmatpush.bf16.msra.mxu0 %v257
    %339 = vmatpush.bf16.msra.mxu0 %v251
    %340 = vmatpush.bf16.msra.mxu0 %v245
    %341 = vmatpush.bf16.msra.mxu0 %v239
    %342 = vmatpush.bf16.msra.mxu0 %v233
    %343 = vmatpush.bf16.msra.mxu0 %v227
    %344 = vmatmul.bf16.gmra.mxu0 %v33
    %v345 = vpop.f32.mrf.mxu0
    %v346 = vadd.f32 0.0, %v345
    %v347 = vpop.f32.mrf.mxu0
    %v348 = vadd.f32 0.0, %v347
    %349 = vdwg.mxu0
    %350 = vmatpush.bf16.msra.mxu0 %v270
    %351 = vmatpush.bf16.msra.mxu0 %v264
    %352 = vmatpush.bf16.msra.mxu0 %v258
    %353 = vmatpush.bf16.msra.mxu0 %v252
    %354 = vmatpush.bf16.msra.mxu0 %v246
    %355 = vmatpush.bf16.msra.mxu0 %v240
    %356 = vmatpush.bf16.msra.mxu0 %v234
    %357 = vmatpush.bf16.msra.mxu0 %v228
    %358 = vmatmul.bf16.gmra.mxu0 %v33
    %v359 = vpop.f32.mrf.mxu0
    %v360 = vadd.f32 0.0, %v359
    %v361 = vpop.f32.mrf.mxu0
    %v362 = vadd.f32 0.0, %v361
    %363 = vdwg.mxu0
    %364 = vmatpush.bf16.msra.mxu0 %v271
    %365 = vmatpush.bf16.msra.mxu0 %v265
    %366 = vmatpush.bf16.msra.mxu0 %v259
    %367 = vmatpush.bf16.msra.mxu0 %v253
    %368 = vmatpush.bf16.msra.mxu0 %v247
    %369 = vmatpush.bf16.msra.mxu0 %v241
    %370 = vmatpush.bf16.msra.mxu0 %v235
    %371 = vmatpush.bf16.msra.mxu0 %v229
    %372 = vmatmul.bf16.gmra.mxu0 %v33
    %v373 = vpop.f32.mrf.mxu0
    %v374 = vadd.f32 0.0, %v373
    %v375 = vpop.f32.mrf.mxu0
    %v376 = vadd.f32 0.0, %v375
    %377 = vdwg.mxu0
    %378 = vmatpush.bf16.msra.mxu0 %v272
    %379 = vmatpush.bf16.msra.mxu0 %v266
    %380 = vmatpush.bf16.msra.mxu0 %v260
    %381 = vmatpush.bf16.msra.mxu0 %v254
    %382 = vmatpush.bf16.msra.mxu0 %v248
    %383 = vmatpush.bf16.msra.mxu0 %v242
    %384 = vmatpush.bf16.msra.mxu0 %v236
    %385 = vmatpush.bf16.msra.mxu0 %v230
    %386 = vmatmul.bf16.gmra.mxu0 %v33
    %v387 = vpop.f32.mrf.mxu0
    %v388 = vadd.f32 0.0, %v387
    %v389 = vpop.f32.mrf.mxu0
    %v390 = vadd.f32 0.0, %v389
    %391 = vdwg.mxu0
    %392 = vmatpush.bf16.msra.mxu0 %v273
    %393 = vmatpush.bf16.msra.mxu0 %v267
    %394 = vmatpush.bf16.msra.mxu0 %v261
    %395 = vmatpush.bf16.msra.mxu0 %v255
    %396 = vmatpush.bf16.msra.mxu0 %v249
    %397 = vmatpush.bf16.msra.mxu0 %v243
    %398 = vmatpush.bf16.msra.mxu0 %v237
    %399 = vmatpush.bf16.msra.mxu0 %v231
    %400 = vmatmul.bf16.gmra.mxu0 %v33
    %v401 = vpop.f32.mrf.mxu0
    %v402 = vadd.f32 0.0, %v401
    %v403 = vpop.f32.mrf.mxu0
    %v404 = vadd.f32 0.0, %v403
    %405 = vdwg.mxu0
    %v407 = vperm.slane %v30, 0
    %v408 = vperm.slane %v30, 1
    %v409 = vperm.slane %v30, 2
    %v410 = vperm.slane %v30, 3
    %v411 = vperm.slane %v30, 4
    %v412 = vperm.slane %v30, 5
    %v419 = vadd.f32 %v407, %v332
    %v420 = vadd.f32 %v408, %v346
    %v421 = vadd.f32 %v409, %v360
    %v422 = vadd.f32 %v410, %v374
    %v423 = vadd.f32 %v411, %v388
    %v424 = vadd.f32 %v412, %v402
    %v425 = vadd.f32 %v407, %v334
    %v426 = vadd.f32 %v408, %v348
    %v427 = vadd.f32 %v409, %v362
    %v428 = vadd.f32 %v410, %v376
    %v429 = vadd.f32 %v411, %v390
    %v430 = vadd.f32 %v412, %v404
    %431 = vst [vmem:[%s3] sm:$0xff] %v419
    %432 = vst [vmem:[%s3 + $0x8] sm:$0xff] %v420
    %433 = vst [vmem:[%s3 + $0x10] sm:$0xff] %v421
    %434 = vst [vmem:[%s3 + $0x18] sm:$0xff] %v422
    %435 = vst [vmem:[%s3 + $0x20] sm:$0xff] %v423
    %436 = vst [vmem:[%s3 + $0x28] sm:$0xff] %v424
    %437 = vst [vmem:[%s3 + $0x30] sm:$0xff] %v425
    %438 = vst [vmem:[%s3 + $0x38] sm:$0xff] %v426
    %439 = vst [vmem:[%s3 + $0x40] sm:$0xff] %v427
    %440 = vst [vmem:[%s3 + $0x48] sm:$0xff] %v428
    %441 = vst [vmem:[%s3 + $0x50] sm:$0xff] %v429
    %442 = vst [vmem:[%s3 + $0x58] sm:$0xff] %v430
    // Predicated region
    $region18: #{_lambda_.7} parent=1 // pred_check
      _
    $region19: #{_lambda_.7} parent=1 // pred_check_branch
      %444 = sbr.rel (0) target = $region21
    $region20: #{_lambda_.7} parent=1 // pred_region
      _
    $region21: #{_lambda_.7} parent=1 // pred_fallthru
      _
    // Predicated region
    $region22: #{_lambda_.7} parent=1 // pred_check
      _
    $region23: #{_lambda_.7} parent=1 // pred_check_branch
      %446 = sbr.rel (0) target = $region25
    $region24: #{_lambda_.7} parent=1 // pred_region
      _
    $region25: #{_lambda_.7} parent=1 // pred_fallthru
      _
    %447 = vsyncpa [#allocation3], 1

// kernel: _lambda_.6
$region0: #{_lambda_.6}
  #allocation0 [shape = 'u32[]', space=smem, size = 0x4, offset = 0x4, fixed_abs, tag = 'smem constant byte address 0x4 - core index']
  #allocation1 [shape = 'u32[72,128]{1,0:T(1,128)}', space=vmem, size = 0x9000, scoped, tag = 'internal scratch']
  %s0 = inlined_call_operand.hbm [shape: f32[4,16,128], index: 0, kind: input, shape index: {}, may-alias: {0,1}]
  %s1 = inlined_call_operand.hbm [shape: f32[4,16,128], index: 1, kind: input, shape index: {}, may-alias: {0,1}]
  %s2 = inlined_call_operand.hbm [shape: bf16[2,128,128], index: 2, kind: input, shape index: {}]
  %s3 = inlined_call_operand.vmem [shape: f32[1,128], index: 3, kind: input, shape index: {}]
  %s4 = inlined_call_operand.vmem [shape: f32[16,128], index: 4, kind: output, shape index: {}]
  %s5 = sld [smem:[#allocation0]]
  $region38: #{_lambda_.6} parent=0
    _
  %s7 = ssub.s32 1, %s5
  %s8 = scalar_select 0, %s7, %s5
  $region1: #{_lambda_.6} parent=0
    #allocation2 [shape = 'u8[8192]{0}', space=vmem, size = 0x2000, scoped, tag = 'input window, operand 0, single buffered']
    #allocation3 [shape = 's32[1]{0}', space=sflag, size = 0x4, scoped, tag = 'scoped memory for _lambda_.6']
    #allocation4 [shape = 'u8[8192]{0}', space=vmem, size = 0x2000, scoped, tag = 'input window, operand 1, single buffered']
    #allocation5 [shape = 's32[1]{0}', space=sflag, size = 0x4, scoped, tag = 'scoped memory for _lambda_.6']
    #allocation6 [shape = 'u8[65536]{0}', space=vmem, size = 0x10000, scoped, tag = 'input window, operand 2, single buffered']
    %9 = vsyncpa [#allocation3], 0
    %10 = vsyncpa [#allocation5], 0
    // Predicated region
    $region2: #{_lambda_.6} parent=1 // pred_check
      _
    $region3: #{_lambda_.6} parent=1 // pred_check_branch
      %12 = sbr.rel (0) target = $region5
    $region4: #{_lambda_.6} parent=1 // pred_region
      %14 = vsyncadd [#allocation3], 0
      %s15 = scalar_lea.hbm %s0, 48
      %s16 = sshll.u32 %s15, 4
      %s17 = int_to_ptr.hbm [resolvable:$true] %s16
      %s18 = sshll.u32 [#allocation2], 4
      %s19 = int_to_ptr.vmem [resolvable:$true] %s18
      %24 = dma.hbm_to_vmem [thread:$0]  %s17, 256, %s19, [#allocation3], 128, 128, 8
    $region5: #{_lambda_.6} parent=1 // pred_fallthru
      _
    // Predicated region
    $region6: #{_lambda_.6} parent=1 // pred_check
      _
    $region7: #{_lambda_.6} parent=1 // pred_check_branch
      %26 = sbr.rel (0) target = $region9
    $region8: #{_lambda_.6} parent=1 // pred_region
      %28 = vsyncadd [#allocation5], 0
      %s29 = scalar_lea.hbm %s1, 32
      %s30 = sshll.u32 %s29, 4
      %s31 = int_to_ptr.hbm [resolvable:$true] %s30
      %s32 = sshll.u32 [#allocation4], 4
      %s33 = int_to_ptr.vmem [resolvable:$true] %s32
      %38 = dma.hbm_to_vmem [thread:$0]  %s31, 256, %s33, [#allocation5], 128, 128, 8
    $region9: #{_lambda_.6} parent=1 // pred_fallthru
      _
    // Predicated region
    $region10: #{_lambda_.6} parent=1 // pred_check
      _
    $region11: #{_lambda_.6} parent=1 // pred_check_branch
      %40 = sbr.rel (0) target = $region13
    $region12: #{_lambda_.6} parent=1 // pred_region
      %42 = vsyncadd [#allocation5], 0
      %s43 = sshll.u32 %s2, 4
      %s44 = int_to_ptr.hbm [resolvable:$true] %s43
      %s45 = sshll.u32 [#allocation6], 4
      %s46 = int_to_ptr.vmem [resolvable:$true] %s45
      %51 = dma.hbm_to_vmem [thread:$0]  %s44, 2048, %s46, [#allocation5], 64, 64, 4
    $region13: #{_lambda_.6} parent=1 // pred_fallthru
      _
    // Predicated region
    $region14: #{_lambda_.6} parent=1 // pred_check
      _
    $region15: #{_lambda_.6} parent=1 // pred_check_branch
      %53 = sbr.rel (0) target = $region17
    $region16: #{_lambda_.6} parent=1 // pred_region
      _
    $region17: #{_lambda_.6} parent=1 // pred_fallthru
      _
    // Predicated region
    $region18: #{_lambda_.6} parent=1 // pred_check
      _
    $region19: #{_lambda_.6} parent=1 // pred_check_branch
      %55 = sbr.rel (0) target = $region21
    $region20: #{_lambda_.6} parent=1 // pred_region
      %57 = dma.done [#allocation3], 256
    $region21: #{_lambda_.6} parent=1 // pred_fallthru
      _
    // Predicated region
    $region22: #{_lambda_.6} parent=1 // pred_check
      _
    $region23: #{_lambda_.6} parent=1 // pred_check_branch
      %59 = sbr.rel (0) target = $region25
    $region24: #{_lambda_.6} parent=1 // pred_region
      %61 = dma.done [#allocation5], 256
    $region25: #{_lambda_.6} parent=1 // pred_fallthru
      _
    // Predicated region
    $region26: #{_lambda_.6} parent=1 // pred_check
      _
    $region27: #{_lambda_.6} parent=1 // pred_check_branch
      %63 = sbr.rel (0) target = $region29
    $region28: #{_lambda_.6} parent=1 // pred_region
      %65 = dma.done [#allocation5], 2048
    $region29: #{_lambda_.6} parent=1 // pred_fallthru
      _
    %v66 = vld [vmem:[%s3] sm:$0x1]
    %v67 = vld [vmem:[#allocation2] sm:$0xff]
    %v68 = vld [vmem:[#allocation2 + $0x8] sm:$0xff]
    %v69 = vpack.c.bf16 %v68, %v67
    %v70 = vld [vmem:[#allocation6] sm:$0xf]
    %v71 = vld [vmem:[#allocation6 + $0x4] sm:$0xf]
    %v72 = vld [vmem:[#allocation6 + $0x8] sm:$0xf]
    %v73 = vld [vmem:[#allocation6 + $0xc] sm:$0xf]
    %v74 = vld [vmem:[#allocation6 + $0x10] sm:$0xf]
    %v75 = vld [vmem:[#allocation6 + $0x14] sm:$0xf]
    %v76 = vld [vmem:[#allocation6 + $0x18] sm:$0xf]
    %v77 = vld [vmem:[#allocation6 + $0x1c] sm:$0xf]
    %v78 = vld [vmem:[#allocation6 + $0x20] sm:$0xf]
    %v79 = vld [vmem:[#allocation6 + $0x24] sm:$0xf]
    %v80 = vld [vmem:[#allocation6 + $0x28] sm:$0xf]
    %v81 = vld [vmem:[#allocation6 + $0x2c] sm:$0xf]
    %v82 = vld [vmem:[#allocation6 + $0x30] sm:$0xf]
    %v83 = vld [vmem:[#allocation6 + $0x34] sm:$0xf]
    %v84 = vld [vmem:[#allocation6 + $0x38] sm:$0xf]
    %v85 = vld [vmem:[#allocation6 + $0x3c] sm:$0xf]
    %v102 = vunpack.c.l.b16 %v70
    %v103 = vunpack.c.l.b16 %v71
    %v104 = vunpack.c.l.b16 %v72
    %v105 = vunpack.c.l.b16 %v73
    %v106 = vunpack.c.l.b16 %v74
    %v107 = vunpack.c.l.b16 %v75
    %v108 = vunpack.c.l.b16 %v76
    %v109 = vunpack.c.l.b16 %v77
    %v110 = vunpack.c.l.b16 %v78
    %v111 = vunpack.c.l.b16 %v79
    %v112 = vunpack.c.l.b16 %v80
    %v113 = vunpack.c.l.b16 %v81
    %v114 = vunpack.c.l.b16 %v82
    %v115 = vunpack.c.l.b16 %v83
    %v116 = vunpack.c.l.b16 %v84
    %v117 = vunpack.c.l.b16 %v85
    %v118 = vpack.c.b16 %v103, %v102
    %v119 = vpack.c.b16 %v105, %v104
    %v120 = vpack.c.b16 %v107, %v106
    %v121 = vpack.c.b16 %v109, %v108
    %v122 = vpack.c.b16 %v111, %v110
    %v123 = vpack.c.b16 %v113, %v112
    %v124 = vpack.c.b16 %v115, %v114
    %v125 = vpack.c.b16 %v117, %v116
    %134 = vmatpush.bf16.msra.mxu0 %v125
    %135 = vmatpush.bf16.msra.mxu0 %v124
    %136 = vmatpush.bf16.msra.mxu0 %v123
    %137 = vmatpush.bf16.msra.mxu0 %v122
    %138 = vmatpush.bf16.msra.mxu0 %v121
    %139 = vmatpush.bf16.msra.mxu0 %v120
    %140 = vmatpush.bf16.msra.mxu0 %v119
    %141 = vmatpush.bf16.msra.mxu0 %v118
    %142 = vmatmul.bf16.gmra.mxu0 %v69
    %v143 = vpop.f32.mrf.mxu0
    %v144 = vadd.f32 0.0, %v143
    %v145 = vpop.f32.mrf.mxu0
    %v146 = vadd.f32 0.0, %v145
    %147 = vdwg.mxu0
    %v149 = vperm.slane %v66, 0
    %v151 = vadd.f32 %v149, %v144
    %v152 = vadd.f32 %v149, %v146
    %v153 = vld [vmem:[#allocation4] sm:$0xff]
    %v154 = vld [vmem:[#allocation4 + $0x8] sm:$0xff]
    %v155 = vpack.c.bf16 %v154, %v153
    %s156 = scalar_lea.vmem [#allocation6], 64
    %v157 = vld [vmem:[%s156] sm:$0xf]
    %v158 = vld [vmem:[%s156 + $0x4] sm:$0xf]
    %v159 = vld [vmem:[%s156 + $0x8] sm:$0xf]
    %v160 = vld [vmem:[%s156 + $0xc] sm:$0xf]
    %v161 = vld [vmem:[%s156 + $0x10] sm:$0xf]
    %v162 = vld [vmem:[%s156 + $0x14] sm:$0xf]
    %v163 = vld [vmem:[%s156 + $0x18] sm:$0xf]
    %v164 = vld [vmem:[%s156 + $0x1c] sm:$0xf]
    %v165 = vld [vmem:[%s156 + $0x20] sm:$0xf]
    %v166 = vld [vmem:[%s156 + $0x24] sm:$0xf]
    %v167 = vld [vmem:[%s156 + $0x28] sm:$0xf]
    %v168 = vld [vmem:[%s156 + $0x2c] sm:$0xf]
    %v169 = vld [vmem:[%s156 + $0x30] sm:$0xf]
    %v170 = vld [vmem:[%s156 + $0x34] sm:$0xf]
    %v171 = vld [vmem:[%s156 + $0x38] sm:$0xf]
    %v172 = vld [vmem:[%s156 + $0x3c] sm:$0xf]
    %v189 = vunpack.c.l.b16 %v157
    %v190 = vunpack.c.l.b16 %v158
    %v191 = vunpack.c.l.b16 %v159
    %v192 = vunpack.c.l.b16 %v160
    %v193 = vunpack.c.l.b16 %v161
    %v194 = vunpack.c.l.b16 %v162
    %v195 = vunpack.c.l.b16 %v163
    %v196 = vunpack.c.l.b16 %v164
    %v197 = vunpack.c.l.b16 %v165
    %v198 = vunpack.c.l.b16 %v166
    %v199 = vunpack.c.l.b16 %v167
    %v200 = vunpack.c.l.b16 %v168
    %v201 = vunpack.c.l.b16 %v169
    %v202 = vunpack.c.l.b16 %v170
    %v203 = vunpack.c.l.b16 %v171
    %v204 = vunpack.c.l.b16 %v172
    %v205 = vpack.c.b16 %v190, %v189
    %v206 = vpack.c.b16 %v192, %v191
    %v207 = vpack.c.b16 %v194, %v193
    %v208 = vpack.c.b16 %v196, %v195
    %v209 = vpack.c.b16 %v198, %v197
    %v210 = vpack.c.b16 %v200, %v199
    %v211 = vpack.c.b16 %v202, %v201
    %v212 = vpack.c.b16 %v204, %v203
    %221 = vmatpush.bf16.msra.mxu0 %v212
    %222 = vmatpush.bf16.msra.mxu0 %v211
    %223 = vmatpush.bf16.msra.mxu0 %v210
    %224 = vmatpush.bf16.msra.mxu0 %v209
    %225 = vmatpush.bf16.msra.mxu0 %v208
    %226 = vmatpush.bf16.msra.mxu0 %v207
    %227 = vmatpush.bf16.msra.mxu0 %v206
    %228 = vmatpush.bf16.msra.mxu0 %v205
    %229 = vmatmul.bf16.gmra.mxu0 %v155
    %v230 = vpop.f32.mrf.mxu0
    %v231 = vadd.f32 0.0, %v230
    %v232 = vpop.f32.mrf.mxu0
    %v233 = vadd.f32 0.0, %v232
    %234 = vdwg.mxu0
    %v235 = vadd.f32 %v151, %v231
    %v236 = vadd.f32 %v152, %v233
    %237 = vst [vmem:[%s4] sm:$0xff] %v235
    %238 = vst [vmem:[%s4 + $0x8] sm:$0xff] %v236
    // Predicated region
    $region30: #{_lambda_.6} parent=1 // pred_check
      _
    $region31: #{_lambda_.6} parent=1 // pred_check_branch
      %240 = sbr.rel (0) target = $region33
    $region32: #{_lambda_.6} parent=1 // pred_region
      _
    $region33: #{_lambda_.6} parent=1 // pred_fallthru
      _
    // Predicated region
    $region34: #{_lambda_.6} parent=1 // pred_check
      _
    $region35: #{_lambda_.6} parent=1 // pred_check_branch
      %242 = sbr.rel (0) target = $region37
    $region36: #{_lambda_.6} parent=1 // pred_region
      _
    $region37: #{_lambda_.6} parent=1 // pred_fallthru
      _
    %243 = vsyncpa [#allocation3], 1
    %244 = vsyncpa [#allocation5], 1

// kernel: _lambda_.9
$region0: #{_lambda_.9}
  #allocation0 [shape = 'u32[]', space=smem, size = 0x4, offset = 0x4, fixed_abs, tag = 'smem constant byte address 0x4 - core index']
  #allocation1 [shape = 'u32[72,128]{1,0:T(1,128)}', space=vmem, size = 0x9000, scoped, tag = 'internal scratch']
  %s0 = inlined_call_operand.vmem [shape: f32[1,16,128], index: 0, kind: input, shape index: {}]
  %s1 = inlined_call_operand.vmem [shape: f32[1,16,128], index: 1, kind: input, shape index: {}]
  %s2 = inlined_call_operand.hbm [shape: bf16[2,128,768], index: 2, kind: input, shape index: {}]
  %s3 = inlined_call_operand.vmem [shape: f32[1,768], index: 3, kind: input, shape index: {}]
  %s4 = inlined_call_operand.vmem [shape: f32[16,768], index: 4, kind: output, shape index: {}]
  %s5 = sld [smem:[#allocation0]]
  $region30: #{_lambda_.9} parent=0
    _
  %s7 = ssub.s32 1, %s5
  %s8 = scalar_select 0, %s7, %s5
  $region1: #{_lambda_.9} parent=0
    #allocation2 [shape = 'u8[393216]{0}', space=vmem, size = 0x60000, scoped, tag = 'input window, operand 2, single buffered']
    #allocation3 [shape = 's32[1]{0}', space=sflag, size = 0x4, scoped, tag = 'scoped memory for _lambda_.9']
    %9 = vsyncpa [#allocation3], 0
    // Predicated region
    $region2: #{_lambda_.9} parent=1 // pred_check
      _
    $region3: #{_lambda_.9} parent=1 // pred_check_branch
      %11 = sbr.rel (0) target = $region5
    $region4: #{_lambda_.9} parent=1 // pred_region
      _
    $region5: #{_lambda_.9} parent=1 // pred_fallthru
      _
    // Predicated region
    $region6: #{_lambda_.9} parent=1 // pred_check
      _
    $region7: #{_lambda_.9} parent=1 // pred_check_branch
      %13 = sbr.rel (0) target = $region9
    $region8: #{_lambda_.9} parent=1 // pred_region
      _
    $region9: #{_lambda_.9} parent=1 // pred_fallthru
      _
    // Predicated region
    $region10: #{_lambda_.9} parent=1 // pred_check
      _
    $region11: #{_lambda_.9} parent=1 // pred_check_branch
      %15 = sbr.rel (0) target = $region13
    $region12: #{_lambda_.9} parent=1 // pred_region
      %17 = vsyncadd [#allocation3], 0
      %s18 = sshll.u32 %s2, 4
      %s19 = int_to_ptr.hbm [resolvable:$true] %s18
      %s20 = sshll.u32 [#allocation2], 4
      %s21 = int_to_ptr.vmem [resolvable:$true] %s20
      %26 = dma.hbm_to_vmem [thread:$0]  %s19, 12288, %s21, [#allocation3], 384, 384, 24
    $region13: #{_lambda_.9} parent=1 // pred_fallthru
      _
    // Predicated region
    $region14: #{_lambda_.9} parent=1 // pred_check
      _
    $region15: #{_lambda_.9} parent=1 // pred_check_branch
      %28 = sbr.rel (0) target = $region17
    $region16: #{_lambda_.9} parent=1 // pred_region
      _
    $region17: #{_lambda_.9} parent=1 // pred_fallthru
      _
    // Predicated region
    $region18: #{_lambda_.9} parent=1 // pred_check
      _
    $region19: #{_lambda_.9} parent=1 // pred_check_branch
      %30 = sbr.rel (0) target = $region21
    $region20: #{_lambda_.9} parent=1 // pred_region
      %32 = dma.done [#allocation3], 12288
    $region21: #{_lambda_.9} parent=1 // pred_fallthru
      _
    %v33 = vld [vmem:[%s3] sm:$0x3f]
    %v34 = vld [vmem:[%s0] sm:$0xff]
    %v35 = vld [vmem:[%s0 + $0x8] sm:$0xff]
    %v36 = vpack.c.bf16 %v35, %v34
    %v37 = vld [vmem:[#allocation2] sm:$0xff]
    %v38 = vld [vmem:[#allocation2 + $0x8] sm:$0xff]
    %v39 = vld [vmem:[#allocation2 + $0x10] sm:$0xff]
    %v40 = vld [vmem:[#allocation2 + $0x18] sm:$0xff]
    %v41 = vld [vmem:[#allocation2 + $0x20] sm:$0xff]
    %v42 = vld [vmem:[#allocation2 + $0x28] sm:$0xff]
    %v43 = vld [vmem:[#allocation2 + $0x30] sm:$0xff]
    %v44 = vld [vmem:[#allocation2 + $0x38] sm:$0xff]
    %v45 = vld [vmem:[#allocation2 + $0x40] sm:$0xff]
    %v46 = vld [vmem:[#allocation2 + $0x48] sm:$0xff]
    %v47 = vld [vmem:[#allocation2 + $0x50] sm:$0xff]
    %v48 = vld [vmem:[#allocation2 + $0x58] sm:$0xff]
    %v49 = vld [vmem:[#allocation2 + $0x60] sm:$0xff]
    %v50 = vld [vmem:[#allocation2 + $0x68] sm:$0xff]
    %v51 = vld [vmem:[#allocation2 + $0x70] sm:$0xff]
    %v52 = vld [vmem:[#allocation2 + $0x78] sm:$0xff]
    %v53 = vld [vmem:[#allocation2 + $0x80] sm:$0xff]
    %v54 = vld [vmem:[#allocation2 + $0x88] sm:$0xff]
    %v55 = vld [vmem:[#allocation2 + $0x90] sm:$0xff]
    %v56 = vld [vmem:[#allocation2 + $0x98] sm:$0xff]
    %v57 = vld [vmem:[#allocation2 + $0xa0] sm:$0xff]
    %v58 = vld [vmem:[#allocation2 + $0xa8] sm:$0xff]
    %v59 = vld [vmem:[#allocation2 + $0xb0] sm:$0xff]
    %v60 = vld [vmem:[#allocation2 + $0xb8] sm:$0xff]
    %v61 = vld [vmem:[#allocation2 + $0xc0] sm:$0xff]
    %v62 = vld [vmem:[#allocation2 + $0xc8] sm:$0xff]
    %v63 = vld [vmem:[#allocation2 + $0xd0] sm:$0xff]
    %v64 = vld [vmem:[#allocation2 + $0xd8] sm:$0xff]
    %v65 = vld [vmem:[#allocation2 + $0xe0] sm:$0xff]
    %v66 = vld [vmem:[#allocation2 + $0xe8] sm:$0xff]
    %v67 = vld [vmem:[#allocation2 + $0xf0] sm:$0xff]
    %v68 = vld [vmem:[#allocation2 + $0xf8] sm:$0xff]
    %v69 = vld [vmem:[#allocation2 + $0x100] sm:$0xff]
    %v70 = vld [vmem:[#allocation2 + $0x108] sm:$0xff]
    %v71 = vld [vmem:[#allocation2 + $0x110] sm:$0xff]
    %v72 = vld [vmem:[#allocation2 + $0x118] sm:$0xff]
    %v73 = vld [vmem:[#allocation2 + $0x120] sm:$0xff]
    %v74 = vld [vmem:[#allocation2 + $0x128] sm:$0xff]
    %v75 = vld [vmem:[#allocation2 + $0x130] sm:$0xff]
    %v76 = vld [vmem:[#allocation2 + $0x138] sm:$0xff]
    %v77 = vld [vmem:[#allocation2 + $0x140] sm:$0xff]
    %v78 = vld [vmem:[#allocation2 + $0x148] sm:$0xff]
    %v79 = vld [vmem:[#allocation2 + $0x150] sm:$0xff]
    %v80 = vld [vmem:[#allocation2 + $0x158] sm:$0xff]
    %v81 = vld [vmem:[#allocation2 + $0x160] sm:$0xff]
    %v82 = vld [vmem:[#allocation2 + $0x168] sm:$0xff]
    %v83 = vld [vmem:[#allocation2 + $0x170] sm:$0xff]
    %v84 = vld [vmem:[#allocation2 + $0x178] sm:$0xff]
    %v133 = vunpack.c.l.b16 %v37
    %v134 = vunpack.c.h.b16 %v37
    %v135 = vunpack.c.l.b16 %v38
    %v136 = vunpack.c.h.b16 %v38
    %v137 = vunpack.c.l.b16 %v39
    %v138 = vunpack.c.h.b16 %v39
    %v139 = vunpack.c.l.b16 %v40
    %v140 = vunpack.c.h.b16 %v40
    %v141 = vunpack.c.l.b16 %v41
    %v142 = vunpack.c.h.b16 %v41
    %v143 = vunpack.c.l.b16 %v42
    %v144 = vunpack.c.h.b16 %v42
    %v145 = vunpack.c.l.b16 %v43
    %v146 = vunpack.c.h.b16 %v43
    %v147 = vunpack.c.l.b16 %v44
    %v148 = vunpack.c.h.b16 %v44
    %v149 = vunpack.c.l.b16 %v45
    %v150 = vunpack.c.h.b16 %v45
    %v151 = vunpack.c.l.b16 %v46
    %v152 = vunpack.c.h.b16 %v46
    %v153 = vunpack.c.l.b16 %v47
    %v154 = vunpack.c.h.b16 %v47
    %v155 = vunpack.c.l.b16 %v48
    %v156 = vunpack.c.h.b16 %v48
    %v157 = vunpack.c.l.b16 %v49
    %v158 = vunpack.c.h.b16 %v49
    %v159 = vunpack.c.l.b16 %v50
    %v160 = vunpack.c.h.b16 %v50
    %v161 = vunpack.c.l.b16 %v51
    %v162 = vunpack.c.h.b16 %v51
    %v163 = vunpack.c.l.b16 %v52
    %v164 = vunpack.c.h.b16 %v52
    %v165 = vunpack.c.l.b16 %v53
    %v166 = vunpack.c.h.b16 %v53
    %v167 = vunpack.c.l.b16 %v54
    %v168 = vunpack.c.h.b16 %v54
    %v169 = vunpack.c.l.b16 %v55
    %v170 = vunpack.c.h.b16 %v55
    %v171 = vunpack.c.l.b16 %v56
    %v172 = vunpack.c.h.b16 %v56
    %v173 = vunpack.c.l.b16 %v57
    %v174 = vunpack.c.h.b16 %v57
    %v175 = vunpack.c.l.b16 %v58
    %v176 = vunpack.c.h.b16 %v58
    %v177 = vunpack.c.l.b16 %v59
    %v178 = vunpack.c.h.b16 %v59
    %v179 = vunpack.c.l.b16 %v60
    %v180 = vunpack.c.h.b16 %v60
    %v181 = vunpack.c.l.b16 %v61
    %v182 = vunpack.c.h.b16 %v61
    %v183 = vunpack.c.l.b16 %v62
    %v184 = vunpack.c.h.b16 %v62
    %v185 = vunpack.c.l.b16 %v63
    %v186 = vunpack.c.h.b16 %v63
    %v187 = vunpack.c.l.b16 %v64
    %v188 = vunpack.c.h.b16 %v64
    %v189 = vunpack.c.l.b16 %v65
    %v190 = vunpack.c.h.b16 %v65
    %v191 = vunpack.c.l.b16 %v66
    %v192 = vunpack.c.h.b16 %v66
    %v193 = vunpack.c.l.b16 %v67
    %v194 = vunpack.c.h.b16 %v67
    %v195 = vunpack.c.l.b16 %v68
    %v196 = vunpack.c.h.b16 %v68
    %v197 = vunpack.c.l.b16 %v69
    %v198 = vunpack.c.h.b16 %v69
    %v199 = vunpack.c.l.b16 %v70
    %v200 = vunpack.c.h.b16 %v70
    %v201 = vunpack.c.l.b16 %v71
    %v202 = vunpack.c.h.b16 %v71
    %v203 = vunpack.c.l.b16 %v72
    %v204 = vunpack.c.h.b16 %v72
    %v205 = vunpack.c.l.b16 %v73
    %v206 = vunpack.c.h.b16 %v73
    %v207 = vunpack.c.l.b16 %v74
    %v208 = vunpack.c.h.b16 %v74
    %v209 = vunpack.c.l.b16 %v75
    %v210 = vunpack.c.h.b16 %v75
    %v211 = vunpack.c.l.b16 %v76
    %v212 = vunpack.c.h.b16 %v76
    %v213 = vunpack.c.l.b16 %v77
    %v214 = vunpack.c.h.b16 %v77
    %v215 = vunpack.c.l.b16 %v78
    %v216 = vunpack.c.h.b16 %v78
    %v217 = vunpack.c.l.b16 %v79
    %v218 = vunpack.c.h.b16 %v79
    %v219 = vunpack.c.l.b16 %v80
    %v220 = vunpack.c.h.b16 %v80
    %v221 = vunpack.c.l.b16 %v81
    %v222 = vunpack.c.h.b16 %v81
    %v223 = vunpack.c.l.b16 %v82
    %v224 = vunpack.c.h.b16 %v82
    %v225 = vunpack.c.l.b16 %v83
    %v226 = vunpack.c.h.b16 %v83
    %v227 = vunpack.c.l.b16 %v84
    %v228 = vunpack.c.h.b16 %v84
    %v229 = vpack.c.b16 %v139, %v133
    %v230 = vpack.c.b16 %v140, %v134
    %v231 = vpack.c.b16 %v141, %v135
    %v232 = vpack.c.b16 %v142, %v136
    %v233 = vpack.c.b16 %v143, %v137
    %v234 = vpack.c.b16 %v144, %v138
    %v235 = vpack.c.b16 %v151, %v145
    %v236 = vpack.c.b16 %v152, %v146
    %v237 = vpack.c.b16 %v153, %v147
    %v238 = vpack.c.b16 %v154, %v148
    %v239 = vpack.c.b16 %v155, %v149
    %v240 = vpack.c.b16 %v156, %v150
    %v241 = vpack.c.b16 %v163, %v157
    %v242 = vpack.c.b16 %v164, %v158
    %v243 = vpack.c.b16 %v165, %v159
    %v244 = vpack.c.b16 %v166, %v160
    %v245 = vpack.c.b16 %v167, %v161
    %v246 = vpack.c.b16 %v168, %v162
    %v247 = vpack.c.b16 %v175, %v169
    %v248 = vpack.c.b16 %v176, %v170
    %v249 = vpack.c.b16 %v177, %v171
    %v250 = vpack.c.b16 %v178, %v172
    %v251 = vpack.c.b16 %v179, %v173
    %v252 = vpack.c.b16 %v180, %v174
    %v253 = vpack.c.b16 %v187, %v181
    %v254 = vpack.c.b16 %v188, %v182
    %v255 = vpack.c.b16 %v189, %v183
    %v256 = vpack.c.b16 %v190, %v184
    %v257 = vpack.c.b16 %v191, %v185
    %v258 = vpack.c.b16 %v192, %v186
    %v259 = vpack.c.b16 %v199, %v193
    %v260 = vpack.c.b16 %v200, %v194
    %v261 = vpack.c.b16 %v201, %v195
    %v262 = vpack.c.b16 %v202, %v196
    %v263 = vpack.c.b16 %v203, %v197
    %v264 = vpack.c.b16 %v204, %v198
    %v265 = vpack.c.b16 %v211, %v205
    %v266 = vpack.c.b16 %v212, %v206
    %v267 = vpack.c.b16 %v213, %v207
    %v268 = vpack.c.b16 %v214, %v208
    %v269 = vpack.c.b16 %v215, %v209
    %v270 = vpack.c.b16 %v216, %v210
    %v271 = vpack.c.b16 %v223, %v217
    %v272 = vpack.c.b16 %v224, %v218
    %v273 = vpack.c.b16 %v225, %v219
    %v274 = vpack.c.b16 %v226, %v220
    %v275 = vpack.c.b16 %v227, %v221
    %v276 = vpack.c.b16 %v228, %v222
    %325 = vmatpush.bf16.msra.mxu0 %v271
    %326 = vmatpush.bf16.msra.mxu0 %v265
    %327 = vmatpush.bf16.msra.mxu0 %v259
    %328 = vmatpush.bf16.msra.mxu0 %v253
    %329 = vmatpush.bf16.msra.mxu0 %v247
    %330 = vmatpush.bf16.msra.mxu0 %v241
    %331 = vmatpush.bf16.msra.mxu0 %v235
    %332 = vmatpush.bf16.msra.mxu0 %v229
    %333 = vmatmul.bf16.gmra.mxu0 %v36
    %v334 = vpop.f32.mrf.mxu0
    %v335 = vadd.f32 0.0, %v334
    %v336 = vpop.f32.mrf.mxu0
    %v337 = vadd.f32 0.0, %v336
    %338 = vdwg.mxu0
    %339 = vmatpush.bf16.msra.mxu0 %v272
    %340 = vmatpush.bf16.msra.mxu0 %v266
    %341 = vmatpush.bf16.msra.mxu0 %v260
    %342 = vmatpush.bf16.msra.mxu0 %v254
    %343 = vmatpush.bf16.msra.mxu0 %v248
    %344 = vmatpush.bf16.msra.mxu0 %v242
    %345 = vmatpush.bf16.msra.mxu0 %v236
    %346 = vmatpush.bf16.msra.mxu0 %v230
    %347 = vmatmul.bf16.gmra.mxu0 %v36
    %v348 = vpop.f32.mrf.mxu0
    %v349 = vadd.f32 0.0, %v348
    %v350 = vpop.f32.mrf.mxu0
    %v351 = vadd.f32 0.0, %v350
    %352 = vdwg.mxu0
    %353 = vmatpush.bf16.msra.mxu0 %v273
    %354 = vmatpush.bf16.msra.mxu0 %v267
    %355 = vmatpush.bf16.msra.mxu0 %v261
    %356 = vmatpush.bf16.msra.mxu0 %v255
    %357 = vmatpush.bf16.msra.mxu0 %v249
    %358 = vmatpush.bf16.msra.mxu0 %v243
    %359 = vmatpush.bf16.msra.mxu0 %v237
    %360 = vmatpush.bf16.msra.mxu0 %v231
    %361 = vmatmul.bf16.gmra.mxu0 %v36
    %v362 = vpop.f32.mrf.mxu0
    %v363 = vadd.f32 0.0, %v362
    %v364 = vpop.f32.mrf.mxu0
    %v365 = vadd.f32 0.0, %v364
    %366 = vdwg.mxu0
    %367 = vmatpush.bf16.msra.mxu0 %v274
    %368 = vmatpush.bf16.msra.mxu0 %v268
    %369 = vmatpush.bf16.msra.mxu0 %v262
    %370 = vmatpush.bf16.msra.mxu0 %v256
    %371 = vmatpush.bf16.msra.mxu0 %v250
    %372 = vmatpush.bf16.msra.mxu0 %v244
    %373 = vmatpush.bf16.msra.mxu0 %v238
    %374 = vmatpush.bf16.msra.mxu0 %v232
    %375 = vmatmul.bf16.gmra.mxu0 %v36
    %v376 = vpop.f32.mrf.mxu0
    %v377 = vadd.f32 0.0, %v376
    %v378 = vpop.f32.mrf.mxu0
    %v379 = vadd.f32 0.0, %v378
    %380 = vdwg.mxu0
    %381 = vmatpush.bf16.msra.mxu0 %v275
    %382 = vmatpush.bf16.msra.mxu0 %v269
    %383 = vmatpush.bf16.msra.mxu0 %v263
    %384 = vmatpush.bf16.msra.mxu0 %v257
    %385 = vmatpush.bf16.msra.mxu0 %v251
    %386 = vmatpush.bf16.msra.mxu0 %v245
    %387 = vmatpush.bf16.msra.mxu0 %v239
    %388 = vmatpush.bf16.msra.mxu0 %v233
    %389 = vmatmul.bf16.gmra.mxu0 %v36
    %v390 = vpop.f32.mrf.mxu0
    %v391 = vadd.f32 0.0, %v390
    %v392 = vpop.f32.mrf.mxu0
    %v393 = vadd.f32 0.0, %v392
    %394 = vdwg.mxu0
    %395 = vmatpush.bf16.msra.mxu0 %v276
    %396 = vmatpush.bf16.msra.mxu0 %v270
    %397 = vmatpush.bf16.msra.mxu0 %v264
    %398 = vmatpush.bf16.msra.mxu0 %v258
    %399 = vmatpush.bf16.msra.mxu0 %v252
    %400 = vmatpush.bf16.msra.mxu0 %v246
    %401 = vmatpush.bf16.msra.mxu0 %v240
    %402 = vmatpush.bf16.msra.mxu0 %v234
    %403 = vmatmul.bf16.gmra.mxu0 %v36
    %v404 = vpop.f32.mrf.mxu0
    %v405 = vadd.f32 0.0, %v404
    %v406 = vpop.f32.mrf.mxu0
    %v407 = vadd.f32 0.0, %v406
    %408 = vdwg.mxu0
    %v410 = vperm.slane %v33, 0
    %v411 = vperm.slane %v33, 1
    %v412 = vperm.slane %v33, 2
    %v413 = vperm.slane %v33, 3
    %v414 = vperm.slane %v33, 4
    %v415 = vperm.slane %v33, 5
    %v422 = vadd.f32 %v410, %v335
    %v423 = vadd.f32 %v411, %v349
    %v424 = vadd.f32 %v412, %v363
    %v425 = vadd.f32 %v413, %v377
    %v426 = vadd.f32 %v414, %v391
    %v427 = vadd.f32 %v415, %v405
    %v428 = vadd.f32 %v410, %v337
    %v429 = vadd.f32 %v411, %v351
    %v430 = vadd.f32 %v412, %v365
    %v431 = vadd.f32 %v413, %v379
    %v432 = vadd.f32 %v414, %v393
    %v433 = vadd.f32 %v415, %v407
    %v434 = vld [vmem:[%s1] sm:$0xff]
    %v435 = vld [vmem:[%s1 + $0x8] sm:$0xff]
    %v436 = vpack.c.bf16 %v435, %v434
    %s437 = scalar_lea.vmem [#allocation2], 384
    %v438 = vld [vmem:[%s437] sm:$0xff]
    %v439 = vld [vmem:[%s437 + $0x8] sm:$0xff]
    %v440 = vld [vmem:[%s437 + $0x10] sm:$0xff]
    %v441 = vld [vmem:[%s437 + $0x18] sm:$0xff]
    %v442 = vld [vmem:[%s437 + $0x20] sm:$0xff]
    %v443 = vld [vmem:[%s437 + $0x28] sm:$0xff]
    %v444 = vld [vmem:[%s437 + $0x30] sm:$0xff]
    %v445 = vld [vmem:[%s437 + $0x38] sm:$0xff]
    %v446 = vld [vmem:[%s437 + $0x40] sm:$0xff]
    %v447 = vld [vmem:[%s437 + $0x48] sm:$0xff]
    %v448 = vld [vmem:[%s437 + $0x50] sm:$0xff]
    %v449 = vld [vmem:[%s437 + $0x58] sm:$0xff]
    %v450 = vld [vmem:[%s437 + $0x60] sm:$0xff]
    %v451 = vld [vmem:[%s437 + $0x68] sm:$0xff]
    %v452 = vld [vmem:[%s437 + $0x70] sm:$0xff]
    %v453 = vld [vmem:[%s437 + $0x78] sm:$0xff]
    %v454 = vld [vmem:[%s437 + $0x80] sm:$0xff]
    %v455 = vld [vmem:[%s437 + $0x88] sm:$0xff]
    %v456 = vld [vmem:[%s437 + $0x90] sm:$0xff]
    %v457 = vld [vmem:[%s437 + $0x98] sm:$0xff]
    %v458 = vld [vmem:[%s437 + $0xa0] sm:$0xff]
    %v459 = vld [vmem:[%s437 + $0xa8] sm:$0xff]
    %v460 = vld [vmem:[%s437 + $0xb0] sm:$0xff]
    %v461 = vld [vmem:[%s437 + $0xb8] sm:$0xff]
    %v462 = vld [vmem:[%s437 + $0xc0] sm:$0xff]
    %v463 = vld [vmem:[%s437 + $0xc8] sm:$0xff]
    %v464 = vld [vmem:[%s437 + $0xd0] sm:$0xff]
    %v465 = vld [vmem:[%s437 + $0xd8] sm:$0xff]
    %v466 = vld [vmem:[%s437 + $0xe0] sm:$0xff]
    %v467 = vld [vmem:[%s437 + $0xe8] sm:$0xff]
    %v468 = vld [vmem:[%s437 + $0xf0] sm:$0xff]
    %v469 = vld [vmem:[%s437 + $0xf8] sm:$0xff]
    %v470 = vld [vmem:[%s437 + $0x100] sm:$0xff]
    %v471 = vld [vmem:[%s437 + $0x108] sm:$0xff]
    %v472 = vld [vmem:[%s437 + $0x110] sm:$0xff]
    %v473 = vld [vmem:[%s437 + $0x118] sm:$0xff]
    %v474 = vld [vmem:[%s437 + $0x120] sm:$0xff]
    %v475 = vld [vmem:[%s437 + $0x128] sm:$0xff]
    %v476 = vld [vmem:[%s437 + $0x130] sm:$0xff]
    %v477 = vld [vmem:[%s437 + $0x138] sm:$0xff]
    %v478 = vld [vmem:[%s437 + $0x140] sm:$0xff]
    %v479 = vld [vmem:[%s437 + $0x148] sm:$0xff]
    %v480 = vld [vmem:[%s437 + $0x150] sm:$0xff]
    %v481 = vld [vmem:[%s437 + $0x158] sm:$0xff]
    %v482 = vld [vmem:[%s437 + $0x160] sm:$0xff]
    %v483 = vld [vmem:[%s437 + $0x168] sm:$0xff]
    %v484 = vld [vmem:[%s437 + $0x170] sm:$0xff]
    %v485 = vld [vmem:[%s437 + $0x178] sm:$0xff]
    %v534 = vunpack.c.l.b16 %v438
    %v535 = vunpack.c.h.b16 %v438
    %v536 = vunpack.c.l.b16 %v439
    %v537 = vunpack.c.h.b16 %v439
    %v538 = vunpack.c.l.b16 %v440
    %v539 = vunpack.c.h.b16 %v440
    %v540 = vunpack.c.l.b16 %v441
    %v541 = vunpack.c.h.b16 %v441
    %v542 = vunpack.c.l.b16 %v442
    %v543 = vunpack.c.h.b16 %v442
    %v544 = vunpack.c.l.b16 %v443
    %v545 = vunpack.c.h.b16 %v443
    %v546 = vunpack.c.l.b16 %v444
    %v547 = vunpack.c.h.b16 %v444
    %v548 = vunpack.c.l.b16 %v445
    %v549 = vunpack.c.h.b16 %v445
    %v550 = vunpack.c.l.b16 %v446
    %v551 = vunpack.c.h.b16 %v446
    %v552 = vunpack.c.l.b16 %v447
    %v553 = vunpack.c.h.b16 %v447
    %v554 = vunpack.c.l.b16 %v448
    %v555 = vunpack.c.h.b16 %v448
    %v556 = vunpack.c.l.b16 %v449
    %v557 = vunpack.c.h.b16 %v449
    %v558 = vunpack.c.l.b16 %v450
    %v559 = vunpack.c.h.b16 %v450
    %v560 = vunpack.c.l.b16 %v451
    %v561 = vunpack.c.h.b16 %v451
    %v562 = vunpack.c.l.b16 %v452
    %v563 = vunpack.c.h.b16 %v452
    %v564 = vunpack.c.l.b16 %v453
    %v565 = vunpack.c.h.b16 %v453
    %v566 = vunpack.c.l.b16 %v454
    %v567 = vunpack.c.h.b16 %v454
    %v568 = vunpack.c.l.b16 %v455
    %v569 = vunpack.c.h.b16 %v455
    %v570 = vunpack.c.l.b16 %v456
    %v571 = vunpack.c.h.b16 %v456
    %v572 = vunpack.c.l.b16 %v457
    %v573 = vunpack.c.h.b16 %v457
    %v574 = vunpack.c.l.b16 %v458
    %v575 = vunpack.c.h.b16 %v458
    %v576 = vunpack.c.l.b16 %v459
    %v577 = vunpack.c.h.b16 %v459
    %v578 = vunpack.c.l.b16 %v460
    %v579 = vunpack.c.h.b16 %v460
    %v580 = vunpack.c.l.b16 %v461
    %v581 = vunpack.c.h.b16 %v461
    %v582 = vunpack.c.l.b16 %v462
    %v583 = vunpack.c.h.b16 %v462
    %v584 = vunpack.c.l.b16 %v463
    %v585 = vunpack.c.h.b16 %v463
    %v586 = vunpack.c.l.b16 %v464
    %v587 = vunpack.c.h.b16 %v464
    %v588 = vunpack.c.l.b16 %v465
    %v589 = vunpack.c.h.b16 %v465
    %v590 = vunpack.c.l.b16 %v466
    %v591 = vunpack.c.h.b16 %v466
    %v592 = vunpack.c.l.b16 %v467
    %v593 = vunpack.c.h.b16 %v467
    %v594 = vunpack.c.l.b16 %v468
    %v595 = vunpack.c.h.b16 %v468
    %v596 = vunpack.c.l.b16 %v469
    %v597 = vunpack.c.h.b16 %v469
    %v598 = vunpack.c.l.b16 %v470
    %v599 = vunpack.c.h.b16 %v470
    %v600 = vunpack.c.l.b16 %v471
    %v601 = vunpack.c.h.b16 %v471
    %v602 = vunpack.c.l.b16 %v472
    %v603 = vunpack.c.h.b16 %v472
    %v604 = vunpack.c.l.b16 %v473
    %v605 = vunpack.c.h.b16 %v473
    %v606 = vunpack.c.l.b16 %v474
    %v607 = vunpack.c.h.b16 %v474
    %v608 = vunpack.c.l.b16 %v475
    %v609 = vunpack.c.h.b16 %v475
    %v610 = vunpack.c.l.b16 %v476
    %v611 = vunpack.c.h.b16 %v476
    %v612 = vunpack.c.l.b16 %v477
    %v613 = vunpack.c.h.b16 %v477
    %v614 = vunpack.c.l.b16 %v478
    %v615 = vunpack.c.h.b16 %v478
    %v616 = vunpack.c.l.b16 %v479
    %v617 = vunpack.c.h.b16 %v479
    %v618 = vunpack.c.l.b16 %v480
    %v619 = vunpack.c.h.b16 %v480
    %v620 = vunpack.c.l.b16 %v481
    %v621 = vunpack.c.h.b16 %v481
    %v622 = vunpack.c.l.b16 %v482
    %v623 = vunpack.c.h.b16 %v482
    %v624 = vunpack.c.l.b16 %v483
    %v625 = vunpack.c.h.b16 %v483
    %v626 = vunpack.c.l.b16 %v484
    %v627 = vunpack.c.h.b16 %v484
    %v628 = vunpack.c.l.b16 %v485
    %v629 = vunpack.c.h.b16 %v485
    %v630 = vpack.c.b16 %v540, %v534
    %v631 = vpack.c.b16 %v541, %v535
    %v632 = vpack.c.b16 %v542, %v536
    %v633 = vpack.c.b16 %v543, %v537
    %v634 = vpack.c.b16 %v544, %v538
    %v635 = vpack.c.b16 %v545, %v539
    %v636 = vpack.c.b16 %v552, %v546
    %v637 = vpack.c.b16 %v553, %v547
    %v638 = vpack.c.b16 %v554, %v548
    %v639 = vpack.c.b16 %v555, %v549
    %v640 = vpack.c.b16 %v556, %v550
    %v641 = vpack.c.b16 %v557, %v551
    %v642 = vpack.c.b16 %v564, %v558
    %v643 = vpack.c.b16 %v565, %v559
    %v644 = vpack.c.b16 %v566, %v560
    %v645 = vpack.c.b16 %v567, %v561
    %v646 = vpack.c.b16 %v568, %v562
    %v647 = vpack.c.b16 %v569, %v563
    %v648 = vpack.c.b16 %v576, %v570
    %v649 = vpack.c.b16 %v577, %v571
    %v650 = vpack.c.b16 %v578, %v572
    %v651 = vpack.c.b16 %v579, %v573
    %v652 = vpack.c.b16 %v580, %v574
    %v653 = vpack.c.b16 %v581, %v575
    %v654 = vpack.c.b16 %v588, %v582
    %v655 = vpack.c.b16 %v589, %v583
    %v656 = vpack.c.b16 %v590, %v584
    %v657 = vpack.c.b16 %v591, %v585
    %v658 = vpack.c.b16 %v592, %v586
    %v659 = vpack.c.b16 %v593, %v587
    %v660 = vpack.c.b16 %v600, %v594
    %v661 = vpack.c.b16 %v601, %v595
    %v662 = vpack.c.b16 %v602, %v596
    %v663 = vpack.c.b16 %v603, %v597
    %v664 = vpack.c.b16 %v604, %v598
    %v665 = vpack.c.b16 %v605, %v599
    %v666 = vpack.c.b16 %v612, %v606
    %v667 = vpack.c.b16 %v613, %v607
    %v668 = vpack.c.b16 %v614, %v608
    %v669 = vpack.c.b16 %v615, %v609
    %v670 = vpack.c.b16 %v616, %v610
    %v671 = vpack.c.b16 %v617, %v611
    %v672 = vpack.c.b16 %v624, %v618
    %v673 = vpack.c.b16 %v625, %v619
    %v674 = vpack.c.b16 %v626, %v620
    %v675 = vpack.c.b16 %v627, %v621
    %v676 = vpack.c.b16 %v628, %v622
    %v677 = vpack.c.b16 %v629, %v623
    %726 = vmatpush.bf16.msra.mxu0 %v672
    %727 = vmatpush.bf16.msra.mxu0 %v666
    %728 = vmatpush.bf16.msra.mxu0 %v660
    %729 = vmatpush.bf16.msra.mxu0 %v654
    %730 = vmatpush.bf16.msra.mxu0 %v648
    %731 = vmatpush.bf16.msra.mxu0 %v642
    %732 = vmatpush.bf16.msra.mxu0 %v636
    %733 = vmatpush.bf16.msra.mxu0 %v630
    %734 = vmatmul.bf16.gmra.mxu0 %v436
    %v735 = vpop.f32.mrf.mxu0
    %v736 = vadd.f32 0.0, %v735
    %v737 = vpop.f32.mrf.mxu0
    %v738 = vadd.f32 0.0, %v737
    %739 = vdwg.mxu0
    %740 = vmatpush.bf16.msra.mxu0 %v673
    %741 = vmatpush.bf16.msra.mxu0 %v667
    %742 = vmatpush.bf16.msra.mxu0 %v661
    %743 = vmatpush.bf16.msra.mxu0 %v655
    %744 = vmatpush.bf16.msra.mxu0 %v649
    %745 = vmatpush.bf16.msra.mxu0 %v643
    %746 = vmatpush.bf16.msra.mxu0 %v637
    %747 = vmatpush.bf16.msra.mxu0 %v631
    %748 = vmatmul.bf16.gmra.mxu0 %v436
    %v749 = vpop.f32.mrf.mxu0
    %v750 = vadd.f32 0.0, %v749
    %v751 = vpop.f32.mrf.mxu0
    %v752 = vadd.f32 0.0, %v751
    %753 = vdwg.mxu0
    %754 = vmatpush.bf16.msra.mxu0 %v674
    %755 = vmatpush.bf16.msra.mxu0 %v668
    %756 = vmatpush.bf16.msra.mxu0 %v662
    %757 = vmatpush.bf16.msra.mxu0 %v656
    %758 = vmatpush.bf16.msra.mxu0 %v650
    %759 = vmatpush.bf16.msra.mxu0 %v644
    %760 = vmatpush.bf16.msra.mxu0 %v638
    %761 = vmatpush.bf16.msra.mxu0 %v632
    %762 = vmatmul.bf16.gmra.mxu0 %v436
    %v763 = vpop.f32.mrf.mxu0
    %v764 = vadd.f32 0.0, %v763
    %v765 = vpop.f32.mrf.mxu0
    %v766 = vadd.f32 0.0, %v765
    %767 = vdwg.mxu0
    %768 = vmatpush.bf16.msra.mxu0 %v675
    %769 = vmatpush.bf16.msra.mxu0 %v669
    %770 = vmatpush.bf16.msra.mxu0 %v663
    %771 = vmatpush.bf16.msra.mxu0 %v657
    %772 = vmatpush.bf16.msra.mxu0 %v651
    %773 = vmatpush.bf16.msra.mxu0 %v645
    %774 = vmatpush.bf16.msra.mxu0 %v639
    %775 = vmatpush.bf16.msra.mxu0 %v633
    %776 = vmatmul.bf16.gmra.mxu0 %v436
    %v777 = vpop.f32.mrf.mxu0
    %v778 = vadd.f32 0.0, %v777
    %v779 = vpop.f32.mrf.mxu0
    %v780 = vadd.f32 0.0, %v779
    %781 = vdwg.mxu0
    %782 = vmatpush.bf16.msra.mxu0 %v676
    %783 = vmatpush.bf16.msra.mxu0 %v670
    %784 = vmatpush.bf16.msra.mxu0 %v664
    %785 = vmatpush.bf16.msra.mxu0 %v658
    %786 = vmatpush.bf16.msra.mxu0 %v652
    %787 = vmatpush.bf16.msra.mxu0 %v646
    %788 = vmatpush.bf16.msra.mxu0 %v640
    %789 = vmatpush.bf16.msra.mxu0 %v634
    %790 = vmatmul.bf16.gmra.mxu0 %v436
    %v791 = vpop.f32.mrf.mxu0
    %v792 = vadd.f32 0.0, %v791
    %v793 = vpop.f32.mrf.mxu0
    %v794 = vadd.f32 0.0, %v793
    %795 = vdwg.mxu0
    %796 = vmatpush.bf16.msra.mxu0 %v677
    %797 = vmatpush.bf16.msra.mxu0 %v671
    %798 = vmatpush.bf16.msra.mxu0 %v665
    %799 = vmatpush.bf16.msra.mxu0 %v659
    %800 = vmatpush.bf16.msra.mxu0 %v653
    %801 = vmatpush.bf16.msra.mxu0 %v647
    %802 = vmatpush.bf16.msra.mxu0 %v641
    %803 = vmatpush.bf16.msra.mxu0 %v635
    %804 = vmatmul.bf16.gmra.mxu0 %v436
    %v805 = vpop.f32.mrf.mxu0
    %v806 = vadd.f32 0.0, %v805
    %v807 = vpop.f32.mrf.mxu0
    %v808 = vadd.f32 0.0, %v807
    %809 = vdwg.mxu0
    %v810 = vadd.f32 %v422, %v736
    %v811 = vadd.f32 %v423, %v750
    %v812 = vadd.f32 %v424, %v764
    %v813 = vadd.f32 %v425, %v778
    %v814 = vadd.f32 %v426, %v792
    %v815 = vadd.f32 %v427, %v806
    %v816 = vadd.f32 %v428, %v738
    %v817 = vadd.f32 %v429, %v752
    %v818 = vadd.f32 %v430, %v766
    %v819 = vadd.f32 %v431, %v780
    %v820 = vadd.f32 %v432, %v794
    %v821 = vadd.f32 %v433, %v808
    %822 = vst [vmem:[%s4] sm:$0xff] %v810
    %823 = vst [vmem:[%s4 + $0x8] sm:$0xff] %v811
    %824 = vst [vmem:[%s4 + $0x10] sm:$0xff] %v812
    %825 = vst [vmem:[%s4 + $0x18] sm:$0xff] %v813
    %826 = vst [vmem:[%s4 + $0x20] sm:$0xff] %v814
    %827 = vst [vmem:[%s4 + $0x28] sm:$0xff] %v815
    %828 = vst [vmem:[%s4 + $0x30] sm:$0xff] %v816
    %829 = vst [vmem:[%s4 + $0x38] sm:$0xff] %v817
    %830 = vst [vmem:[%s4 + $0x40] sm:$0xff] %v818
    %831 = vst [vmem:[%s4 + $0x48] sm:$0xff] %v819
    %832 = vst [vmem:[%s4 + $0x50] sm:$0xff] %v820
    %833 = vst [vmem:[%s4 + $0x58] sm:$0xff] %v821
    // Predicated region
    $region22: #{_lambda_.9} parent=1 // pred_check
      _
    $region23: #{_lambda_.9} parent=1 // pred_check_branch
      %835 = sbr.rel (0) target = $region25
    $region24: #{_lambda_.9} parent=1 // pred_region
      _
    $region25: #{_lambda_.9} parent=1 // pred_fallthru
      _
    // Predicated region
    $region26: #{_lambda_.9} parent=1 // pred_check
      _
    $region27: #{_lambda_.9} parent=1 // pred_check_branch
      %837 = sbr.rel (0) target = $region29
    $region28: #{_lambda_.9} parent=1 // pred_region
      _
    $region29: #{_lambda_.9} parent=1 // pred_fallthru
      _
    %838 = vsyncpa [#allocation3], 1

// kernel: _lambda_.11
$region0: #{_lambda_.11}
  #allocation0 [shape = 'u32[]', space=smem, size = 0x4, offset = 0x4, fixed_abs, tag = 'smem constant byte address 0x4 - core index']
  #allocation1 [shape = 'u32[72,128]{1,0:T(1,128)}', space=vmem, size = 0x9000, scoped, tag = 'internal scratch']
  %s0 = inlined_call_operand.vmem [shape: f32[1,16,128], index: 0, kind: input, shape index: {}]
  %s1 = inlined_call_operand.vmem [shape: f32[1,16,128], index: 1, kind: input, shape index: {}]
  %s2 = inlined_call_operand.hbm [shape: bf16[2,128,128], index: 2, kind: input, shape index: {}]
  %s3 = inlined_call_operand.vmem [shape: f32[1,128], index: 3, kind: input, shape index: {}]
  %s4 = inlined_call_operand.vmem [shape: f32[16,128], index: 4, kind: output, shape index: {}]
  %s5 = sld [smem:[#allocation0]]
  $region30: #{_lambda_.11} parent=0
    _
  %s7 = ssub.s32 1, %s5
  %s8 = scalar_select 0, %s7, %s5
  $region1: #{_lambda_.11} parent=0
    #allocation2 [shape = 'u8[65536]{0}', space=vmem, size = 0x10000, scoped, tag = 'input window, operand 2, single buffered']
    #allocation3 [shape = 's32[1]{0}', space=sflag, size = 0x4, scoped, tag = 'scoped memory for _lambda_.11']
    %9 = vsyncpa [#allocation3], 0
    // Predicated region
    $region2: #{_lambda_.11} parent=1 // pred_check
      _
    $region3: #{_lambda_.11} parent=1 // pred_check_branch
      %11 = sbr.rel (0) target = $region5
    $region4: #{_lambda_.11} parent=1 // pred_region
      _
    $region5: #{_lambda_.11} parent=1 // pred_fallthru
      _
    // Predicated region
    $region6: #{_lambda_.11} parent=1 // pred_check
      _
    $region7: #{_lambda_.11} parent=1 // pred_check_branch
      %13 = sbr.rel (0) target = $region9
    $region8: #{_lambda_.11} parent=1 // pred_region
      _
    $region9: #{_lambda_.11} parent=1 // pred_fallthru
      _
    // Predicated region
    $region10: #{_lambda_.11} parent=1 // pred_check
      _
    $region11: #{_lambda_.11} parent=1 // pred_check_branch
      %15 = sbr.rel (0) target = $region13
    $region12: #{_lambda_.11} parent=1 // pred_region
      %17 = vsyncadd [#allocation3], 0
      %s18 = sshll.u32 %s2, 4
      %s19 = int_to_ptr.hbm [resolvable:$true] %s18
      %s20 = sshll.u32 [#allocation2], 4
      %s21 = int_to_ptr.vmem [resolvable:$true] %s20
      %26 = dma.hbm_to_vmem [thread:$0]  %s19, 2048, %s21, [#allocation3], 64, 64, 4
    $region13: #{_lambda_.11} parent=1 // pred_fallthru
      _
    // Predicated region
    $region14: #{_lambda_.11} parent=1 // pred_check
      _
    $region15: #{_lambda_.11} parent=1 // pred_check_branch
      %28 = sbr.rel (0) target = $region17
    $region16: #{_lambda_.11} parent=1 // pred_region
      _
    $region17: #{_lambda_.11} parent=1 // pred_fallthru
      _
    // Predicated region
    $region18: #{_lambda_.11} parent=1 // pred_check
      _
    $region19: #{_lambda_.11} parent=1 // pred_check_branch
      %30 = sbr.rel (0) target = $region21
    $region20: #{_lambda_.11} parent=1 // pred_region
      %32 = dma.done [#allocation3], 2048
    $region21: #{_lambda_.11} parent=1 // pred_fallthru
      _
    %v33 = vld [vmem:[%s3] sm:$0x1]
    %v34 = vld [vmem:[%s0] sm:$0xff]
    %v35 = vld [vmem:[%s0 + $0x8] sm:$0xff]
    %v36 = vpack.c.bf16 %v35, %v34
    %v37 = vld [vmem:[#allocation2] sm:$0xf]
    %v38 = vld [vmem:[#allocation2 + $0x4] sm:$0xf]
    %v39 = vld [vmem:[#allocation2 + $0x8] sm:$0xf]
    %v40 = vld [vmem:[#allocation2 + $0xc] sm:$0xf]
    %v41 = vld [vmem:[#allocation2 + $0x10] sm:$0xf]
    %v42 = vld [vmem:[#allocation2 + $0x14] sm:$0xf]
    %v43 = vld [vmem:[#allocation2 + $0x18] sm:$0xf]
    %v44 = vld [vmem:[#allocation2 + $0x1c] sm:$0xf]
    %v45 = vld [vmem:[#allocation2 + $0x20] sm:$0xf]
    %v46 = vld [vmem:[#allocation2 + $0x24] sm:$0xf]
    %v47 = vld [vmem:[#allocation2 + $0x28] sm:$0xf]
    %v48 = vld [vmem:[#allocation2 + $0x2c] sm:$0xf]
    %v49 = vld [vmem:[#allocation2 + $0x30] sm:$0xf]
    %v50 = vld [vmem:[#allocation2 + $0x34] sm:$0xf]
    %v51 = vld [vmem:[#allocation2 + $0x38] sm:$0xf]
    %v52 = vld [vmem:[#allocation2 + $0x3c] sm:$0xf]
    %v69 = vunpack.c.l.b16 %v37
    %v70 = vunpack.c.l.b16 %v38
    %v71 = vunpack.c.l.b16 %v39
    %v72 = vunpack.c.l.b16 %v40
    %v73 = vunpack.c.l.b16 %v41
    %v74 = vunpack.c.l.b16 %v42
    %v75 = vunpack.c.l.b16 %v43
    %v76 = vunpack.c.l.b16 %v44
    %v77 = vunpack.c.l.b16 %v45
    %v78 = vunpack.c.l.b16 %v46
    %v79 = vunpack.c.l.b16 %v47
    %v80 = vunpack.c.l.b16 %v48
    %v81 = vunpack.c.l.b16 %v49
    %v82 = vunpack.c.l.b16 %v50
    %v83 = vunpack.c.l.b16 %v51
    %v84 = vunpack.c.l.b16 %v52
    %v85 = vpack.c.b16 %v70, %v69
    %v86 = vpack.c.b16 %v72, %v71
    %v87 = vpack.c.b16 %v74, %v73
    %v88 = vpack.c.b16 %v76, %v75
    %v89 = vpack.c.b16 %v78, %v77
    %v90 = vpack.c.b16 %v80, %v79
    %v91 = vpack.c.b16 %v82, %v81
    %v92 = vpack.c.b16 %v84, %v83
    %101 = vmatpush.bf16.msra.mxu0 %v92
    %102 = vmatpush.bf16.msra.mxu0 %v91
    %103 = vmatpush.bf16.msra.mxu0 %v90
    %104 = vmatpush.bf16.msra.mxu0 %v89
    %105 = vmatpush.bf16.msra.mxu0 %v88
    %106 = vmatpush.bf16.msra.mxu0 %v87
    %107 = vmatpush.bf16.msra.mxu0 %v86
    %108 = vmatpush.bf16.msra.mxu0 %v85
    %109 = vmatmul.bf16.gmra.mxu0 %v36
    %v110 = vpop.f32.mrf.mxu0
    %v111 = vadd.f32 0.0, %v110
    %v112 = vpop.f32.mrf.mxu0
    %v113 = vadd.f32 0.0, %v112
    %114 = vdwg.mxu0
    %v116 = vperm.slane %v33, 0
    %v118 = vadd.f32 %v116, %v111
    %v119 = vadd.f32 %v116, %v113
    %v120 = vld [vmem:[%s1] sm:$0xff]
    %v121 = vld [vmem:[%s1 + $0x8] sm:$0xff]
    %v122 = vpack.c.bf16 %v121, %v120
    %s123 = scalar_lea.vmem [#allocation2], 64
    %v124 = vld [vmem:[%s123] sm:$0xf]
    %v125 = vld [vmem:[%s123 + $0x4] sm:$0xf]
    %v126 = vld [vmem:[%s123 + $0x8] sm:$0xf]
    %v127 = vld [vmem:[%s123 + $0xc] sm:$0xf]
    %v128 = vld [vmem:[%s123 + $0x10] sm:$0xf]
    %v129 = vld [vmem:[%s123 + $0x14] sm:$0xf]
    %v130 = vld [vmem:[%s123 + $0x18] sm:$0xf]
    %v131 = vld [vmem:[%s123 + $0x1c] sm:$0xf]
    %v132 = vld [vmem:[%s123 + $0x20] sm:$0xf]
    %v133 = vld [vmem:[%s123 + $0x24] sm:$0xf]
    %v134 = vld [vmem:[%s123 + $0x28] sm:$0xf]
    %v135 = vld [vmem:[%s123 + $0x2c] sm:$0xf]
    %v136 = vld [vmem:[%s123 + $0x30] sm:$0xf]
    %v137 = vld [vmem:[%s123 + $0x34] sm:$0xf]
    %v138 = vld [vmem:[%s123 + $0x38] sm:$0xf]
    %v139 = vld [vmem:[%s123 + $0x3c] sm:$0xf]
    %v156 = vunpack.c.l.b16 %v124
    %v157 = vunpack.c.l.b16 %v125
    %v158 = vunpack.c.l.b16 %v126
    %v159 = vunpack.c.l.b16 %v127
    %v160 = vunpack.c.l.b16 %v128
    %v161 = vunpack.c.l.b16 %v129
    %v162 = vunpack.c.l.b16 %v130
    %v163 = vunpack.c.l.b16 %v131
    %v164 = vunpack.c.l.b16 %v132
    %v165 = vunpack.c.l.b16 %v133
    %v166 = vunpack.c.l.b16 %v134
    %v167 = vunpack.c.l.b16 %v135
    %v168 = vunpack.c.l.b16 %v136
    %v169 = vunpack.c.l.b16 %v137
    %v170 = vunpack.c.l.b16 %v138
    %v171 = vunpack.c.l.b16 %v139
    %v172 = vpack.c.b16 %v157, %v156
    %v173 = vpack.c.b16 %v159, %v158
    %v174 = vpack.c.b16 %v161, %v160
    %v175 = vpack.c.b16 %v163, %v162
    %v176 = vpack.c.b16 %v165, %v164
    %v177 = vpack.c.b16 %v167, %v166
    %v178 = vpack.c.b16 %v169, %v168
    %v179 = vpack.c.b16 %v171, %v170
    %188 = vmatpush.bf16.msra.mxu0 %v179
    %189 = vmatpush.bf16.msra.mxu0 %v178
    %190 = vmatpush.bf16.msra.mxu0 %v177
    %191 = vmatpush.bf16.msra.mxu0 %v176
    %192 = vmatpush.bf16.msra.mxu0 %v175
    %193 = vmatpush.bf16.msra.mxu0 %v174
    %194 = vmatpush.bf16.msra.mxu0 %v173
    %195 = vmatpush.bf16.msra.mxu0 %v172
    %196 = vmatmul.bf16.gmra.mxu0 %v122
    %v197 = vpop.f32.mrf.mxu0
    %v198 = vadd.f32 0.0, %v197
    %v199 = vpop.f32.mrf.mxu0
    %v200 = vadd.f32 0.0, %v199
    %201 = vdwg.mxu0
    %v202 = vadd.f32 %v118, %v198
    %v203 = vadd.f32 %v119, %v200
    %204 = vst [vmem:[%s4] sm:$0xff] %v202
    %205 = vst [vmem:[%s4 + $0x8] sm:$0xff] %v203
    // Predicated region
    $region22: #{_lambda_.11} parent=1 // pred_check
      _
    $region23: #{_lambda_.11} parent=1 // pred_check_branch
      %207 = sbr.rel (0) target = $region25
    $region24: #{_lambda_.11} parent=1 // pred_region
      _
    $region25: #{_lambda_.11} parent=1 // pred_fallthru
      _
    // Predicated region
    $region26: #{_lambda_.11} parent=1 // pred_check
      _
    $region27: #{_lambda_.11} parent=1 // pred_check_branch
      %209 = sbr.rel (0) target = $region29
    $region28: #{_lambda_.11} parent=1 // pred_region
      _
    $region29: #{_lambda_.11} parent=1 // pred_fallthru
      _
    %210 = vsyncpa [#allocation3], 1

// kernel: _lambda_.8
$region0: #{_lambda_.8}
  #allocation0 [shape = 'u32[]', space=smem, size = 0x4, offset = 0x4, fixed_abs, tag = 'smem constant byte address 0x4 - core index']
  #allocation1 [shape = 'u32[72,128]{1,0:T(1,128)}', space=vmem, size = 0x9000, scoped, tag = 'internal scratch']
  #allocation2 [shape = 'f32[2,128]{1,0:T(2,128)}', space=vmem, size = 0x400, scoped, tag = 'scratch operand']
  #allocation3 [shape = 'f32[2,128]{1,0:T(2,128)}', space=vmem, size = 0x400, scoped, tag = 'scratch operand']
  %s0 = inlined_call_operand.vmem [shape: f32[2,8,768], index: 0, kind: input, shape index: {}, may-alias: {0,1}]
  %s1 = inlined_call_operand.vmem [shape: f32[2,8,768], index: 1, kind: input, shape index: {}, may-alias: {0,1}]
  %s2 = inlined_call_operand.hbm [shape: bf16[128,384], index: 2, kind: input, shape index: {}]
  %s3 = inlined_call_operand.hbm [shape: bf16[128,384], index: 3, kind: input, shape index: {}]
  %s4 = inlined_call_operand.vmem [shape: f32[2,1,128], index: 4, kind: input, shape index: {}]
  %s5 = inlined_call_operand.vmem [shape: f32[2,8,128], index: 5, kind: output, shape index: {0}]
  %s6 = inlined_call_operand.vmem [shape: f32[2,8,128], index: 6, kind: output, shape index: {1}]
  %7 = xla_tuple %s5, %s6
  %s8 = sld [smem:[#allocation0]]
  $region96: #{_lambda_.8} parent=0
    _
  %s10 = ssub.s32 1, %s8
  %s11 = scalar_select 0, %s10, %s8
  $region1: #{_lambda_.8} parent=0
    #allocation4 [shape = 'u8[24576]{0}', space=vmem, size = 0x6000, scoped, tag = 'input window, operand 0, single buffered']
    #allocation5 [shape = 'u8[24576]{0}', space=vmem, size = 0x6000, scoped, tag = 'input window, operand 1, single buffered']
    #allocation6 [shape = 'u8[98304]{0}', space=vmem, size = 0x18000, scoped, tag = 'input window, operand 2, single buffered']
    #allocation7 [shape = 's32[1]{0}', space=sflag, size = 0x4, scoped, tag = 'scoped memory for _lambda_.8']
    #allocation8 [shape = 'u8[98304]{0}', space=vmem, size = 0x18000, scoped, tag = 'input window, operand 3, single buffered']
    #allocation9 [shape = 's32[1]{0}', space=sflag, size = 0x4, scoped, tag = 'scoped memory for _lambda_.8']
    %12 = vsyncpa [#allocation7], 0
    %13 = vsyncpa [#allocation9], 0
    // Predicated region
    $region2: #{_lambda_.8} parent=1 // pred_check
      _
    $region3: #{_lambda_.8} parent=1 // pred_check_branch
      %15 = sbr.rel (0) target = $region5
    $region4: #{_lambda_.8} parent=1 // pred_region
      // Predicated region
      $region6: #{_lambda_.8} parent=4 // pred_check
        _
      $region7: #{_lambda_.8} parent=4 // pred_check_branch
        %17 = sbr.rel (0) target = $region9
      $region8: #{_lambda_.8} parent=4 // pred_region
        // Predicated region
        $region10: #{_lambda_.8} parent=8 // pred_check
          _
        $region11: #{_lambda_.8} parent=8 // pred_check_branch
          %19 = sbr.rel (0) target = $region13
        $region12: #{_lambda_.8} parent=8 // pred_region
          loop: start=0, step=1, limit=1
          $region14: #{_lambda_.8} parent=12 // loop_pre_header
            _
          $region15: #{_lambda_.8} parent=12 // loop_header
            %s21 = sphi 0, %s25
            %p22 = scmp.ge.s32.totalorder %s21, 1
            %s26 = sphi %s0, %s0
            %s27 = sphi [#allocation4], [#allocation4]
          $region16: #{_lambda_.8} parent=12 // loop_header_branch
            %24 = sbr.rel (%p22) target = $region20
          $region17: #{_lambda_.8} parent=12 // loop_body
            %v28 = vld [vmem:[%s26] sm:$0xff]
            %29 = vst [vmem:[%s27] sm:$0xff] %v28
            %v30 = vld [vmem:[%s26 + $0x8] sm:$0xff]
            %31 = vst [vmem:[%s27 + $0x8] sm:$0xff] %v30
            %v32 = vld [vmem:[%s26 + $0x10] sm:$0xff]
            %33 = vst [vmem:[%s27 + $0x10] sm:$0xff] %v32
            %v34 = vld [vmem:[%s26 + $0x30] sm:$0xff]
            %35 = vst [vmem:[%s27 + $0x18] sm:$0xff] %v34
            %v36 = vld [vmem:[%s26 + $0x38] sm:$0xff]
            %37 = vst [vmem:[%s27 + $0x20] sm:$0xff] %v36
            %v38 = vld [vmem:[%s26 + $0x40] sm:$0xff]
            %39 = vst [vmem:[%s27 + $0x28] sm:$0xff] %v38
          $region18: #{_lambda_.8} parent=12 // loop_footer
            %s25 = sadd.s32 1, %s21
          $region19: #{_lambda_.8} parent=12 // loop_footer_branch
            %20 = sbr.rel target = $region15
          $region20: #{_lambda_.8} parent=12 // loop_exit
            _
        $region13: #{_lambda_.8} parent=8 // pred_fallthru
          _
        // Predicated region
        $region21: #{_lambda_.8} parent=8 // pred_check
          _
        $region22: #{_lambda_.8} parent=8 // pred_check_branch
          %41 = sbr.rel target = $region24
        $region23: #{_lambda_.8} parent=8 // pred_region
          _
        $region24: #{_lambda_.8} parent=8 // pred_fallthru
          _
      $region9: #{_lambda_.8} parent=4 // pred_fallthru
        _
      %42 = vnop
    $region5: #{_lambda_.8} parent=1 // pred_fallthru
      _
    // Predicated region
    $region25: #{_lambda_.8} parent=1 // pred_check
      _
    $region26: #{_lambda_.8} parent=1 // pred_check_branch
      %44 = sbr.rel (0) target = $region28
    $region27: #{_lambda_.8} parent=1 // pred_region
      %s45 = ssub.s32 0, 0
      %s46 = smul.addr %s45, 6
      %s47 = sadd.s32 3, %s46
      %s48 = smul.addr %s47, 8
      %s49 = scalar_lea.vmem %s1, %s48
      // Predicated region
      $region29: #{_lambda_.8} parent=27 // pred_check
        _
      $region30: #{_lambda_.8} parent=27 // pred_check_branch
        %51 = sbr.rel (0) target = $region32
      $region31: #{_lambda_.8} parent=27 // pred_region
        // Predicated region
        $region33: #{_lambda_.8} parent=31 // pred_check
          _
        $region34: #{_lambda_.8} parent=31 // pred_check_branch
          %53 = sbr.rel (0) target = $region36
        $region35: #{_lambda_.8} parent=31 // pred_region
          loop: start=0, step=1, limit=1
          $region37: #{_lambda_.8} parent=35 // loop_pre_header
            _
          $region38: #{_lambda_.8} parent=35 // loop_header
            %s55 = sphi 0, %s59
            %p56 = scmp.ge.s32.totalorder %s55, 1
            %s60 = sphi %s49, %s49
            %s61 = sphi [#allocation5], [#allocation5]
          $region39: #{_lambda_.8} parent=35 // loop_header_branch
            %58 = sbr.rel (%p56) target = $region43
          $region40: #{_lambda_.8} parent=35 // loop_body
            %v62 = vld [vmem:[%s60] sm:$0xff]
            %63 = vst [vmem:[%s61] sm:$0xff] %v62
            %v64 = vld [vmem:[%s60 + $0x8] sm:$0xff]
            %65 = vst [vmem:[%s61 + $0x8] sm:$0xff] %v64
            %v66 = vld [vmem:[%s60 + $0x10] sm:$0xff]
            %67 = vst [vmem:[%s61 + $0x10] sm:$0xff] %v66
            %v68 = vld [vmem:[%s60 + $0x30] sm:$0xff]
            %69 = vst [vmem:[%s61 + $0x18] sm:$0xff] %v68
            %v70 = vld [vmem:[%s60 + $0x38] sm:$0xff]
            %71 = vst [vmem:[%s61 + $0x20] sm:$0xff] %v70
            %v72 = vld [vmem:[%s60 + $0x40] sm:$0xff]
            %73 = vst [vmem:[%s61 + $0x28] sm:$0xff] %v72
          $region41: #{_lambda_.8} parent=35 // loop_footer
            %s59 = sadd.s32 1, %s55
          $region42: #{_lambda_.8} parent=35 // loop_footer_branch
            %54 = sbr.rel target = $region38
          $region43: #{_lambda_.8} parent=35 // loop_exit
            _
        $region36: #{_lambda_.8} parent=31 // pred_fallthru
          _
        // Predicated region
        $region44: #{_lambda_.8} parent=31 // pred_check
          _
        $region45: #{_lambda_.8} parent=31 // pred_check_branch
          %75 = sbr.rel target = $region47
        $region46: #{_lambda_.8} parent=31 // pred_region
          _
        $region47: #{_lambda_.8} parent=31 // pred_fallthru
          _
      $region32: #{_lambda_.8} parent=27 // pred_fallthru
        _
      %76 = vnop
    $region28: #{_lambda_.8} parent=1 // pred_fallthru
      _
    // Predicated region
    $region48: #{_lambda_.8} parent=1 // pred_check
      _
    $region49: #{_lambda_.8} parent=1 // pred_check_branch
      %78 = sbr.rel (0) target = $region51
    $region50: #{_lambda_.8} parent=1 // pred_region
      %80 = vsyncadd [#allocation7], 0
      %s81 = sshll.u32 %s2, 4
      %s82 = int_to_ptr.hbm [resolvable:$true] %s81
      %s83 = sshll.u32 [#allocation6], 4
      %s84 = int_to_ptr.vmem [resolvable:$true] %s83
      %89 = dma.hbm_to_vmem [thread:$0]  %s82, 3072, %s84, [#allocation7], 192, 192, 12
    $region51: #{_lambda_.8} parent=1 // pred_fallthru
      _
    // Predicated region
    $region52: #{_lambda_.8} parent=1 // pred_check
      _
    $region53: #{_lambda_.8} parent=1 // pred_check_branch
      %91 = sbr.rel (0) target = $region55
    $region54: #{_lambda_.8} parent=1 // pred_region
      %93 = vsyncadd [#allocation9], 0
      %s94 = sshll.u32 %s3, 4
      %s95 = int_to_ptr.hbm [resolvable:$true] %s94
      %s96 = sshll.u32 [#allocation8], 4
      %s97 = int_to_ptr.vmem [resolvable:$true] %s96
      %102 = dma.hbm_to_vmem [thread:$0]  %s95, 3072, %s97, [#allocation9], 192, 192, 12
    $region55: #{_lambda_.8} parent=1 // pred_fallthru
      _
    // Predicated region
    $region56: #{_lambda_.8} parent=1 // pred_check
      _
    $region57: #{_lambda_.8} parent=1 // pred_check_branch
      %104 = sbr.rel (0) target = $region59
    $region58: #{_lambda_.8} parent=1 // pred_region
      _
    $region59: #{_lambda_.8} parent=1 // pred_fallthru
      _
    // Predicated region
    $region60: #{_lambda_.8} parent=1 // pred_check
      _
    $region61: #{_lambda_.8} parent=1 // pred_check_branch
      %106 = sbr.rel (0) target = $region63
    $region62: #{_lambda_.8} parent=1 // pred_region
      _
    $region63: #{_lambda_.8} parent=1 // pred_fallthru
      _
    // Predicated region
    $region64: #{_lambda_.8} parent=1 // pred_check
      _
    $region65: #{_lambda_.8} parent=1 // pred_check_branch
      %108 = sbr.rel (0) target = $region67
    $region66: #{_lambda_.8} parent=1 // pred_region
      _
    $region67: #{_lambda_.8} parent=1 // pred_fallthru
      _
    // Predicated region
    $region68: #{_lambda_.8} parent=1 // pred_check
      _
    $region69: #{_lambda_.8} parent=1 // pred_check_branch
      %110 = sbr.rel (0) target = $region71
    $region70: #{_lambda_.8} parent=1 // pred_region
      %112 = dma.done [#allocation7], 3072
    $region71: #{_lambda_.8} parent=1 // pred_fallthru
      _
    // Predicated region
    $region72: #{_lambda_.8} parent=1 // pred_check
      _
    $region73: #{_lambda_.8} parent=1 // pred_check_branch
      %114 = sbr.rel (0) target = $region75
    $region74: #{_lambda_.8} parent=1 // pred_region
      %116 = dma.done [#allocation9], 3072
    $region75: #{_lambda_.8} parent=1 // pred_fallthru
      _
    %s117 = ssub.s32 0, 0
    %p118 = scmp.lt.s32.totalorder %s117, 0
    %s119 = scalar_select %p118, %s117, 0
    %s120 = smul.addr %s119, 8
    %s121 = scalar_lea.vmem %s6, %s120
    %s122 = ssub.s32 0, 0
    %s123 = ssub.s32 0, 0
    %p124 = scmp.lt.s32.totalorder %s123, 0
    %s125 = scalar_select %p124, %s123, 0
    %s126 = smul.addr %s125, 8
    %s127 = scalar_lea.vmem %s6, %s126
    %s128 = ssub.s32 0, 0
    %p129 = scmp.eq.s32.totalorder 0, 0
    // Predicated region
    $region76: #{_lambda_.8} parent=1 // pred_check
      %p130 = pneg %p129
    $region77: #{_lambda_.8} parent=1 // pred_check_branch
      %132 = sbr.rel (%p130) target = $region79
    $region78: #{_lambda_.8} parent=1 // pred_region
      %133 = vst [vmem:[#allocation2] sm:$0x3] 0.0
      %134 = vst [vmem:[#allocation3] sm:$0x3] 0.0
    $region79: #{_lambda_.8} parent=1 // pred_fallthru
      _
    %v135 = vld [vmem:[#allocation4] sm:$0xff]
    %v136 = vld [vmem:[#allocation4 + $0x8] sm:$0xff]
    %v137 = vld [vmem:[#allocation4 + $0x10] sm:$0xff]
    %v138 = vld [vmem:[#allocation4 + $0x18] sm:$0xff]
    %v139 = vld [vmem:[#allocation4 + $0x20] sm:$0xff]
    %v140 = vld [vmem:[#allocation4 + $0x28] sm:$0xff]
    %v141 = vld [vmem:[#allocation5] sm:$0xff]
    %v142 = vld [vmem:[#allocation5 + $0x8] sm:$0xff]
    %v143 = vld [vmem:[#allocation5 + $0x10] sm:$0xff]
    %v144 = vld [vmem:[#allocation5 + $0x18] sm:$0xff]
    %v145 = vld [vmem:[#allocation5 + $0x20] sm:$0xff]
    %v146 = vld [vmem:[#allocation5 + $0x28] sm:$0xff]
    %v147 = vld [vmem:[#allocation6] sm:$0xff]
    %v148 = vld [vmem:[#allocation6 + $0x8] sm:$0xf]
    %v149 = vld [vmem:[#allocation6 + $0xc] sm:$0xff]
    %v150 = vld [vmem:[#allocation6 + $0x14] sm:$0xf]
    %v151 = vld [vmem:[#allocation6 + $0x18] sm:$0xff]
    %v152 = vld [vmem:[#allocation6 + $0x20] sm:$0xf]
    %v153 = vld [vmem:[#allocation6 + $0x24] sm:$0xff]
    %v154 = vld [vmem:[#allocation6 + $0x2c] sm:$0xf]
    %v155 = vld [vmem:[#allocation6 + $0x30] sm:$0xff]
    %v156 = vld [vmem:[#allocation6 + $0x38] sm:$0xf]
    %v157 = vld [vmem:[#allocation6 + $0x3c] sm:$0xff]
    %v158 = vld [vmem:[#allocation6 + $0x44] sm:$0xf]
    %v159 = vld [vmem:[#allocation6 + $0x48] sm:$0xff]
    %v160 = vld [vmem:[#allocation6 + $0x50] sm:$0xf]
    %v161 = vld [vmem:[#allocation6 + $0x54] sm:$0xff]
    %v162 = vld [vmem:[#allocation6 + $0x5c] sm:$0xf]
    %v163 = vld [vmem:[#allocation6 + $0x60] sm:$0xff]
    %v164 = vld [vmem:[#allocation6 + $0x68] sm:$0xf]
    %v165 = vld [vmem:[#allocation6 + $0x6c] sm:$0xff]
    %v166 = vld [vmem:[#allocation6 + $0x74] sm:$0xf]
    %v167 = vld [vmem:[#allocation6 + $0x78] sm:$0xff]
    %v168 = vld [vmem:[#allocation6 + $0x80] sm:$0xf]
    %v169 = vld [vmem:[#allocation6 + $0x84] sm:$0xff]
    %v170 = vld [vmem:[#allocation6 + $0x8c] sm:$0xf]
    %v171 = vld [vmem:[#allocation6 + $0x90] sm:$0xff]
    %v172 = vld [vmem:[#allocation6 + $0x98] sm:$0xf]
    %v173 = vld [vmem:[#allocation6 + $0x9c] sm:$0xff]
    %v174 = vld [vmem:[#allocation6 + $0xa4] sm:$0xf]
    %v175 = vld [vmem:[#allocation6 + $0xa8] sm:$0xff]
    %v176 = vld [vmem:[#allocation6 + $0xb0] sm:$0xf]
    %v177 = vld [vmem:[#allocation6 + $0xb4] sm:$0xff]
    %v178 = vld [vmem:[#allocation6 + $0xbc] sm:$0xf]
    %v179 = vld [vmem:[#allocation8] sm:$0xff]
    %v180 = vld [vmem:[#allocation8 + $0x8] sm:$0xf]
    %v181 = vld [vmem:[#allocation8 + $0xc] sm:$0xff]
    %v182 = vld [vmem:[#allocation8 + $0x14] sm:$0xf]
    %v183 = vld [vmem:[#allocation8 + $0x18] sm:$0xff]
    %v184 = vld [vmem:[#allocation8 + $0x20] sm:$0xf]
    %v185 = vld [vmem:[#allocation8 + $0x24] sm:$0xff]
    %v186 = vld [vmem:[#allocation8 + $0x2c] sm:$0xf]
    %v187 = vld [vmem:[#allocation8 + $0x30] sm:$0xff]
    %v188 = vld [vmem:[#allocation8 + $0x38] sm:$0xf]
    %v189 = vld [vmem:[#allocation8 + $0x3c] sm:$0xff]
    %v190 = vld [vmem:[#allocation8 + $0x44] sm:$0xf]
    %v191 = vld [vmem:[#allocation8 + $0x48] sm:$0xff]
    %v192 = vld [vmem:[#allocation8 + $0x50] sm:$0xf]
    %v193 = vld [vmem:[#allocation8 + $0x54] sm:$0xff]
    %v194 = vld [vmem:[#allocation8 + $0x5c] sm:$0xf]
    %v195 = vld [vmem:[#allocation8 + $0x60] sm:$0xff]
    %v196 = vld [vmem:[#allocation8 + $0x68] sm:$0xf]
    %v197 = vld [vmem:[#allocation8 + $0x6c] sm:$0xff]
    %v198 = vld [vmem:[#allocation8 + $0x74] sm:$0xf]
    %v199 = vld [vmem:[#allocation8 + $0x78] sm:$0xff]
    %v200 = vld [vmem:[#allocation8 + $0x80] sm:$0xf]
    %v201 = vld [vmem:[#allocation8 + $0x84] sm:$0xff]
    %v202 = vld [vmem:[#allocation8 + $0x8c] sm:$0xf]
    %v203 = vld [vmem:[#allocation8 + $0x90] sm:$0xff]
    %v204 = vld [vmem:[#allocation8 + $0x98] sm:$0xf]
    %v205 = vld [vmem:[#allocation8 + $0x9c] sm:$0xff]
    %v206 = vld [vmem:[#allocation8 + $0xa4] sm:$0xf]
    %v207 = vld [vmem:[#allocation8 + $0xa8] sm:$0xff]
    %v208 = vld [vmem:[#allocation8 + $0xb0] sm:$0xf]
    %v209 = vld [vmem:[#allocation8 + $0xb4] sm:$0xff]
    %v210 = vld [vmem:[#allocation8 + $0xbc] sm:$0xf]
    %v211 = vld [vmem:[%s4] sm:$0x1]
    %s212 = scalar_lea.vmem %s4, 1
    %v213 = vld [vmem:[%s212] sm:$0x1]
    %v214 = vld [vmem:[#allocation2] sm:$0x3]
    %v215 = vpack.c.bf16 %v214, %v214
    %v248 = vunpack.c.l.b16 %v147
    %v249 = vunpack.c.h.b16 %v147
    %v250 = vunpack.c.l.b16 %v148
    %v251 = vunpack.c.l.b16 %v149
    %v252 = vunpack.c.h.b16 %v149
    %v253 = vunpack.c.l.b16 %v150
    %v254 = vunpack.c.l.b16 %v151
    %v255 = vunpack.c.h.b16 %v151
    %v256 = vunpack.c.l.b16 %v152
    %v257 = vunpack.c.l.b16 %v153
    %v258 = vunpack.c.h.b16 %v153
    %v259 = vunpack.c.l.b16 %v154
    %v260 = vunpack.c.l.b16 %v155
    %v261 = vunpack.c.h.b16 %v155
    %v262 = vunpack.c.l.b16 %v156
    %v263 = vunpack.c.l.b16 %v157
    %v264 = vunpack.c.h.b16 %v157
    %v265 = vunpack.c.l.b16 %v158
    %v266 = vunpack.c.l.b16 %v159
    %v267 = vunpack.c.h.b16 %v159
    %v268 = vunpack.c.l.b16 %v160
    %v269 = vunpack.c.l.b16 %v161
    %v270 = vunpack.c.h.b16 %v161
    %v271 = vunpack.c.l.b16 %v162
    %v272 = vunpack.c.l.b16 %v163
    %v273 = vunpack.c.h.b16 %v163
    %v274 = vunpack.c.l.b16 %v164
    %v275 = vunpack.c.l.b16 %v165
    %v276 = vunpack.c.h.b16 %v165
    %v277 = vunpack.c.l.b16 %v166
    %v278 = vunpack.c.l.b16 %v167
    %v279 = vunpack.c.h.b16 %v167
    %v280 = vunpack.c.l.b16 %v168
    %v281 = vunpack.c.l.b16 %v169
    %v282 = vunpack.c.h.b16 %v169
    %v283 = vunpack.c.l.b16 %v170
    %v284 = vunpack.c.l.b16 %v171
    %v285 = vunpack.c.h.b16 %v171
    %v286 = vunpack.c.l.b16 %v172
    %v287 = vunpack.c.l.b16 %v173
    %v288 = vunpack.c.h.b16 %v173
    %v289 = vunpack.c.l.b16 %v174
    %v290 = vunpack.c.l.b16 %v175
    %v291 = vunpack.c.h.b16 %v175
    %v292 = vunpack.c.l.b16 %v176
    %v293 = vunpack.c.l.b16 %v177
    %v294 = vunpack.c.h.b16 %v177
    %v295 = vunpack.c.l.b16 %v178
    %v296 = vpack.c.b16 %v251, %v248
    %v297 = vpack.c.b16 %v252, %v249
    %v298 = vpack.c.b16 %v253, %v250
    %v299 = vpack.c.b16 %v257, %v254
    %v300 = vpack.c.b16 %v258, %v255
    %v301 = vpack.c.b16 %v259, %v256
    %v302 = vpack.c.b16 %v263, %v260
    %v303 = vpack.c.b16 %v264, %v261
    %v304 = vpack.c.b16 %v265, %v262
    %v305 = vpack.c.b16 %v269, %v266
    %v306 = vpack.c.b16 %v270, %v267
    %v307 = vpack.c.b16 %v271, %v268
    %v308 = vpack.c.b16 %v275, %v272
    %v309 = vpack.c.b16 %v276, %v273
    %v310 = vpack.c.b16 %v277, %v274
    %v311 = vpack.c.b16 %v281, %v278
    %v312 = vpack.c.b16 %v282, %v279
    %v313 = vpack.c.b16 %v283, %v280
    %v314 = vpack.c.b16 %v287, %v284
    %v315 = vpack.c.b16 %v288, %v285
    %v316 = vpack.c.b16 %v289, %v286
    %v317 = vpack.c.b16 %v293, %v290
    %v318 = vpack.c.b16 %v294, %v291
    %v319 = vpack.c.b16 %v295, %v292
    %344 = vmatpush.bf16.msra.mxu0 %v317
    %345 = vmatpush.bf16.msra.mxu0 %v314
    %346 = vmatpush.bf16.msra.mxu0 %v311
    %347 = vmatpush.bf16.msra.mxu0 %v308
    %348 = vmatpush.bf16.msra.mxu0 %v305
    %349 = vmatpush.bf16.msra.mxu0 %v302
    %350 = vmatpush.bf16.msra.mxu0 %v299
    %351 = vmatpush.bf16.msra.mxu0 %v296
    %352 = vmatmul.bf16.gmra.mxu0 %v215
    %v353 = vpop.f32.mrf.mxu0
    %v354 = vadd.f32 0.0, %v353
    %v355 = vpop.f32.mrf.mxu0
    %356 = vdwg.mxu0
    %357 = vmatpush.bf16.msra.mxu0 %v318
    %358 = vmatpush.bf16.msra.mxu0 %v315
    %359 = vmatpush.bf16.msra.mxu0 %v312
    %360 = vmatpush.bf16.msra.mxu0 %v309
    %361 = vmatpush.bf16.msra.mxu0 %v306
    %362 = vmatpush.bf16.msra.mxu0 %v303
    %363 = vmatpush.bf16.msra.mxu0 %v300
    %364 = vmatpush.bf16.msra.mxu0 %v297
    %365 = vmatmul.bf16.gmra.mxu0 %v215
    %v366 = vpop.f32.mrf.mxu0
    %v367 = vadd.f32 0.0, %v366
    %v368 = vpop.f32.mrf.mxu0
    %369 = vdwg.mxu0
    %370 = vmatpush.bf16.msra.mxu0 %v319
    %371 = vmatpush.bf16.msra.mxu0 %v316
    %372 = vmatpush.bf16.msra.mxu0 %v313
    %373 = vmatpush.bf16.msra.mxu0 %v310
    %374 = vmatpush.bf16.msra.mxu0 %v307
    %375 = vmatpush.bf16.msra.mxu0 %v304
    %376 = vmatpush.bf16.msra.mxu0 %v301
    %377 = vmatpush.bf16.msra.mxu0 %v298
    %378 = vmatmul.bf16.gmra.mxu0 %v215
    %v379 = vpop.f32.mrf.mxu0
    %v380 = vadd.f32 0.0, %v379
    %v381 = vpop.f32.mrf.mxu0
    %382 = vdwg.mxu0
    %v384 = vrot.slane %v354, 1
    %v387 = vadd.f32 %v135, %v354
    %v388 = vadd.f32 %v138, %v384
    %v389 = vxor.u32 %v387, 2147483648
    %v390 = vxor.u32 %v388, 2147483648
    %v391 = vmul.f32 %v389, 1.442695
    %v392 = vpow.pop %v391
    %v393 = vmul.f32 %v390, 1.442695
    %v394 = vpow.pop %v393
    %v395 = vadd.f32 %v392, 1.0
    %v396 = vadd.f32 %v394, 1.0
    %v397 = vrcp.pop %v395
    %v398 = vmul.f32 %v395, %v397
    %v399 = vsub.f32 1.0, %v398
    %v400 = vmul.f32 %v397, %v399
    %v401 = vadd.f32 %v397, %v400
    %vm402 = vweird.f32 %v395
    %vm403 = vweird.f32 %v397
    %vm404 = vmor %vm402, %vm403
    %v405 = vsel %vm404, %v397, %v401
    %v406 = vand.u32 2147483647, %v395
    %vm407 = vcmp.eq.f32.partialorder %v406, 8.507059e+37
    %v408 = vand.u32 %v395, 2147483648
    %v409 = vor.u32 1.1754944e-38, %v408
    %v410 = vsel %vm407, %v409, %v405
    %v411 = vmul.f32 1.0, %v410
    %v412 = vrcp.pop %v396
    %v413 = vmul.f32 %v396, %v412
    %v414 = vsub.f32 1.0, %v413
    %v415 = vmul.f32 %v412, %v414
    %v416 = vadd.f32 %v412, %v415
    %vm417 = vweird.f32 %v396
    %vm418 = vweird.f32 %v412
    %vm419 = vmor %vm417, %vm418
    %v420 = vsel %vm419, %v412, %v416
    %v421 = vand.u32 2147483647, %v396
    %vm422 = vcmp.eq.f32.partialorder %v421, 8.507059e+37
    %v423 = vand.u32 %v396, 2147483648
    %v424 = vor.u32 1.1754944e-38, %v423
    %v425 = vsel %vm422, %v424, %v420
    %v426 = vmul.f32 1.0, %v425
    %v428 = vrot.slane %v367, 1
    %v431 = vadd.f32 %v136, %v367
    %v432 = vadd.f32 %v139, %v428
    %v433 = vxor.u32 %v431, 2147483648
    %v434 = vxor.u32 %v432, 2147483648
    %v435 = vmul.f32 %v433, 1.442695
    %v436 = vpow.pop %v435
    %v437 = vmul.f32 %v434, 1.442695
    %v438 = vpow.pop %v437
    %v439 = vadd.f32 %v436, 1.0
    %v440 = vadd.f32 %v438, 1.0
    %v441 = vrcp.pop %v439
    %v442 = vmul.f32 %v439, %v441
    %v443 = vsub.f32 1.0, %v442
    %v444 = vmul.f32 %v441, %v443
    %v445 = vadd.f32 %v441, %v444
    %vm446 = vweird.f32 %v439
    %vm447 = vweird.f32 %v441
    %vm448 = vmor %vm446, %vm447
    %v449 = vsel %vm448, %v441, %v445
    %v450 = vand.u32 2147483647, %v439
    %vm451 = vcmp.eq.f32.partialorder %v450, 8.507059e+37
    %v452 = vand.u32 %v439, 2147483648
    %v453 = vor.u32 1.1754944e-38, %v452
    %v454 = vsel %vm451, %v453, %v449
    %v455 = vmul.f32 1.0, %v454
    %v456 = vrcp.pop %v440
    %v457 = vmul.f32 %v440, %v456
    %v458 = vsub.f32 1.0, %v457
    %v459 = vmul.f32 %v456, %v458
    %v460 = vadd.f32 %v456, %v459
    %vm461 = vweird.f32 %v440
    %vm462 = vweird.f32 %v456
    %vm463 = vmor %vm461, %vm462
    %v464 = vsel %vm463, %v456, %v460
    %v465 = vand.u32 2147483647, %v440
    %vm466 = vcmp.eq.f32.partialorder %v465, 8.507059e+37
    %v467 = vand.u32 %v440, 2147483648
    %v468 = vor.u32 1.1754944e-38, %v467
    %v469 = vsel %vm466, %v468, %v464
    %v470 = vmul.f32 1.0, %v469
    %v472 = vperm.slane %v211, 0
    %v474 = vadd.f32 %v380, %v472
    %v476 = vrot.slane %v474, 1
    %v479 = vmul.f32 %v411, %v474
    %v480 = vmul.f32 %v426, %v476
    %v481 = vadd.f32 %v137, %v479
    %v482 = vadd.f32 %v140, %v480
    %v483 = vtanh.pop %v481
    %v484 = vtanh.pop %v482
    %v485 = vsub.f32 1.0, %v455
    %v486 = vsub.f32 1.0, %v470
    %v487 = vmul.f32 %v485, %v483
    %v488 = vmul.f32 %v486, %v484
    %v490 = vrot.slane %v214, 1
    %v493 = vmul.f32 %v455, %v214
    %v494 = vmul.f32 %v470, %v490
    %v495 = vadd.f32 %v487, %v493
    %v496 = vadd.f32 %v488, %v494
    %v497 = vld [vmem:[#allocation3] sm:$0x3]
    %v498 = vpack.c.bf16 %v497, %v497
    %v531 = vunpack.c.l.b16 %v179
    %v532 = vunpack.c.h.b16 %v179
    %v533 = vunpack.c.l.b16 %v180
    %v534 = vunpack.c.l.b16 %v181
    %v535 = vunpack.c.h.b16 %v181
    %v536 = vunpack.c.l.b16 %v182
    %v537 = vunpack.c.l.b16 %v183
    %v538 = vunpack.c.h.b16 %v183
    %v539 = vunpack.c.l.b16 %v184
    %v540 = vunpack.c.l.b16 %v185
    %v541 = vunpack.c.h.b16 %v185
    %v542 = vunpack.c.l.b16 %v186
    %v543 = vunpack.c.l.b16 %v187
    %v544 = vunpack.c.h.b16 %v187
    %v545 = vunpack.c.l.b16 %v188
    %v546 = vunpack.c.l.b16 %v189
    %v547 = vunpack.c.h.b16 %v189
    %v548 = vunpack.c.l.b16 %v190
    %v549 = vunpack.c.l.b16 %v191
    %v550 = vunpack.c.h.b16 %v191
    %v551 = vunpack.c.l.b16 %v192
    %v552 = vunpack.c.l.b16 %v193
    %v553 = vunpack.c.h.b16 %v193
    %v554 = vunpack.c.l.b16 %v194
    %v555 = vunpack.c.l.b16 %v195
    %v556 = vunpack.c.h.b16 %v195
    %v557 = vunpack.c.l.b16 %v196
    %v558 = vunpack.c.l.b16 %v197
    %v559 = vunpack.c.h.b16 %v197
    %v560 = vunpack.c.l.b16 %v198
    %v561 = vunpack.c.l.b16 %v199
    %v562 = vunpack.c.h.b16 %v199
    %v563 = vunpack.c.l.b16 %v200
    %v564 = vunpack.c.l.b16 %v201
    %v565 = vunpack.c.h.b16 %v201
    %v566 = vunpack.c.l.b16 %v202
    %v567 = vunpack.c.l.b16 %v203
    %v568 = vunpack.c.h.b16 %v203
    %v569 = vunpack.c.l.b16 %v204
    %v570 = vunpack.c.l.b16 %v205
    %v571 = vunpack.c.h.b16 %v205
    %v572 = vunpack.c.l.b16 %v206
    %v573 = vunpack.c.l.b16 %v207
    %v574 = vunpack.c.h.b16 %v207
    %v575 = vunpack.c.l.b16 %v208
    %v576 = vunpack.c.l.b16 %v209
    %v577 = vunpack.c.h.b16 %v209
    %v578 = vunpack.c.l.b16 %v210
    %v579 = vpack.c.b16 %v534, %v531
    %v580 = vpack.c.b16 %v535, %v532
    %v581 = vpack.c.b16 %v536, %v533
    %v582 = vpack.c.b16 %v540, %v537
    %v583 = vpack.c.b16 %v541, %v538
    %v584 = vpack.c.b16 %v542, %v539
    %v585 = vpack.c.b16 %v546, %v543
    %v586 = vpack.c.b16 %v547, %v544
    %v587 = vpack.c.b16 %v548, %v545
    %v588 = vpack.c.b16 %v552, %v549
    %v589 = vpack.c.b16 %v553, %v550
    %v590 = vpack.c.b16 %v554, %v551
    %v591 = vpack.c.b16 %v558, %v555
    %v592 = vpack.c.b16 %v559, %v556
    %v593 = vpack.c.b16 %v560, %v557
    %v594 = vpack.c.b16 %v564, %v561
    %v595 = vpack.c.b16 %v565, %v562
    %v596 = vpack.c.b16 %v566, %v563
    %v597 = vpack.c.b16 %v570, %v567
    %v598 = vpack.c.b16 %v571, %v568
    %v599 = vpack.c.b16 %v572, %v569
    %v600 = vpack.c.b16 %v576, %v573
    %v601 = vpack.c.b16 %v577, %v574
    %v602 = vpack.c.b16 %v578, %v575
    %627 = vmatpush.bf16.msra.mxu0 %v600
    %628 = vmatpush.bf16.msra.mxu0 %v597
    %629 = vmatpush.bf16.msra.mxu0 %v594
    %630 = vmatpush.bf16.msra.mxu0 %v591
    %631 = vmatpush.bf16.msra.mxu0 %v588
    %632 = vmatpush.bf16.msra.mxu0 %v585
    %633 = vmatpush.bf16.msra.mxu0 %v582
    %634 = vmatpush.bf16.msra.mxu0 %v579
    %635 = vmatmul.bf16.gmra.mxu0 %v498
    %v636 = vpop.f32.mrf.mxu0
    %v637 = vadd.f32 0.0, %v636
    %v638 = vpop.f32.mrf.mxu0
    %639 = vdwg.mxu0
    %640 = vmatpush.bf16.msra.mxu0 %v601
    %641 = vmatpush.bf16.msra.mxu0 %v598
    %642 = vmatpush.bf16.msra.mxu0 %v595
    %643 = vmatpush.bf16.msra.mxu0 %v592
    %644 = vmatpush.bf16.msra.mxu0 %v589
    %645 = vmatpush.bf16.msra.mxu0 %v586
    %646 = vmatpush.bf16.msra.mxu0 %v583
    %647 = vmatpush.bf16.msra.mxu0 %v580
    %648 = vmatmul.bf16.gmra.mxu0 %v498
    %v649 = vpop.f32.mrf.mxu0
    %v650 = vadd.f32 0.0, %v649
    %v651 = vpop.f32.mrf.mxu0
    %652 = vdwg.mxu0
    %653 = vmatpush.bf16.msra.mxu0 %v602
    %654 = vmatpush.bf16.msra.mxu0 %v599
    %655 = vmatpush.bf16.msra.mxu0 %v596
    %656 = vmatpush.bf16.msra.mxu0 %v593
    %657 = vmatpush.bf16.msra.mxu0 %v590
    %658 = vmatpush.bf16.msra.mxu0 %v587
    %659 = vmatpush.bf16.msra.mxu0 %v584
    %660 = vmatpush.bf16.msra.mxu0 %v581
    %661 = vmatmul.bf16.gmra.mxu0 %v498
    %v662 = vpop.f32.mrf.mxu0
    %v663 = vadd.f32 0.0, %v662
    %v664 = vpop.f32.mrf.mxu0
    %665 = vdwg.mxu0
    %v667 = vrot.slane %v637, 1
    %v668 = vrot.slane %v637, 2
    %v671 = vadd.f32 %v141, %v667
    %v672 = vadd.f32 %v144, %v668
    %v673 = vxor.u32 %v671, 2147483648
    %v674 = vxor.u32 %v672, 2147483648
    %v675 = vmul.f32 %v673, 1.442695
    %v676 = vpow.pop %v675
    %v677 = vmul.f32 %v674, 1.442695
    %v678 = vpow.pop %v677
    %v679 = vadd.f32 %v676, 1.0
    %v680 = vadd.f32 %v678, 1.0
    %v681 = vrcp.pop %v679
    %v682 = vmul.f32 %v679, %v681
    %v683 = vsub.f32 1.0, %v682
    %v684 = vmul.f32 %v681, %v683
    %v685 = vadd.f32 %v681, %v684
    %vm686 = vweird.f32 %v679
    %vm687 = vweird.f32 %v681
    %vm688 = vmor %vm686, %vm687
    %v689 = vsel %vm688, %v681, %v685
    %v690 = vand.u32 2147483647, %v679
    %vm691 = vcmp.eq.f32.partialorder %v690, 8.507059e+37
    %v692 = vand.u32 %v679, 2147483648
    %v693 = vor.u32 1.1754944e-38, %v692
    %v694 = vsel %vm691, %v693, %v689
    %v695 = vmul.f32 1.0, %v694
    %v696 = vrcp.pop %v680
    %v697 = vmul.f32 %v680, %v696
    %v698 = vsub.f32 1.0, %v697
    %v699 = vmul.f32 %v696, %v698
    %v700 = vadd.f32 %v696, %v699
    %vm701 = vweird.f32 %v680
    %vm702 = vweird.f32 %v696
    %vm703 = vmor %vm701, %vm702
    %v704 = vsel %vm703, %v696, %v700
    %v705 = vand.u32 2147483647, %v680
    %vm706 = vcmp.eq.f32.partialorder %v705, 8.507059e+37
    %v707 = vand.u32 %v680, 2147483648
    %v708 = vor.u32 1.1754944e-38, %v707
    %v709 = vsel %vm706, %v708, %v704
    %v710 = vmul.f32 1.0, %v709
    %v712 = vrot.slane %v650, 1
    %v713 = vrot.slane %v650, 2
    %v716 = vadd.f32 %v142, %v712
    %v717 = vadd.f32 %v145, %v713
    %v718 = vxor.u32 %v716, 2147483648
    %v719 = vxor.u32 %v717, 2147483648
    %v720 = vmul.f32 %v718, 1.442695
    %v721 = vpow.pop %v720
    %v722 = vmul.f32 %v719, 1.442695
    %v723 = vpow.pop %v722
    %v724 = vadd.f32 %v721, 1.0
    %v725 = vadd.f32 %v723, 1.0
    %v726 = vrcp.pop %v724
    %v727 = vmul.f32 %v724, %v726
    %v728 = vsub.f32 1.0, %v727
    %v729 = vmul.f32 %v726, %v728
    %v730 = vadd.f32 %v726, %v729
    %vm731 = vweird.f32 %v724
    %vm732 = vweird.f32 %v726
    %vm733 = vmor %vm731, %vm732
    %v734 = vsel %vm733, %v726, %v730
    %v735 = vand.u32 2147483647, %v724
    %vm736 = vcmp.eq.f32.partialorder %v735, 8.507059e+37
    %v737 = vand.u32 %v724, 2147483648
    %v738 = vor.u32 1.1754944e-38, %v737
    %v739 = vsel %vm736, %v738, %v734
    %v740 = vmul.f32 1.0, %v739
    %v741 = vrcp.pop %v725
    %v742 = vmul.f32 %v725, %v741
    %v743 = vsub.f32 1.0, %v742
    %v744 = vmul.f32 %v741, %v743
    %v745 = vadd.f32 %v741, %v744
    %vm746 = vweird.f32 %v725
    %vm747 = vweird.f32 %v741
    %vm748 = vmor %vm746, %vm747
    %v749 = vsel %vm748, %v741, %v745
    %v750 = vand.u32 2147483647, %v725
    %vm751 = vcmp.eq.f32.partialorder %v750, 8.507059e+37
    %v752 = vand.u32 %v725, 2147483648
    %v753 = vor.u32 1.1754944e-38, %v752
    %v754 = vsel %vm751, %v753, %v749
    %v755 = vmul.f32 1.0, %v754
    %v757 = vperm.slane %v213, 0
    %v759 = vadd.f32 %v663, %v757
    %v761 = vrot.slane %v759, 1
    %v762 = vrot.slane %v759, 2
    %v765 = vmul.f32 %v695, %v761
    %v766 = vmul.f32 %v710, %v762
    %v767 = vadd.f32 %v143, %v765
    %v768 = vadd.f32 %v146, %v766
    %v769 = vtanh.pop %v767
    %v770 = vtanh.pop %v768
    %v771 = vsub.f32 1.0, %v740
    %v772 = vsub.f32 1.0, %v755
    %v773 = vmul.f32 %v771, %v769
    %v774 = vmul.f32 %v772, %v770
    %v776 = vrot.slane %v497, 1
    %v777 = vrot.slane %v497, 2
    %v780 = vmul.f32 %v740, %v776
    %v781 = vmul.f32 %v755, %v777
    %v782 = vadd.f32 %v773, %v780
    %v783 = vadd.f32 %v774, %v781
    %v786 = vrot.slane %v496, 7
    %vm787 = vcmask 1041409
    %v788 = vsel %vm787, %v786, %v495
    %790 = vst [vmem:[#allocation2] sm:$0x3] %v788
    %v793 = vrot.slane %v783, 7
    %796 = vst [vmem:[#allocation3 - $0x7] sm:$0x80] %v782
    %797 = vst [vmem:[#allocation3 + $0x1] sm:$0x1] %v793
    %798 = vst [vmem:[%s5] sm:$0x1] %v495
    %799 = vst [vmem:[%s5 + $0x8] sm:$0x1] %v496
    %800 = vst [vmem:[%s127] sm:$0x80] %v782
    %801 = vst [vmem:[%s127 + $0x8] sm:$0x80] %v783
    %v802 = vld [vmem:[#allocation2] sm:$0x3]
    %v803 = vpack.c.bf16 %v802, %v802
    %804 = vmatpush.bf16.msra.mxu0 %v317
    %805 = vmatpush.bf16.msra.mxu0 %v314
    %806 = vmatpush.bf16.msra.mxu0 %v311
    %807 = vmatpush.bf16.msra.mxu0 %v308
    %808 = vmatpush.bf16.msra.mxu0 %v305
    %809 = vmatpush.bf16.msra.mxu0 %v302
    %810 = vmatpush.bf16.msra.mxu0 %v299
    %811 = vmatpush.bf16.msra.mxu0 %v296
    %812 = vmatmul.bf16.gmra.mxu0 %v803
    %v813 = vpop.f32.mrf.mxu0
    %v814 = vadd.f32 0.0, %v813
    %v815 = vpop.f32.mrf.mxu0
    %816 = vdwg.mxu0
    %817 = vmatpush.bf16.msra.mxu0 %v318
    %818 = vmatpush.bf16.msra.mxu0 %v315
    %819 = vmatpush.bf16.msra.mxu0 %v312
    %820 = vmatpush.bf16.msra.mxu0 %v309
    %821 = vmatpush.bf16.msra.mxu0 %v306
    %822 = vmatpush.bf16.msra.mxu0 %v303
    %823 = vmatpush.bf16.msra.mxu0 %v300
    %824 = vmatpush.bf16.msra.mxu0 %v297
    %825 = vmatmul.bf16.gmra.mxu0 %v803
    %v826 = vpop.f32.mrf.mxu0
    %v827 = vadd.f32 0.0, %v826
    %v828 = vpop.f32.mrf.mxu0
    %829 = vdwg.mxu0
    %830 = vmatpush.bf16.msra.mxu0 %v319
    %831 = vmatpush.bf16.msra.mxu0 %v316
    %832 = vmatpush.bf16.msra.mxu0 %v313
    %833 = vmatpush.bf16.msra.mxu0 %v310
    %834 = vmatpush.bf16.msra.mxu0 %v307
    %835 = vmatpush.bf16.msra.mxu0 %v304
    %836 = vmatpush.bf16.msra.mxu0 %v301
    %837 = vmatpush.bf16.msra.mxu0 %v298
    %838 = vmatmul.bf16.gmra.mxu0 %v803
    %v839 = vpop.f32.mrf.mxu0
    %v840 = vadd.f32 0.0, %v839
    %v841 = vpop.f32.mrf.mxu0
    %842 = vdwg.mxu0
    %v844 = vrot.slane %v814, 7
    %v847 = vadd.f32 %v135, %v844
    %v848 = vadd.f32 %v138, %v814
    %v849 = vxor.u32 %v847, 2147483648
    %v850 = vxor.u32 %v848, 2147483648
    %v851 = vmul.f32 %v849, 1.442695
    %v852 = vpow.pop %v851
    %v853 = vmul.f32 %v850, 1.442695
    %v854 = vpow.pop %v853
    %v855 = vadd.f32 %v852, 1.0
    %v856 = vadd.f32 %v854, 1.0
    %v857 = vrcp.pop %v855
    %v858 = vmul.f32 %v855, %v857
    %v859 = vsub.f32 1.0, %v858
    %v860 = vmul.f32 %v857, %v859
    %v861 = vadd.f32 %v857, %v860
    %vm862 = vweird.f32 %v855
    %vm863 = vweird.f32 %v857
    %vm864 = vmor %vm862, %vm863
    %v865 = vsel %vm864, %v857, %v861
    %v866 = vand.u32 2147483647, %v855
    %vm867 = vcmp.eq.f32.partialorder %v866, 8.507059e+37
    %v868 = vand.u32 %v855, 2147483648
    %v869 = vor.u32 1.1754944e-38, %v868
    %v870 = vsel %vm867, %v869, %v865
    %v871 = vmul.f32 1.0, %v870
    %v872 = vrcp.pop %v856
    %v873 = vmul.f32 %v856, %v872
    %v874 = vsub.f32 1.0, %v873
    %v875 = vmul.f32 %v872, %v874
    %v876 = vadd.f32 %v872, %v875
    %vm877 = vweird.f32 %v856
    %vm878 = vweird.f32 %v872
    %vm879 = vmor %vm877, %vm878
    %v880 = vsel %vm879, %v872, %v876
    %v881 = vand.u32 2147483647, %v856
    %vm882 = vcmp.eq.f32.partialorder %v881, 8.507059e+37
    %v883 = vand.u32 %v856, 2147483648
    %v884 = vor.u32 1.1754944e-38, %v883
    %v885 = vsel %vm882, %v884, %v880
    %v886 = vmul.f32 1.0, %v885
    %v888 = vrot.slane %v827, 7
    %v891 = vadd.f32 %v136, %v888
    %v892 = vadd.f32 %v139, %v827
    %v893 = vxor.u32 %v891, 2147483648
    %v894 = vxor.u32 %v892, 2147483648
    %v895 = vmul.f32 %v893, 1.442695
    %v896 = vpow.pop %v895
    %v897 = vmul.f32 %v894, 1.442695
    %v898 = vpow.pop %v897
    %v899 = vadd.f32 %v896, 1.0
    %v900 = vadd.f32 %v898, 1.0
    %v901 = vrcp.pop %v899
    %v902 = vmul.f32 %v899, %v901
    %v903 = vsub.f32 1.0, %v902
    %v904 = vmul.f32 %v901, %v903
    %v905 = vadd.f32 %v901, %v904
    %vm906 = vweird.f32 %v899
    %vm907 = vweird.f32 %v901
    %vm908 = vmor %vm906, %vm907
    %v909 = vsel %vm908, %v901, %v905
    %v910 = vand.u32 2147483647, %v899
    %vm911 = vcmp.eq.f32.partialorder %v910, 8.507059e+37
    %v912 = vand.u32 %v899, 2147483648
    %v913 = vor.u32 1.1754944e-38, %v912
    %v914 = vsel %vm911, %v913, %v909
    %v915 = vmul.f32 1.0, %v914
    %v916 = vrcp.pop %v900
    %v917 = vmul.f32 %v900, %v916
    %v918 = vsub.f32 1.0, %v917
    %v919 = vmul.f32 %v916, %v918
    %v920 = vadd.f32 %v916, %v919
    %vm921 = vweird.f32 %v900
    %vm922 = vweird.f32 %v916
    %vm923 = vmor %vm921, %vm922
    %v924 = vsel %vm923, %v916, %v920
    %v925 = vand.u32 2147483647, %v900
    %vm926 = vcmp.eq.f32.partialorder %v925, 8.507059e+37
    %v927 = vand.u32 %v900, 2147483648
    %v928 = vor.u32 1.1754944e-38, %v927
    %v929 = vsel %vm926, %v928, %v924
    %v930 = vmul.f32 1.0, %v929
    %v931 = vadd.f32 %v840, %v472
    %v933 = vrot.slane %v931, 7
    %v936 = vmul.f32 %v871, %v933
    %v937 = vmul.f32 %v886, %v931
    %v938 = vadd.f32 %v137, %v936
    %v939 = vadd.f32 %v140, %v937
    %v940 = vtanh.pop %v938
    %v941 = vtanh.pop %v939
    %v942 = vsub.f32 1.0, %v915
    %v943 = vsub.f32 1.0, %v930
    %v944 = vmul.f32 %v942, %v940
    %v945 = vmul.f32 %v943, %v941
    %v947 = vrot.slane %v802, 7
    %v950 = vmul.f32 %v915, %v947
    %v951 = vmul.f32 %v930, %v802
    %v952 = vadd.f32 %v944, %v950
    %v953 = vadd.f32 %v945, %v951
    %v954 = vld [vmem:[#allocation3] sm:$0x3]
    %v955 = vpack.c.bf16 %v954, %v954
    %956 = vmatpush.bf16.msra.mxu0 %v600
    %957 = vmatpush.bf16.msra.mxu0 %v597
    %958 = vmatpush.bf16.msra.mxu0 %v594
    %959 = vmatpush.bf16.msra.mxu0 %v591
    %960 = vmatpush.bf16.msra.mxu0 %v588
    %961 = vmatpush.bf16.msra.mxu0 %v585
    %962 = vmatpush.bf16.msra.mxu0 %v582
    %963 = vmatpush.bf16.msra.mxu0 %v579
    %964 = vmatmul.bf16.gmra.mxu0 %v955
    %v965 = vpop.f32.mrf.mxu0
    %v966 = vadd.f32 0.0, %v965
    %v967 = vpop.f32.mrf.mxu0
    %968 = vdwg.mxu0
    %969 = vmatpush.bf16.msra.mxu0 %v601
    %970 = vmatpush.bf16.msra.mxu0 %v598
    %971 = vmatpush.bf16.msra.mxu0 %v595
    %972 = vmatpush.bf16.msra.mxu0 %v592
    %973 = vmatpush.bf16.msra.mxu0 %v589
    %974 = vmatpush.bf16.msra.mxu0 %v586
    %975 = vmatpush.bf16.msra.mxu0 %v583
    %976 = vmatpush.bf16.msra.mxu0 %v580
    %977 = vmatmul.bf16.gmra.mxu0 %v955
    %v978 = vpop.f32.mrf.mxu0
    %v979 = vadd.f32 0.0, %v978
    %v980 = vpop.f32.mrf.mxu0
    %981 = vdwg.mxu0
    %982 = vmatpush.bf16.msra.mxu0 %v602
    %983 = vmatpush.bf16.msra.mxu0 %v599
    %984 = vmatpush.bf16.msra.mxu0 %v596
    %985 = vmatpush.bf16.msra.mxu0 %v593
    %986 = vmatpush.bf16.msra.mxu0 %v590
    %987 = vmatpush.bf16.msra.mxu0 %v587
    %988 = vmatpush.bf16.msra.mxu0 %v584
    %989 = vmatpush.bf16.msra.mxu0 %v581
    %990 = vmatmul.bf16.gmra.mxu0 %v955
    %v991 = vpop.f32.mrf.mxu0
    %v992 = vadd.f32 0.0, %v991
    %v993 = vpop.f32.mrf.mxu0
    %994 = vdwg.mxu0
    %v996 = vrot.slane %v966, 2
    %v997 = vrot.slane %v966, 3
    %v1000 = vadd.f32 %v141, %v996
    %v1001 = vadd.f32 %v144, %v997
    %v1002 = vxor.u32 %v1000, 2147483648
    %v1003 = vxor.u32 %v1001, 2147483648
    %v1004 = vmul.f32 %v1002, 1.442695
    %v1005 = vpow.pop %v1004
    %v1006 = vmul.f32 %v1003, 1.442695
    %v1007 = vpow.pop %v1006
    %v1008 = vadd.f32 %v1005, 1.0
    %v1009 = vadd.f32 %v1007, 1.0
    %v1010 = vrcp.pop %v1008
    %v1011 = vmul.f32 %v1008, %v1010
    %v1012 = vsub.f32 1.0, %v1011
    %v1013 = vmul.f32 %v1010, %v1012
    %v1014 = vadd.f32 %v1010, %v1013
    %vm1015 = vweird.f32 %v1008
    %vm1016 = vweird.f32 %v1010
    %vm1017 = vmor %vm1015, %vm1016
    %v1018 = vsel %vm1017, %v1010, %v1014
    %v1019 = vand.u32 2147483647, %v1008
    %vm1020 = vcmp.eq.f32.partialorder %v1019, 8.507059e+37
    %v1021 = vand.u32 %v1008, 2147483648
    %v1022 = vor.u32 1.1754944e-38, %v1021
    %v1023 = vsel %vm1020, %v1022, %v1018
    %v1024 = vmul.f32 1.0, %v1023
    %v1025 = vrcp.pop %v1009
    %v1026 = vmul.f32 %v1009, %v1025
    %v1027 = vsub.f32 1.0, %v1026
    %v1028 = vmul.f32 %v1025, %v1027
    %v1029 = vadd.f32 %v1025, %v1028
    %vm1030 = vweird.f32 %v1009
    %vm1031 = vweird.f32 %v1025
    %vm1032 = vmor %vm1030, %vm1031
    %v1033 = vsel %vm1032, %v1025, %v1029
    %v1034 = vand.u32 2147483647, %v1009
    %vm1035 = vcmp.eq.f32.partialorder %v1034, 8.507059e+37
    %v1036 = vand.u32 %v1009, 2147483648
    %v1037 = vor.u32 1.1754944e-38, %v1036
    %v1038 = vsel %vm1035, %v1037, %v1033
    %v1039 = vmul.f32 1.0, %v1038
    %v1041 = vrot.slane %v979, 2
    %v1042 = vrot.slane %v979, 3
    %v1045 = vadd.f32 %v142, %v1041
    %v1046 = vadd.f32 %v145, %v1042
    %v1047 = vxor.u32 %v1045, 2147483648
    %v1048 = vxor.u32 %v1046, 2147483648
    %v1049 = vmul.f32 %v1047, 1.442695
    %v1050 = vpow.pop %v1049
    %v1051 = vmul.f32 %v1048, 1.442695
    %v1052 = vpow.pop %v1051
    %v1053 = vadd.f32 %v1050, 1.0
    %v1054 = vadd.f32 %v1052, 1.0
    %v1055 = vrcp.pop %v1053
    %v1056 = vmul.f32 %v1053, %v1055
    %v1057 = vsub.f32 1.0, %v1056
    %v1058 = vmul.f32 %v1055, %v1057
    %v1059 = vadd.f32 %v1055, %v1058
    %vm1060 = vweird.f32 %v1053
    %vm1061 = vweird.f32 %v1055
    %vm1062 = vmor %vm1060, %vm1061
    %v1063 = vsel %vm1062, %v1055, %v1059
    %v1064 = vand.u32 2147483647, %v1053
    %vm1065 = vcmp.eq.f32.partialorder %v1064, 8.507059e+37
    %v1066 = vand.u32 %v1053, 2147483648
    %v1067 = vor.u32 1.1754944e-38, %v1066
    %v1068 = vsel %vm1065, %v1067, %v1063
    %v1069 = vmul.f32 1.0, %v1068
    %v1070 = vrcp.pop %v1054
    %v1071 = vmul.f32 %v1054, %v1070
    %v1072 = vsub.f32 1.0, %v1071
    %v1073 = vmul.f32 %v1070, %v1072
    %v1074 = vadd.f32 %v1070, %v1073
    %vm1075 = vweird.f32 %v1054
    %vm1076 = vweird.f32 %v1070
    %vm1077 = vmor %vm1075, %vm1076
    %v1078 = vsel %vm1077, %v1070, %v1074
    %v1079 = vand.u32 2147483647, %v1054
    %vm1080 = vcmp.eq.f32.partialorder %v1079, 8.507059e+37
    %v1081 = vand.u32 %v1054, 2147483648
    %v1082 = vor.u32 1.1754944e-38, %v1081
    %v1083 = vsel %vm1080, %v1082, %v1078
    %v1084 = vmul.f32 1.0, %v1083
    %v1085 = vadd.f32 %v992, %v757
    %v1087 = vrot.slane %v1085, 2
    %v1088 = vrot.slane %v1085, 3
    %v1091 = vmul.f32 %v1024, %v1087
    %v1092 = vmul.f32 %v1039, %v1088
    %v1093 = vadd.f32 %v143, %v1091
    %v1094 = vadd.f32 %v146, %v1092
    %v1095 = vtanh.pop %v1093
    %v1096 = vtanh.pop %v1094
    %v1097 = vsub.f32 1.0, %v1069
    %v1098 = vsub.f32 1.0, %v1084
    %v1099 = vmul.f32 %v1097, %v1095
    %v1100 = vmul.f32 %v1098, %v1096
    %v1102 = vrot.slane %v954, 2
    %v1103 = vrot.slane %v954, 3
    %v1106 = vmul.f32 %v1069, %v1102
    %v1107 = vmul.f32 %v1084, %v1103
    %v1108 = vadd.f32 %v1099, %v1106
    %v1109 = vadd.f32 %v1100, %v1107
    %v1112 = vrot.slane %v953, 7
    %vm1113 = vcmask 1042434
    %v1114 = vsel %vm1113, %v1112, %v952
    %1116 = vst [vmem:[#allocation2 - $0x1] sm:$0x6] %v1114
    %v1119 = vrot.slane %v1109, 7
    %vm1120 = vcmask 1047559
    %v1121 = vsel %vm1120, %v1119, %v1108
    %1123 = vst [vmem:[#allocation3 - $0x6] sm:$0xc0] %v1121
    %1124 = vst [vmem:[%s5] sm:$0x2] %v952
    %1125 = vst [vmem:[%s5 + $0x8] sm:$0x2] %v953
    %1126 = vst [vmem:[%s127] sm:$0x40] %v1108
    %1127 = vst [vmem:[%s127 + $0x8] sm:$0x40] %v1109
    %v1128 = vld [vmem:[#allocation2] sm:$0x3]
    %v1129 = vpack.c.bf16 %v1128, %v1128
    %1130 = vmatpush.bf16.msra.mxu0 %v317
    %1131 = vmatpush.bf16.msra.mxu0 %v314
    %1132 = vmatpush.bf16.msra.mxu0 %v311
    %1133 = vmatpush.bf16.msra.mxu0 %v308
    %1134 = vmatpush.bf16.msra.mxu0 %v305
    %1135 = vmatpush.bf16.msra.mxu0 %v302
    %1136 = vmatpush.bf16.msra.mxu0 %v299
    %1137 = vmatpush.bf16.msra.mxu0 %v296
    %1138 = vmatmul.bf16.gmra.mxu0 %v1129
    %v1139 = vpop.f32.mrf.mxu0
    %v1140 = vadd.f32 0.0, %v1139
    %v1141 = vpop.f32.mrf.mxu0
    %1142 = vdwg.mxu0
    %1143 = vmatpush.bf16.msra.mxu0 %v318
    %1144 = vmatpush.bf16.msra.mxu0 %v315
    %1145 = vmatpush.bf16.msra.mxu0 %v312
    %1146 = vmatpush.bf16.msra.mxu0 %v309
    %1147 = vmatpush.bf16.msra.mxu0 %v306
    %1148 = vmatpush.bf16.msra.mxu0 %v303
    %1149 = vmatpush.bf16.msra.mxu0 %v300
    %1150 = vmatpush.bf16.msra.mxu0 %v297
    %1151 = vmatmul.bf16.gmra.mxu0 %v1129
    %v1152 = vpop.f32.mrf.mxu0
    %v1153 = vadd.f32 0.0, %v1152
    %v1154 = vpop.f32.mrf.mxu0
    %1155 = vdwg.mxu0
    %1156 = vmatpush.bf16.msra.mxu0 %v319
    %1157 = vmatpush.bf16.msra.mxu0 %v316
    %1158 = vmatpush.bf16.msra.mxu0 %v313
    %1159 = vmatpush.bf16.msra.mxu0 %v310
    %1160 = vmatpush.bf16.msra.mxu0 %v307
    %1161 = vmatpush.bf16.msra.mxu0 %v304
    %1162 = vmatpush.bf16.msra.mxu0 %v301
    %1163 = vmatpush.bf16.msra.mxu0 %v298
    %1164 = vmatmul.bf16.gmra.mxu0 %v1129
    %v1165 = vpop.f32.mrf.mxu0
    %v1166 = vadd.f32 0.0, %v1165
    %v1167 = vpop.f32.mrf.mxu0
    %1168 = vdwg.mxu0
    %v1170 = vrot.slane %v1140, 6
    %v1171 = vrot.slane %v1140, 7
    %v1174 = vadd.f32 %v135, %v1170
    %v1175 = vadd.f32 %v138, %v1171
    %v1176 = vxor.u32 %v1174, 2147483648
    %v1177 = vxor.u32 %v1175, 2147483648
    %v1178 = vmul.f32 %v1176, 1.442695
    %v1179 = vpow.pop %v1178
    %v1180 = vmul.f32 %v1177, 1.442695
    %v1181 = vpow.pop %v1180
    %v1182 = vadd.f32 %v1179, 1.0
    %v1183 = vadd.f32 %v1181, 1.0
    %v1184 = vrcp.pop %v1182
    %v1185 = vmul.f32 %v1182, %v1184
    %v1186 = vsub.f32 1.0, %v1185
    %v1187 = vmul.f32 %v1184, %v1186
    %v1188 = vadd.f32 %v1184, %v1187
    %vm1189 = vweird.f32 %v1182
    %vm1190 = vweird.f32 %v1184
    %vm1191 = vmor %vm1189, %vm1190
    %v1192 = vsel %vm1191, %v1184, %v1188
    %v1193 = vand.u32 2147483647, %v1182
    %vm1194 = vcmp.eq.f32.partialorder %v1193, 8.507059e+37
    %v1195 = vand.u32 %v1182, 2147483648
    %v1196 = vor.u32 1.1754944e-38, %v1195
    %v1197 = vsel %vm1194, %v1196, %v1192
    %v1198 = vmul.f32 1.0, %v1197
    %v1199 = vrcp.pop %v1183
    %v1200 = vmul.f32 %v1183, %v1199
    %v1201 = vsub.f32 1.0, %v1200
    %v1202 = vmul.f32 %v1199, %v1201
    %v1203 = vadd.f32 %v1199, %v1202
    %vm1204 = vweird.f32 %v1183
    %vm1205 = vweird.f32 %v1199
    %vm1206 = vmor %vm1204, %vm1205
    %v1207 = vsel %vm1206, %v1199, %v1203
    %v1208 = vand.u32 2147483647, %v1183
    %vm1209 = vcmp.eq.f32.partialorder %v1208, 8.507059e+37
    %v1210 = vand.u32 %v1183, 2147483648
    %v1211 = vor.u32 1.1754944e-38, %v1210
    %v1212 = vsel %vm1209, %v1211, %v1207
    %v1213 = vmul.f32 1.0, %v1212
    %v1215 = vrot.slane %v1153, 6
    %v1216 = vrot.slane %v1153, 7
    %v1219 = vadd.f32 %v136, %v1215
    %v1220 = vadd.f32 %v139, %v1216
    %v1221 = vxor.u32 %v1219, 2147483648
    %v1222 = vxor.u32 %v1220, 2147483648
    %v1223 = vmul.f32 %v1221, 1.442695
    %v1224 = vpow.pop %v1223
    %v1225 = vmul.f32 %v1222, 1.442695
    %v1226 = vpow.pop %v1225
    %v1227 = vadd.f32 %v1224, 1.0
    %v1228 = vadd.f32 %v1226, 1.0
    %v1229 = vrcp.pop %v1227
    %v1230 = vmul.f32 %v1227, %v1229
    %v1231 = vsub.f32 1.0, %v1230
    %v1232 = vmul.f32 %v1229, %v1231
    %v1233 = vadd.f32 %v1229, %v1232
    %vm1234 = vweird.f32 %v1227
    %vm1235 = vweird.f32 %v1229
    %vm1236 = vmor %vm1234, %vm1235
    %v1237 = vsel %vm1236, %v1229, %v1233
    %v1238 = vand.u32 2147483647, %v1227
    %vm1239 = vcmp.eq.f32.partialorder %v1238, 8.507059e+37
    %v1240 = vand.u32 %v1227, 2147483648
    %v1241 = vor.u32 1.1754944e-38, %v1240
    %v1242 = vsel %vm1239, %v1241, %v1237
    %v1243 = vmul.f32 1.0, %v1242
    %v1244 = vrcp.pop %v1228
    %v1245 = vmul.f32 %v1228, %v1244
    %v1246 = vsub.f32 1.0, %v1245
    %v1247 = vmul.f32 %v1244, %v1246
    %v1248 = vadd.f32 %v1244, %v1247
    %vm1249 = vweird.f32 %v1228
    %vm1250 = vweird.f32 %v1244
    %vm1251 = vmor %vm1249, %vm1250
    %v1252 = vsel %vm1251, %v1244, %v1248
    %v1253 = vand.u32 2147483647, %v1228
    %vm1254 = vcmp.eq.f32.partialorder %v1253, 8.507059e+37
    %v1255 = vand.u32 %v1228, 2147483648
    %v1256 = vor.u32 1.1754944e-38, %v1255
    %v1257 = vsel %vm1254, %v1256, %v1252
    %v1258 = vmul.f32 1.0, %v1257
    %v1259 = vadd.f32 %v1166, %v472
    %v1261 = vrot.slane %v1259, 6
    %v1262 = vrot.slane %v1259, 7
    %v1265 = vmul.f32 %v1198, %v1261
    %v1266 = vmul.f32 %v1213, %v1262
    %v1267 = vadd.f32 %v137, %v1265
    %v1268 = vadd.f32 %v140, %v1266
    %v1269 = vtanh.pop %v1267
    %v1270 = vtanh.pop %v1268
    %v1271 = vsub.f32 1.0, %v1243
    %v1272 = vsub.f32 1.0, %v1258
    %v1273 = vmul.f32 %v1271, %v1269
    %v1274 = vmul.f32 %v1272, %v1270
    %v1276 = vrot.slane %v1128, 6
    %v1277 = vrot.slane %v1128, 7
    %v1280 = vmul.f32 %v1243, %v1276
    %v1281 = vmul.f32 %v1258, %v1277
    %v1282 = vadd.f32 %v1273, %v1280
    %v1283 = vadd.f32 %v1274, %v1281
    %v1284 = vld [vmem:[#allocation3] sm:$0x3]
    %v1285 = vpack.c.bf16 %v1284, %v1284
    %1286 = vmatpush.bf16.msra.mxu0 %v600
    %1287 = vmatpush.bf16.msra.mxu0 %v597
    %1288 = vmatpush.bf16.msra.mxu0 %v594
    %1289 = vmatpush.bf16.msra.mxu0 %v591
    %1290 = vmatpush.bf16.msra.mxu0 %v588
    %1291 = vmatpush.bf16.msra.mxu0 %v585
    %1292 = vmatpush.bf16.msra.mxu0 %v582
    %1293 = vmatpush.bf16.msra.mxu0 %v579
    %1294 = vmatmul.bf16.gmra.mxu0 %v1285
    %v1295 = vpop.f32.mrf.mxu0
    %v1296 = vadd.f32 0.0, %v1295
    %v1297 = vpop.f32.mrf.mxu0
    %1298 = vdwg.mxu0
    %1299 = vmatpush.bf16.msra.mxu0 %v601
    %1300 = vmatpush.bf16.msra.mxu0 %v598
    %1301 = vmatpush.bf16.msra.mxu0 %v595
    %1302 = vmatpush.bf16.msra.mxu0 %v592
    %1303 = vmatpush.bf16.msra.mxu0 %v589
    %1304 = vmatpush.bf16.msra.mxu0 %v586
    %1305 = vmatpush.bf16.msra.mxu0 %v583
    %1306 = vmatpush.bf16.msra.mxu0 %v580
    %1307 = vmatmul.bf16.gmra.mxu0 %v1285
    %v1308 = vpop.f32.mrf.mxu0
    %v1309 = vadd.f32 0.0, %v1308
    %v1310 = vpop.f32.mrf.mxu0
    %1311 = vdwg.mxu0
    %1312 = vmatpush.bf16.msra.mxu0 %v602
    %1313 = vmatpush.bf16.msra.mxu0 %v599
    %1314 = vmatpush.bf16.msra.mxu0 %v596
    %1315 = vmatpush.bf16.msra.mxu0 %v593
    %1316 = vmatpush.bf16.msra.mxu0 %v590
    %1317 = vmatpush.bf16.msra.mxu0 %v587
    %1318 = vmatpush.bf16.msra.mxu0 %v584
    %1319 = vmatpush.bf16.msra.mxu0 %v581
    %1320 = vmatmul.bf16.gmra.mxu0 %v1285
    %v1321 = vpop.f32.mrf.mxu0
    %v1322 = vadd.f32 0.0, %v1321
    %v1323 = vpop.f32.mrf.mxu0
    %1324 = vdwg.mxu0
    %v1326 = vrot.slane %v1296, 3
    %v1327 = vrot.slane %v1296, 4
    %v1330 = vadd.f32 %v141, %v1326
    %v1331 = vadd.f32 %v144, %v1327
    %v1332 = vxor.u32 %v1330, 2147483648
    %v1333 = vxor.u32 %v1331, 2147483648
    %v1334 = vmul.f32 %v1332, 1.442695
    %v1335 = vpow.pop %v1334
    %v1336 = vmul.f32 %v1333, 1.442695
    %v1337 = vpow.pop %v1336
    %v1338 = vadd.f32 %v1335, 1.0
    %v1339 = vadd.f32 %v1337, 1.0
    %v1340 = vrcp.pop %v1338
    %v1341 = vmul.f32 %v1338, %v1340
    %v1342 = vsub.f32 1.0, %v1341
    %v1343 = vmul.f32 %v1340, %v1342
    %v1344 = vadd.f32 %v1340, %v1343
    %vm1345 = vweird.f32 %v1338
    %vm1346 = vweird.f32 %v1340
    %vm1347 = vmor %vm1345, %vm1346
    %v1348 = vsel %vm1347, %v1340, %v1344
    %v1349 = vand.u32 2147483647, %v1338
    %vm1350 = vcmp.eq.f32.partialorder %v1349, 8.507059e+37
    %v1351 = vand.u32 %v1338, 2147483648
    %v1352 = vor.u32 1.1754944e-38, %v1351
    %v1353 = vsel %vm1350, %v1352, %v1348
    %v1354 = vmul.f32 1.0, %v1353
    %v1355 = vrcp.pop %v1339
    %v1356 = vmul.f32 %v1339, %v1355
    %v1357 = vsub.f32 1.0, %v1356
    %v1358 = vmul.f32 %v1355, %v1357
    %v1359 = vadd.f32 %v1355, %v1358
    %vm1360 = vweird.f32 %v1339
    %vm1361 = vweird.f32 %v1355
    %vm1362 = vmor %vm1360, %vm1361
    %v1363 = vsel %vm1362, %v1355, %v1359
    %v1364 = vand.u32 2147483647, %v1339
    %vm1365 = vcmp.eq.f32.partialorder %v1364, 8.507059e+37
    %v1366 = vand.u32 %v1339, 2147483648
    %v1367 = vor.u32 1.1754944e-38, %v1366
    %v1368 = vsel %vm1365, %v1367, %v1363
    %v1369 = vmul.f32 1.0, %v1368
    %v1371 = vrot.slane %v1309, 3
    %v1372 = vrot.slane %v1309, 4
    %v1375 = vadd.f32 %v142, %v1371
    %v1376 = vadd.f32 %v145, %v1372
    %v1377 = vxor.u32 %v1375, 2147483648
    %v1378 = vxor.u32 %v1376, 2147483648
    %v1379 = vmul.f32 %v1377, 1.442695
    %v1380 = vpow.pop %v1379
    %v1381 = vmul.f32 %v1378, 1.442695
    %v1382 = vpow.pop %v1381
    %v1383 = vadd.f32 %v1380, 1.0
    %v1384 = vadd.f32 %v1382, 1.0
    %v1385 = vrcp.pop %v1383
    %v1386 = vmul.f32 %v1383, %v1385
    %v1387 = vsub.f32 1.0, %v1386
    %v1388 = vmul.f32 %v1385, %v1387
    %v1389 = vadd.f32 %v1385, %v1388
    %vm1390 = vweird.f32 %v1383
    %vm1391 = vweird.f32 %v1385
    %vm1392 = vmor %vm1390, %vm1391
    %v1393 = vsel %vm1392, %v1385, %v1389
    %v1394 = vand.u32 2147483647, %v1383
    %vm1395 = vcmp.eq.f32.partialorder %v1394, 8.507059e+37
    %v1396 = vand.u32 %v1383, 2147483648
    %v1397 = vor.u32 1.1754944e-38, %v1396
    %v1398 = vsel %vm1395, %v1397, %v1393
    %v1399 = vmul.f32 1.0, %v1398
    %v1400 = vrcp.pop %v1384
    %v1401 = vmul.f32 %v1384, %v1400
    %v1402 = vsub.f32 1.0, %v1401
    %v1403 = vmul.f32 %v1400, %v1402
    %v1404 = vadd.f32 %v1400, %v1403
    %vm1405 = vweird.f32 %v1384
    %vm1406 = vweird.f32 %v1400
    %vm1407 = vmor %vm1405, %vm1406
    %v1408 = vsel %vm1407, %v1400, %v1404
    %v1409 = vand.u32 2147483647, %v1384
    %vm1410 = vcmp.eq.f32.partialorder %v1409, 8.507059e+37
    %v1411 = vand.u32 %v1384, 2147483648
    %v1412 = vor.u32 1.1754944e-38, %v1411
    %v1413 = vsel %vm1410, %v1412, %v1408
    %v1414 = vmul.f32 1.0, %v1413
    %v1415 = vadd.f32 %v1322, %v757
    %v1417 = vrot.slane %v1415, 3
    %v1418 = vrot.slane %v1415, 4
    %v1421 = vmul.f32 %v1354, %v1417
    %v1422 = vmul.f32 %v1369, %v1418
    %v1423 = vadd.f32 %v143, %v1421
    %v1424 = vadd.f32 %v146, %v1422
    %v1425 = vtanh.pop %v1423
    %v1426 = vtanh.pop %v1424
    %v1427 = vsub.f32 1.0, %v1399
    %v1428 = vsub.f32 1.0, %v1414
    %v1429 = vmul.f32 %v1427, %v1425
    %v1430 = vmul.f32 %v1428, %v1426
    %v1432 = vrot.slane %v1284, 3
    %v1433 = vrot.slane %v1284, 4
    %v1436 = vmul.f32 %v1399, %v1432
    %v1437 = vmul.f32 %v1414, %v1433
    %v1438 = vadd.f32 %v1429, %v1436
    %v1439 = vadd.f32 %v1430, %v1437
    %v1442 = vrot.slane %v1283, 7
    %vm1443 = vcmask 1043459
    %v1444 = vsel %vm1443, %v1442, %v1282
    %1446 = vst [vmem:[#allocation2 - $0x2] sm:$0xc] %v1444
    %v1449 = vrot.slane %v1439, 7
    %vm1450 = vcmask 1046534
    %v1451 = vsel %vm1450, %v1449, %v1438
    %1453 = vst [vmem:[#allocation3 - $0x5] sm:$0x60] %v1451
    %1454 = vst [vmem:[%s5] sm:$0x4] %v1282
    %1455 = vst [vmem:[%s5 + $0x8] sm:$0x4] %v1283
    %1456 = vst [vmem:[%s127] sm:$0x20] %v1438
    %1457 = vst [vmem:[%s127 + $0x8] sm:$0x20] %v1439
    %v1458 = vld [vmem:[#allocation2] sm:$0x3]
    %v1459 = vpack.c.bf16 %v1458, %v1458
    %1460 = vmatpush.bf16.msra.mxu0 %v317
    %1461 = vmatpush.bf16.msra.mxu0 %v314
    %1462 = vmatpush.bf16.msra.mxu0 %v311
    %1463 = vmatpush.bf16.msra.mxu0 %v308
    %1464 = vmatpush.bf16.msra.mxu0 %v305
    %1465 = vmatpush.bf16.msra.mxu0 %v302
    %1466 = vmatpush.bf16.msra.mxu0 %v299
    %1467 = vmatpush.bf16.msra.mxu0 %v296
    %1468 = vmatmul.bf16.gmra.mxu0 %v1459
    %v1469 = vpop.f32.mrf.mxu0
    %v1470 = vadd.f32 0.0, %v1469
    %v1471 = vpop.f32.mrf.mxu0
    %1472 = vdwg.mxu0
    %1473 = vmatpush.bf16.msra.mxu0 %v318
    %1474 = vmatpush.bf16.msra.mxu0 %v315
    %1475 = vmatpush.bf16.msra.mxu0 %v312
    %1476 = vmatpush.bf16.msra.mxu0 %v309
    %1477 = vmatpush.bf16.msra.mxu0 %v306
    %1478 = vmatpush.bf16.msra.mxu0 %v303
    %1479 = vmatpush.bf16.msra.mxu0 %v300
    %1480 = vmatpush.bf16.msra.mxu0 %v297
    %1481 = vmatmul.bf16.gmra.mxu0 %v1459
    %v1482 = vpop.f32.mrf.mxu0
    %v1483 = vadd.f32 0.0, %v1482
    %v1484 = vpop.f32.mrf.mxu0
    %1485 = vdwg.mxu0
    %1486 = vmatpush.bf16.msra.mxu0 %v319
    %1487 = vmatpush.bf16.msra.mxu0 %v316
    %1488 = vmatpush.bf16.msra.mxu0 %v313
    %1489 = vmatpush.bf16.msra.mxu0 %v310
    %1490 = vmatpush.bf16.msra.mxu0 %v307
    %1491 = vmatpush.bf16.msra.mxu0 %v304
    %1492 = vmatpush.bf16.msra.mxu0 %v301
    %1493 = vmatpush.bf16.msra.mxu0 %v298
    %1494 = vmatmul.bf16.gmra.mxu0 %v1459
    %v1495 = vpop.f32.mrf.mxu0
    %v1496 = vadd.f32 0.0, %v1495
    %v1497 = vpop.f32.mrf.mxu0
    %1498 = vdwg.mxu0
    %v1500 = vrot.slane %v1470, 5
    %v1501 = vrot.slane %v1470, 6
    %v1504 = vadd.f32 %v135, %v1500
    %v1505 = vadd.f32 %v138, %v1501
    %v1506 = vxor.u32 %v1504, 2147483648
    %v1507 = vxor.u32 %v1505, 2147483648
    %v1508 = vmul.f32 %v1506, 1.442695
    %v1509 = vpow.pop %v1508
    %v1510 = vmul.f32 %v1507, 1.442695
    %v1511 = vpow.pop %v1510
    %v1512 = vadd.f32 %v1509, 1.0
    %v1513 = vadd.f32 %v1511, 1.0
    %v1514 = vrcp.pop %v1512
    %v1515 = vmul.f32 %v1512, %v1514
    %v1516 = vsub.f32 1.0, %v1515
    %v1517 = vmul.f32 %v1514, %v1516
    %v1518 = vadd.f32 %v1514, %v1517
    %vm1519 = vweird.f32 %v1512
    %vm1520 = vweird.f32 %v1514
    %vm1521 = vmor %vm1519, %vm1520
    %v1522 = vsel %vm1521, %v1514, %v1518
    %v1523 = vand.u32 2147483647, %v1512
    %vm1524 = vcmp.eq.f32.partialorder %v1523, 8.507059e+37
    %v1525 = vand.u32 %v1512, 2147483648
    %v1526 = vor.u32 1.1754944e-38, %v1525
    %v1527 = vsel %vm1524, %v1526, %v1522
    %v1528 = vmul.f32 1.0, %v1527
    %v1529 = vrcp.pop %v1513
    %v1530 = vmul.f32 %v1513, %v1529
    %v1531 = vsub.f32 1.0, %v1530
    %v1532 = vmul.f32 %v1529, %v1531
    %v1533 = vadd.f32 %v1529, %v1532
    %vm1534 = vweird.f32 %v1513
    %vm1535 = vweird.f32 %v1529
    %vm1536 = vmor %vm1534, %vm1535
    %v1537 = vsel %vm1536, %v1529, %v1533
    %v1538 = vand.u32 2147483647, %v1513
    %vm1539 = vcmp.eq.f32.partialorder %v1538, 8.507059e+37
    %v1540 = vand.u32 %v1513, 2147483648
    %v1541 = vor.u32 1.1754944e-38, %v1540
    %v1542 = vsel %vm1539, %v1541, %v1537
    %v1543 = vmul.f32 1.0, %v1542
    %v1545 = vrot.slane %v1483, 5
    %v1546 = vrot.slane %v1483, 6
    %v1549 = vadd.f32 %v136, %v1545
    %v1550 = vadd.f32 %v139, %v1546
    %v1551 = vxor.u32 %v1549, 2147483648
    %v1552 = vxor.u32 %v1550, 2147483648
    %v1553 = vmul.f32 %v1551, 1.442695
    %v1554 = vpow.pop %v1553
    %v1555 = vmul.f32 %v1552, 1.442695
    %v1556 = vpow.pop %v1555
    %v1557 = vadd.f32 %v1554, 1.0
    %v1558 = vadd.f32 %v1556, 1.0
    %v1559 = vrcp.pop %v1557
    %v1560 = vmul.f32 %v1557, %v1559
    %v1561 = vsub.f32 1.0, %v1560
    %v1562 = vmul.f32 %v1559, %v1561
    %v1563 = vadd.f32 %v1559, %v1562
    %vm1564 = vweird.f32 %v1557
    %vm1565 = vweird.f32 %v1559
    %vm1566 = vmor %vm1564, %vm1565
    %v1567 = vsel %vm1566, %v1559, %v1563
    %v1568 = vand.u32 2147483647, %v1557
    %vm1569 = vcmp.eq.f32.partialorder %v1568, 8.507059e+37
    %v1570 = vand.u32 %v1557, 2147483648
    %v1571 = vor.u32 1.1754944e-38, %v1570
    %v1572 = vsel %vm1569, %v1571, %v1567
    %v1573 = vmul.f32 1.0, %v1572
    %v1574 = vrcp.pop %v1558
    %v1575 = vmul.f32 %v1558, %v1574
    %v1576 = vsub.f32 1.0, %v1575
    %v1577 = vmul.f32 %v1574, %v1576
    %v1578 = vadd.f32 %v1574, %v1577
    %vm1579 = vweird.f32 %v1558
    %vm1580 = vweird.f32 %v1574
    %vm1581 = vmor %vm1579, %vm1580
    %v1582 = vsel %vm1581, %v1574, %v1578
    %v1583 = vand.u32 2147483647, %v1558
    %vm1584 = vcmp.eq.f32.partialorder %v1583, 8.507059e+37
    %v1585 = vand.u32 %v1558, 2147483648
    %v1586 = vor.u32 1.1754944e-38, %v1585
    %v1587 = vsel %vm1584, %v1586, %v1582
    %v1588 = vmul.f32 1.0, %v1587
    %v1589 = vadd.f32 %v1496, %v472
    %v1591 = vrot.slane %v1589, 5
    %v1592 = vrot.slane %v1589, 6
    %v1595 = vmul.f32 %v1528, %v1591
    %v1596 = vmul.f32 %v1543, %v1592
    %v1597 = vadd.f32 %v137, %v1595
    %v1598 = vadd.f32 %v140, %v1596
    %v1599 = vtanh.pop %v1597
    %v1600 = vtanh.pop %v1598
    %v1601 = vsub.f32 1.0, %v1573
    %v1602 = vsub.f32 1.0, %v1588
    %v1603 = vmul.f32 %v1601, %v1599
    %v1604 = vmul.f32 %v1602, %v1600
    %v1606 = vrot.slane %v1458, 5
    %v1607 = vrot.slane %v1458, 6
    %v1610 = vmul.f32 %v1573, %v1606
    %v1611 = vmul.f32 %v1588, %v1607
    %v1612 = vadd.f32 %v1603, %v1610
    %v1613 = vadd.f32 %v1604, %v1611
    %v1614 = vld [vmem:[#allocation3] sm:$0x3]
    %v1615 = vpack.c.bf16 %v1614, %v1614
    %1616 = vmatpush.bf16.msra.mxu0 %v600
    %1617 = vmatpush.bf16.msra.mxu0 %v597
    %1618 = vmatpush.bf16.msra.mxu0 %v594
    %1619 = vmatpush.bf16.msra.mxu0 %v591
    %1620 = vmatpush.bf16.msra.mxu0 %v588
    %1621 = vmatpush.bf16.msra.mxu0 %v585
    %1622 = vmatpush.bf16.msra.mxu0 %v582
    %1623 = vmatpush.bf16.msra.mxu0 %v579
    %1624 = vmatmul.bf16.gmra.mxu0 %v1615
    %v1625 = vpop.f32.mrf.mxu0
    %v1626 = vadd.f32 0.0, %v1625
    %v1627 = vpop.f32.mrf.mxu0
    %1628 = vdwg.mxu0
    %1629 = vmatpush.bf16.msra.mxu0 %v601
    %1630 = vmatpush.bf16.msra.mxu0 %v598
    %1631 = vmatpush.bf16.msra.mxu0 %v595
    %1632 = vmatpush.bf16.msra.mxu0 %v592
    %1633 = vmatpush.bf16.msra.mxu0 %v589
    %1634 = vmatpush.bf16.msra.mxu0 %v586
    %1635 = vmatpush.bf16.msra.mxu0 %v583
    %1636 = vmatpush.bf16.msra.mxu0 %v580
    %1637 = vmatmul.bf16.gmra.mxu0 %v1615
    %v1638 = vpop.f32.mrf.mxu0
    %v1639 = vadd.f32 0.0, %v1638
    %v1640 = vpop.f32.mrf.mxu0
    %1641 = vdwg.mxu0
    %1642 = vmatpush.bf16.msra.mxu0 %v602
    %1643 = vmatpush.bf16.msra.mxu0 %v599
    %1644 = vmatpush.bf16.msra.mxu0 %v596
    %1645 = vmatpush.bf16.msra.mxu0 %v593
    %1646 = vmatpush.bf16.msra.mxu0 %v590
    %1647 = vmatpush.bf16.msra.mxu0 %v587
    %1648 = vmatpush.bf16.msra.mxu0 %v584
    %1649 = vmatpush.bf16.msra.mxu0 %v581
    %1650 = vmatmul.bf16.gmra.mxu0 %v1615
    %v1651 = vpop.f32.mrf.mxu0
    %v1652 = vadd.f32 0.0, %v1651
    %v1653 = vpop.f32.mrf.mxu0
    %1654 = vdwg.mxu0
    %v1656 = vrot.slane %v1626, 4
    %v1657 = vrot.slane %v1626, 5
    %v1660 = vadd.f32 %v141, %v1656
    %v1661 = vadd.f32 %v144, %v1657
    %v1662 = vxor.u32 %v1660, 2147483648
    %v1663 = vxor.u32 %v1661, 2147483648
    %v1664 = vmul.f32 %v1662, 1.442695
    %v1665 = vpow.pop %v1664
    %v1666 = vmul.f32 %v1663, 1.442695
    %v1667 = vpow.pop %v1666
    %v1668 = vadd.f32 %v1665, 1.0
    %v1669 = vadd.f32 %v1667, 1.0
    %v1670 = vrcp.pop %v1668
    %v1671 = vmul.f32 %v1668, %v1670
    %v1672 = vsub.f32 1.0, %v1671
    %v1673 = vmul.f32 %v1670, %v1672
    %v1674 = vadd.f32 %v1670, %v1673
    %vm1675 = vweird.f32 %v1668
    %vm1676 = vweird.f32 %v1670
    %vm1677 = vmor %vm1675, %vm1676
    %v1678 = vsel %vm1677, %v1670, %v1674
    %v1679 = vand.u32 2147483647, %v1668
    %vm1680 = vcmp.eq.f32.partialorder %v1679, 8.507059e+37
    %v1681 = vand.u32 %v1668, 2147483648
    %v1682 = vor.u32 1.1754944e-38, %v1681
    %v1683 = vsel %vm1680, %v1682, %v1678
    %v1684 = vmul.f32 1.0, %v1683
    %v1685 = vrcp.pop %v1669
    %v1686 = vmul.f32 %v1669, %v1685
    %v1687 = vsub.f32 1.0, %v1686
    %v1688 = vmul.f32 %v1685, %v1687
    %v1689 = vadd.f32 %v1685, %v1688
    %vm1690 = vweird.f32 %v1669
    %vm1691 = vweird.f32 %v1685
    %vm1692 = vmor %vm1690, %vm1691
    %v1693 = vsel %vm1692, %v1685, %v1689
    %v1694 = vand.u32 2147483647, %v1669
    %vm1695 = vcmp.eq.f32.partialorder %v1694, 8.507059e+37
    %v1696 = vand.u32 %v1669, 2147483648
    %v1697 = vor.u32 1.1754944e-38, %v1696
    %v1698 = vsel %vm1695, %v1697, %v1693
    %v1699 = vmul.f32 1.0, %v1698
    %v1701 = vrot.slane %v1639, 4
    %v1702 = vrot.slane %v1639, 5
    %v1705 = vadd.f32 %v142, %v1701
    %v1706 = vadd.f32 %v145, %v1702
    %v1707 = vxor.u32 %v1705, 2147483648
    %v1708 = vxor.u32 %v1706, 2147483648
    %v1709 = vmul.f32 %v1707, 1.442695
    %v1710 = vpow.pop %v1709
    %v1711 = vmul.f32 %v1708, 1.442695
    %v1712 = vpow.pop %v1711
    %v1713 = vadd.f32 %v1710, 1.0
    %v1714 = vadd.f32 %v1712, 1.0
    %v1715 = vrcp.pop %v1713
    %v1716 = vmul.f32 %v1713, %v1715
    %v1717 = vsub.f32 1.0, %v1716
    %v1718 = vmul.f32 %v1715, %v1717
    %v1719 = vadd.f32 %v1715, %v1718
    %vm1720 = vweird.f32 %v1713
    %vm1721 = vweird.f32 %v1715
    %vm1722 = vmor %vm1720, %vm1721
    %v1723 = vsel %vm1722, %v1715, %v1719
    %v1724 = vand.u32 2147483647, %v1713
    %vm1725 = vcmp.eq.f32.partialorder %v1724, 8.507059e+37
    %v1726 = vand.u32 %v1713, 2147483648
    %v1727 = vor.u32 1.1754944e-38, %v1726
    %v1728 = vsel %vm1725, %v1727, %v1723
    %v1729 = vmul.f32 1.0, %v1728
    %v1730 = vrcp.pop %v1714
    %v1731 = vmul.f32 %v1714, %v1730
    %v1732 = vsub.f32 1.0, %v1731
    %v1733 = vmul.f32 %v1730, %v1732
    %v1734 = vadd.f32 %v1730, %v1733
    %vm1735 = vweird.f32 %v1714
    %vm1736 = vweird.f32 %v1730
    %vm1737 = vmor %vm1735, %vm1736
    %v1738 = vsel %vm1737, %v1730, %v1734
    %v1739 = vand.u32 2147483647, %v1714
    %vm1740 = vcmp.eq.f32.partialorder %v1739, 8.507059e+37
    %v1741 = vand.u32 %v1714, 2147483648
    %v1742 = vor.u32 1.1754944e-38, %v1741
    %v1743 = vsel %vm1740, %v1742, %v1738
    %v1744 = vmul.f32 1.0, %v1743
    %v1745 = vadd.f32 %v1652, %v757
    %v1747 = vrot.slane %v1745, 4
    %v1748 = vrot.slane %v1745, 5
    %v1751 = vmul.f32 %v1684, %v1747
    %v1752 = vmul.f32 %v1699, %v1748
    %v1753 = vadd.f32 %v143, %v1751
    %v1754 = vadd.f32 %v146, %v1752
    %v1755 = vtanh.pop %v1753
    %v1756 = vtanh.pop %v1754
    %v1757 = vsub.f32 1.0, %v1729
    %v1758 = vsub.f32 1.0, %v1744
    %v1759 = vmul.f32 %v1757, %v1755
    %v1760 = vmul.f32 %v1758, %v1756
    %v1762 = vrot.slane %v1614, 4
    %v1763 = vrot.slane %v1614, 5
    %v1766 = vmul.f32 %v1729, %v1762
    %v1767 = vmul.f32 %v1744, %v1763
    %v1768 = vadd.f32 %v1759, %v1766
    %v1769 = vadd.f32 %v1760, %v1767
    %v1772 = vrot.slane %v1613, 7
    %vm1773 = vcmask 1044484
    %v1774 = vsel %vm1773, %v1772, %v1612
    %1776 = vst [vmem:[#allocation2 - $0x3] sm:$0x18] %v1774
    %v1779 = vrot.slane %v1769, 7
    %vm1780 = vcmask 1045509
    %v1781 = vsel %vm1780, %v1779, %v1768
    %1783 = vst [vmem:[#allocation3 - $0x4] sm:$0x30] %v1781
    %1784 = vst [vmem:[%s5] sm:$0x8] %v1612
    %1785 = vst [vmem:[%s5 + $0x8] sm:$0x8] %v1613
    %1786 = vst [vmem:[%s127] sm:$0x10] %v1768
    %1787 = vst [vmem:[%s127 + $0x8] sm:$0x10] %v1769
    %v1788 = vld [vmem:[#allocation2] sm:$0x3]
    %v1789 = vpack.c.bf16 %v1788, %v1788
    %1790 = vmatpush.bf16.msra.mxu0 %v317
    %1791 = vmatpush.bf16.msra.mxu0 %v314
    %1792 = vmatpush.bf16.msra.mxu0 %v311
    %1793 = vmatpush.bf16.msra.mxu0 %v308
    %1794 = vmatpush.bf16.msra.mxu0 %v305
    %1795 = vmatpush.bf16.msra.mxu0 %v302
    %1796 = vmatpush.bf16.msra.mxu0 %v299
    %1797 = vmatpush.bf16.msra.mxu0 %v296
    %1798 = vmatmul.bf16.gmra.mxu0 %v1789
    %v1799 = vpop.f32.mrf.mxu0
    %v1800 = vadd.f32 0.0, %v1799
    %v1801 = vpop.f32.mrf.mxu0
    %1802 = vdwg.mxu0
    %1803 = vmatpush.bf16.msra.mxu0 %v318
    %1804 = vmatpush.bf16.msra.mxu0 %v315
    %1805 = vmatpush.bf16.msra.mxu0 %v312
    %1806 = vmatpush.bf16.msra.mxu0 %v309
    %1807 = vmatpush.bf16.msra.mxu0 %v306
    %1808 = vmatpush.bf16.msra.mxu0 %v303
    %1809 = vmatpush.bf16.msra.mxu0 %v300
    %1810 = vmatpush.bf16.msra.mxu0 %v297
    %1811 = vmatmul.bf16.gmra.mxu0 %v1789
    %v1812 = vpop.f32.mrf.mxu0
    %v1813 = vadd.f32 0.0, %v1812
    %v1814 = vpop.f32.mrf.mxu0
    %1815 = vdwg.mxu0
    %1816 = vmatpush.bf16.msra.mxu0 %v319
    %1817 = vmatpush.bf16.msra.mxu0 %v316
    %1818 = vmatpush.bf16.msra.mxu0 %v313
    %1819 = vmatpush.bf16.msra.mxu0 %v310
    %1820 = vmatpush.bf16.msra.mxu0 %v307
    %1821 = vmatpush.bf16.msra.mxu0 %v304
    %1822 = vmatpush.bf16.msra.mxu0 %v301
    %1823 = vmatpush.bf16.msra.mxu0 %v298
    %1824 = vmatmul.bf16.gmra.mxu0 %v1789
    %v1825 = vpop.f32.mrf.mxu0
    %v1826 = vadd.f32 0.0, %v1825
    %v1827 = vpop.f32.mrf.mxu0
    %1828 = vdwg.mxu0
    %v1830 = vrot.slane %v1800, 4
    %v1831 = vrot.slane %v1800, 5
    %v1834 = vadd.f32 %v135, %v1830
    %v1835 = vadd.f32 %v138, %v1831
    %v1836 = vxor.u32 %v1834, 2147483648
    %v1837 = vxor.u32 %v1835, 2147483648
    %v1838 = vmul.f32 %v1836, 1.442695
    %v1839 = vpow.pop %v1838
    %v1840 = vmul.f32 %v1837, 1.442695
    %v1841 = vpow.pop %v1840
    %v1842 = vadd.f32 %v1839, 1.0
    %v1843 = vadd.f32 %v1841, 1.0
    %v1844 = vrcp.pop %v1842
    %v1845 = vmul.f32 %v1842, %v1844
    %v1846 = vsub.f32 1.0, %v1845
    %v1847 = vmul.f32 %v1844, %v1846
    %v1848 = vadd.f32 %v1844, %v1847
    %vm1849 = vweird.f32 %v1842
    %vm1850 = vweird.f32 %v1844
    %vm1851 = vmor %vm1849, %vm1850
    %v1852 = vsel %vm1851, %v1844, %v1848
    %v1853 = vand.u32 2147483647, %v1842
    %vm1854 = vcmp.eq.f32.partialorder %v1853, 8.507059e+37
    %v1855 = vand.u32 %v1842, 2147483648
    %v1856 = vor.u32 1.1754944e-38, %v1855
    %v1857 = vsel %vm1854, %v1856, %v1852
    %v1858 = vmul.f32 1.0, %v1857
    %v1859 = vrcp.pop %v1843
    %v1860 = vmul.f32 %v1843, %v1859
    %v1861 = vsub.f32 1.0, %v1860
    %v1862 = vmul.f32 %v1859, %v1861
    %v1863 = vadd.f32 %v1859, %v1862
    %vm1864 = vweird.f32 %v1843
    %vm1865 = vweird.f32 %v1859
    %vm1866 = vmor %vm1864, %vm1865
    %v1867 = vsel %vm1866, %v1859, %v1863
    %v1868 = vand.u32 2147483647, %v1843
    %vm1869 = vcmp.eq.f32.partialorder %v1868, 8.507059e+37
    %v1870 = vand.u32 %v1843, 2147483648
    %v1871 = vor.u32 1.1754944e-38, %v1870
    %v1872 = vsel %vm1869, %v1871, %v1867
    %v1873 = vmul.f32 1.0, %v1872
    %v1875 = vrot.slane %v1813, 4
    %v1876 = vrot.slane %v1813, 5
    %v1879 = vadd.f32 %v136, %v1875
    %v1880 = vadd.f32 %v139, %v1876
    %v1881 = vxor.u32 %v1879, 2147483648
    %v1882 = vxor.u32 %v1880, 2147483648
    %v1883 = vmul.f32 %v1881, 1.442695
    %v1884 = vpow.pop %v1883
    %v1885 = vmul.f32 %v1882, 1.442695
    %v1886 = vpow.pop %v1885
    %v1887 = vadd.f32 %v1884, 1.0
    %v1888 = vadd.f32 %v1886, 1.0
    %v1889 = vrcp.pop %v1887
    %v1890 = vmul.f32 %v1887, %v1889
    %v1891 = vsub.f32 1.0, %v1890
    %v1892 = vmul.f32 %v1889, %v1891
    %v1893 = vadd.f32 %v1889, %v1892
    %vm1894 = vweird.f32 %v1887
    %vm1895 = vweird.f32 %v1889
    %vm1896 = vmor %vm1894, %vm1895
    %v1897 = vsel %vm1896, %v1889, %v1893
    %v1898 = vand.u32 2147483647, %v1887
    %vm1899 = vcmp.eq.f32.partialorder %v1898, 8.507059e+37
    %v1900 = vand.u32 %v1887, 2147483648
    %v1901 = vor.u32 1.1754944e-38, %v1900
    %v1902 = vsel %vm1899, %v1901, %v1897
    %v1903 = vmul.f32 1.0, %v1902
    %v1904 = vrcp.pop %v1888
    %v1905 = vmul.f32 %v1888, %v1904
    %v1906 = vsub.f32 1.0, %v1905
    %v1907 = vmul.f32 %v1904, %v1906
    %v1908 = vadd.f32 %v1904, %v1907
    %vm1909 = vweird.f32 %v1888
    %vm1910 = vweird.f32 %v1904
    %vm1911 = vmor %vm1909, %vm1910
    %v1912 = vsel %vm1911, %v1904, %v1908
    %v1913 = vand.u32 2147483647, %v1888
    %vm1914 = vcmp.eq.f32.partialorder %v1913, 8.507059e+37
    %v1915 = vand.u32 %v1888, 2147483648
    %v1916 = vor.u32 1.1754944e-38, %v1915
    %v1917 = vsel %vm1914, %v1916, %v1912
    %v1918 = vmul.f32 1.0, %v1917
    %v1919 = vadd.f32 %v1826, %v472
    %v1921 = vrot.slane %v1919, 4
    %v1922 = vrot.slane %v1919, 5
    %v1925 = vmul.f32 %v1858, %v1921
    %v1926 = vmul.f32 %v1873, %v1922
    %v1927 = vadd.f32 %v137, %v1925
    %v1928 = vadd.f32 %v140, %v1926
    %v1929 = vtanh.pop %v1927
    %v1930 = vtanh.pop %v1928
    %v1931 = vsub.f32 1.0, %v1903
    %v1932 = vsub.f32 1.0, %v1918
    %v1933 = vmul.f32 %v1931, %v1929
    %v1934 = vmul.f32 %v1932, %v1930
    %v1936 = vrot.slane %v1788, 4
    %v1937 = vrot.slane %v1788, 5
    %v1940 = vmul.f32 %v1903, %v1936
    %v1941 = vmul.f32 %v1918, %v1937
    %v1942 = vadd.f32 %v1933, %v1940
    %v1943 = vadd.f32 %v1934, %v1941
    %v1944 = vld [vmem:[#allocation3] sm:$0x3]
    %v1945 = vpack.c.bf16 %v1944, %v1944
    %1946 = vmatpush.bf16.msra.mxu0 %v600
    %1947 = vmatpush.bf16.msra.mxu0 %v597
    %1948 = vmatpush.bf16.msra.mxu0 %v594
    %1949 = vmatpush.bf16.msra.mxu0 %v591
    %1950 = vmatpush.bf16.msra.mxu0 %v588
    %1951 = vmatpush.bf16.msra.mxu0 %v585
    %1952 = vmatpush.bf16.msra.mxu0 %v582
    %1953 = vmatpush.bf16.msra.mxu0 %v579
    %1954 = vmatmul.bf16.gmra.mxu0 %v1945
    %v1955 = vpop.f32.mrf.mxu0
    %v1956 = vadd.f32 0.0, %v1955
    %v1957 = vpop.f32.mrf.mxu0
    %1958 = vdwg.mxu0
    %1959 = vmatpush.bf16.msra.mxu0 %v601
    %1960 = vmatpush.bf16.msra.mxu0 %v598
    %1961 = vmatpush.bf16.msra.mxu0 %v595
    %1962 = vmatpush.bf16.msra.mxu0 %v592
    %1963 = vmatpush.bf16.msra.mxu0 %v589
    %1964 = vmatpush.bf16.msra.mxu0 %v586
    %1965 = vmatpush.bf16.msra.mxu0 %v583
    %1966 = vmatpush.bf16.msra.mxu0 %v580
    %1967 = vmatmul.bf16.gmra.mxu0 %v1945
    %v1968 = vpop.f32.mrf.mxu0
    %v1969 = vadd.f32 0.0, %v1968
    %v1970 = vpop.f32.mrf.mxu0
    %1971 = vdwg.mxu0
    %1972 = vmatpush.bf16.msra.mxu0 %v602
    %1973 = vmatpush.bf16.msra.mxu0 %v599
    %1974 = vmatpush.bf16.msra.mxu0 %v596
    %1975 = vmatpush.bf16.msra.mxu0 %v593
    %1976 = vmatpush.bf16.msra.mxu0 %v590
    %1977 = vmatpush.bf16.msra.mxu0 %v587
    %1978 = vmatpush.bf16.msra.mxu0 %v584
    %1979 = vmatpush.bf16.msra.mxu0 %v581
    %1980 = vmatmul.bf16.gmra.mxu0 %v1945
    %v1981 = vpop.f32.mrf.mxu0
    %v1982 = vadd.f32 0.0, %v1981
    %v1983 = vpop.f32.mrf.mxu0
    %1984 = vdwg.mxu0
    %v1986 = vrot.slane %v1956, 5
    %v1987 = vrot.slane %v1956, 6
    %v1990 = vadd.f32 %v141, %v1986
    %v1991 = vadd.f32 %v144, %v1987
    %v1992 = vxor.u32 %v1990, 2147483648
    %v1993 = vxor.u32 %v1991, 2147483648
    %v1994 = vmul.f32 %v1992, 1.442695
    %v1995 = vpow.pop %v1994
    %v1996 = vmul.f32 %v1993, 1.442695
    %v1997 = vpow.pop %v1996
    %v1998 = vadd.f32 %v1995, 1.0
    %v1999 = vadd.f32 %v1997, 1.0
    %v2000 = vrcp.pop %v1998
    %v2001 = vmul.f32 %v1998, %v2000
    %v2002 = vsub.f32 1.0, %v2001
    %v2003 = vmul.f32 %v2000, %v2002
    %v2004 = vadd.f32 %v2000, %v2003
    %vm2005 = vweird.f32 %v1998
    %vm2006 = vweird.f32 %v2000
    %vm2007 = vmor %vm2005, %vm2006
    %v2008 = vsel %vm2007, %v2000, %v2004
    %v2009 = vand.u32 2147483647, %v1998
    %vm2010 = vcmp.eq.f32.partialorder %v2009, 8.507059e+37
    %v2011 = vand.u32 %v1998, 2147483648
    %v2012 = vor.u32 1.1754944e-38, %v2011
    %v2013 = vsel %vm2010, %v2012, %v2008
    %v2014 = vmul.f32 1.0, %v2013
    %v2015 = vrcp.pop %v1999
    %v2016 = vmul.f32 %v1999, %v2015
    %v2017 = vsub.f32 1.0, %v2016
    %v2018 = vmul.f32 %v2015, %v2017
    %v2019 = vadd.f32 %v2015, %v2018
    %vm2020 = vweird.f32 %v1999
    %vm2021 = vweird.f32 %v2015
    %vm2022 = vmor %vm2020, %vm2021
    %v2023 = vsel %vm2022, %v2015, %v2019
    %v2024 = vand.u32 2147483647, %v1999
    %vm2025 = vcmp.eq.f32.partialorder %v2024, 8.507059e+37
    %v2026 = vand.u32 %v1999, 2147483648
    %v2027 = vor.u32 1.1754944e-38, %v2026
    %v2028 = vsel %vm2025, %v2027, %v2023
    %v2029 = vmul.f32 1.0, %v2028
    %v2031 = vrot.slane %v1969, 5
    %v2032 = vrot.slane %v1969, 6
    %v2035 = vadd.f32 %v142, %v2031
    %v2036 = vadd.f32 %v145, %v2032
    %v2037 = vxor.u32 %v2035, 2147483648
    %v2038 = vxor.u32 %v2036, 2147483648
    %v2039 = vmul.f32 %v2037, 1.442695
    %v2040 = vpow.pop %v2039
    %v2041 = vmul.f32 %v2038, 1.442695
    %v2042 = vpow.pop %v2041
    %v2043 = vadd.f32 %v2040, 1.0
    %v2044 = vadd.f32 %v2042, 1.0
    %v2045 = vrcp.pop %v2043
    %v2046 = vmul.f32 %v2043, %v2045
    %v2047 = vsub.f32 1.0, %v2046
    %v2048 = vmul.f32 %v2045, %v2047
    %v2049 = vadd.f32 %v2045, %v2048
    %vm2050 = vweird.f32 %v2043
    %vm2051 = vweird.f32 %v2045
    %vm2052 = vmor %vm2050, %vm2051
    %v2053 = vsel %vm2052, %v2045, %v2049
    %v2054 = vand.u32 2147483647, %v2043
    %vm2055 = vcmp.eq.f32.partialorder %v2054, 8.507059e+37
    %v2056 = vand.u32 %v2043, 2147483648
    %v2057 = vor.u32 1.1754944e-38, %v2056
    %v2058 = vsel %vm2055, %v2057, %v2053
    %v2059 = vmul.f32 1.0, %v2058
    %v2060 = vrcp.pop %v2044
    %v2061 = vmul.f32 %v2044, %v2060
    %v2062 = vsub.f32 1.0, %v2061
    %v2063 = vmul.f32 %v2060, %v2062
    %v2064 = vadd.f32 %v2060, %v2063
    %vm2065 = vweird.f32 %v2044
    %vm2066 = vweird.f32 %v2060
    %vm2067 = vmor %vm2065, %vm2066
    %v2068 = vsel %vm2067, %v2060, %v2064
    %v2069 = vand.u32 2147483647, %v2044
    %vm2070 = vcmp.eq.f32.partialorder %v2069, 8.507059e+37
    %v2071 = vand.u32 %v2044, 2147483648
    %v2072 = vor.u32 1.1754944e-38, %v2071
    %v2073 = vsel %vm2070, %v2072, %v2068
    %v2074 = vmul.f32 1.0, %v2073
    %v2075 = vadd.f32 %v1982, %v757
    %v2077 = vrot.slane %v2075, 5
    %v2078 = vrot.slane %v2075, 6
    %v2081 = vmul.f32 %v2014, %v2077
    %v2082 = vmul.f32 %v2029, %v2078
    %v2083 = vadd.f32 %v143, %v2081
    %v2084 = vadd.f32 %v146, %v2082
    %v2085 = vtanh.pop %v2083
    %v2086 = vtanh.pop %v2084
    %v2087 = vsub.f32 1.0, %v2059
    %v2088 = vsub.f32 1.0, %v2074
    %v2089 = vmul.f32 %v2087, %v2085
    %v2090 = vmul.f32 %v2088, %v2086
    %v2092 = vrot.slane %v1944, 5
    %v2093 = vrot.slane %v1944, 6
    %v2096 = vmul.f32 %v2059, %v2092
    %v2097 = vmul.f32 %v2074, %v2093
    %v2098 = vadd.f32 %v2089, %v2096
    %v2099 = vadd.f32 %v2090, %v2097
    %v2102 = vrot.slane %v1943, 7
    %v2103 = vsel %vm1780, %v2102, %v1942
    %2105 = vst [vmem:[#allocation2 - $0x4] sm:$0x30] %v2103
    %v2108 = vrot.slane %v2099, 7
    %v2109 = vsel %vm1773, %v2108, %v2098
    %2111 = vst [vmem:[#allocation3 - $0x3] sm:$0x18] %v2109
    %2112 = vst [vmem:[%s5] sm:$0x10] %v1942
    %2113 = vst [vmem:[%s5 + $0x8] sm:$0x10] %v1943
    %2114 = vst [vmem:[%s127] sm:$0x8] %v2098
    %2115 = vst [vmem:[%s127 + $0x8] sm:$0x8] %v2099
    %v2116 = vld [vmem:[#allocation2] sm:$0x3]
    %v2117 = vpack.c.bf16 %v2116, %v2116
    %2118 = vmatpush.bf16.msra.mxu0 %v317
    %2119 = vmatpush.bf16.msra.mxu0 %v314
    %2120 = vmatpush.bf16.msra.mxu0 %v311
    %2121 = vmatpush.bf16.msra.mxu0 %v308
    %2122 = vmatpush.bf16.msra.mxu0 %v305
    %2123 = vmatpush.bf16.msra.mxu0 %v302
    %2124 = vmatpush.bf16.msra.mxu0 %v299
    %2125 = vmatpush.bf16.msra.mxu0 %v296
    %2126 = vmatmul.bf16.gmra.mxu0 %v2117
    %v2127 = vpop.f32.mrf.mxu0
    %v2128 = vadd.f32 0.0, %v2127
    %v2129 = vpop.f32.mrf.mxu0
    %2130 = vdwg.mxu0
    %2131 = vmatpush.bf16.msra.mxu0 %v318
    %2132 = vmatpush.bf16.msra.mxu0 %v315
    %2133 = vmatpush.bf16.msra.mxu0 %v312
    %2134 = vmatpush.bf16.msra.mxu0 %v309
    %2135 = vmatpush.bf16.msra.mxu0 %v306
    %2136 = vmatpush.bf16.msra.mxu0 %v303
    %2137 = vmatpush.bf16.msra.mxu0 %v300
    %2138 = vmatpush.bf16.msra.mxu0 %v297
    %2139 = vmatmul.bf16.gmra.mxu0 %v2117
    %v2140 = vpop.f32.mrf.mxu0
    %v2141 = vadd.f32 0.0, %v2140
    %v2142 = vpop.f32.mrf.mxu0
    %2143 = vdwg.mxu0
    %2144 = vmatpush.bf16.msra.mxu0 %v319
    %2145 = vmatpush.bf16.msra.mxu0 %v316
    %2146 = vmatpush.bf16.msra.mxu0 %v313
    %2147 = vmatpush.bf16.msra.mxu0 %v310
    %2148 = vmatpush.bf16.msra.mxu0 %v307
    %2149 = vmatpush.bf16.msra.mxu0 %v304
    %2150 = vmatpush.bf16.msra.mxu0 %v301
    %2151 = vmatpush.bf16.msra.mxu0 %v298
    %2152 = vmatmul.bf16.gmra.mxu0 %v2117
    %v2153 = vpop.f32.mrf.mxu0
    %v2154 = vadd.f32 0.0, %v2153
    %v2155 = vpop.f32.mrf.mxu0
    %2156 = vdwg.mxu0
    %v2158 = vrot.slane %v2128, 3
    %v2159 = vrot.slane %v2128, 4
    %v2162 = vadd.f32 %v135, %v2158
    %v2163 = vadd.f32 %v138, %v2159
    %v2164 = vxor.u32 %v2162, 2147483648
    %v2165 = vxor.u32 %v2163, 2147483648
    %v2166 = vmul.f32 %v2164, 1.442695
    %v2167 = vpow.pop %v2166
    %v2168 = vmul.f32 %v2165, 1.442695
    %v2169 = vpow.pop %v2168
    %v2170 = vadd.f32 %v2167, 1.0
    %v2171 = vadd.f32 %v2169, 1.0
    %v2172 = vrcp.pop %v2170
    %v2173 = vmul.f32 %v2170, %v2172
    %v2174 = vsub.f32 1.0, %v2173
    %v2175 = vmul.f32 %v2172, %v2174
    %v2176 = vadd.f32 %v2172, %v2175
    %vm2177 = vweird.f32 %v2170
    %vm2178 = vweird.f32 %v2172
    %vm2179 = vmor %vm2177, %vm2178
    %v2180 = vsel %vm2179, %v2172, %v2176
    %v2181 = vand.u32 2147483647, %v2170
    %vm2182 = vcmp.eq.f32.partialorder %v2181, 8.507059e+37
    %v2183 = vand.u32 %v2170, 2147483648
    %v2184 = vor.u32 1.1754944e-38, %v2183
    %v2185 = vsel %vm2182, %v2184, %v2180
    %v2186 = vmul.f32 1.0, %v2185
    %v2187 = vrcp.pop %v2171
    %v2188 = vmul.f32 %v2171, %v2187
    %v2189 = vsub.f32 1.0, %v2188
    %v2190 = vmul.f32 %v2187, %v2189
    %v2191 = vadd.f32 %v2187, %v2190
    %vm2192 = vweird.f32 %v2171
    %vm2193 = vweird.f32 %v2187
    %vm2194 = vmor %vm2192, %vm2193
    %v2195 = vsel %vm2194, %v2187, %v2191
    %v2196 = vand.u32 2147483647, %v2171
    %vm2197 = vcmp.eq.f32.partialorder %v2196, 8.507059e+37
    %v2198 = vand.u32 %v2171, 2147483648
    %v2199 = vor.u32 1.1754944e-38, %v2198
    %v2200 = vsel %vm2197, %v2199, %v2195
    %v2201 = vmul.f32 1.0, %v2200
    %v2203 = vrot.slane %v2141, 3
    %v2204 = vrot.slane %v2141, 4
    %v2207 = vadd.f32 %v136, %v2203
    %v2208 = vadd.f32 %v139, %v2204
    %v2209 = vxor.u32 %v2207, 2147483648
    %v2210 = vxor.u32 %v2208, 2147483648
    %v2211 = vmul.f32 %v2209, 1.442695
    %v2212 = vpow.pop %v2211
    %v2213 = vmul.f32 %v2210, 1.442695
    %v2214 = vpow.pop %v2213
    %v2215 = vadd.f32 %v2212, 1.0
    %v2216 = vadd.f32 %v2214, 1.0
    %v2217 = vrcp.pop %v2215
    %v2218 = vmul.f32 %v2215, %v2217
    %v2219 = vsub.f32 1.0, %v2218
    %v2220 = vmul.f32 %v2217, %v2219
    %v2221 = vadd.f32 %v2217, %v2220
    %vm2222 = vweird.f32 %v2215
    %vm2223 = vweird.f32 %v2217
    %vm2224 = vmor %vm2222, %vm2223
    %v2225 = vsel %vm2224, %v2217, %v2221
    %v2226 = vand.u32 2147483647, %v2215
    %vm2227 = vcmp.eq.f32.partialorder %v2226, 8.507059e+37
    %v2228 = vand.u32 %v2215, 2147483648
    %v2229 = vor.u32 1.1754944e-38, %v2228
    %v2230 = vsel %vm2227, %v2229, %v2225
    %v2231 = vmul.f32 1.0, %v2230
    %v2232 = vrcp.pop %v2216
    %v2233 = vmul.f32 %v2216, %v2232
    %v2234 = vsub.f32 1.0, %v2233
    %v2235 = vmul.f32 %v2232, %v2234
    %v2236 = vadd.f32 %v2232, %v2235
    %vm2237 = vweird.f32 %v2216
    %vm2238 = vweird.f32 %v2232
    %vm2239 = vmor %vm2237, %vm2238
    %v2240 = vsel %vm2239, %v2232, %v2236
    %v2241 = vand.u32 2147483647, %v2216
    %vm2242 = vcmp.eq.f32.partialorder %v2241, 8.507059e+37
    %v2243 = vand.u32 %v2216, 2147483648
    %v2244 = vor.u32 1.1754944e-38, %v2243
    %v2245 = vsel %vm2242, %v2244, %v2240
    %v2246 = vmul.f32 1.0, %v2245
    %v2247 = vadd.f32 %v2154, %v472
    %v2249 = vrot.slane %v2247, 3
    %v2250 = vrot.slane %v2247, 4
    %v2253 = vmul.f32 %v2186, %v2249
    %v2254 = vmul.f32 %v2201, %v2250
    %v2255 = vadd.f32 %v137, %v2253
    %v2256 = vadd.f32 %v140, %v2254
    %v2257 = vtanh.pop %v2255
    %v2258 = vtanh.pop %v2256
    %v2259 = vsub.f32 1.0, %v2231
    %v2260 = vsub.f32 1.0, %v2246
    %v2261 = vmul.f32 %v2259, %v2257
    %v2262 = vmul.f32 %v2260, %v2258
    %v2264 = vrot.slane %v2116, 3
    %v2265 = vrot.slane %v2116, 4
    %v2268 = vmul.f32 %v2231, %v2264
    %v2269 = vmul.f32 %v2246, %v2265
    %v2270 = vadd.f32 %v2261, %v2268
    %v2271 = vadd.f32 %v2262, %v2269
    %v2272 = vld [vmem:[#allocation3] sm:$0x3]
    %v2273 = vpack.c.bf16 %v2272, %v2272
    %2274 = vmatpush.bf16.msra.mxu0 %v600
    %2275 = vmatpush.bf16.msra.mxu0 %v597
    %2276 = vmatpush.bf16.msra.mxu0 %v594
    %2277 = vmatpush.bf16.msra.mxu0 %v591
    %2278 = vmatpush.bf16.msra.mxu0 %v588
    %2279 = vmatpush.bf16.msra.mxu0 %v585
    %2280 = vmatpush.bf16.msra.mxu0 %v582
    %2281 = vmatpush.bf16.msra.mxu0 %v579
    %2282 = vmatmul.bf16.gmra.mxu0 %v2273
    %v2283 = vpop.f32.mrf.mxu0
    %v2284 = vadd.f32 0.0, %v2283
    %v2285 = vpop.f32.mrf.mxu0
    %2286 = vdwg.mxu0
    %2287 = vmatpush.bf16.msra.mxu0 %v601
    %2288 = vmatpush.bf16.msra.mxu0 %v598
    %2289 = vmatpush.bf16.msra.mxu0 %v595
    %2290 = vmatpush.bf16.msra.mxu0 %v592
    %2291 = vmatpush.bf16.msra.mxu0 %v589
    %2292 = vmatpush.bf16.msra.mxu0 %v586
    %2293 = vmatpush.bf16.msra.mxu0 %v583
    %2294 = vmatpush.bf16.msra.mxu0 %v580
    %2295 = vmatmul.bf16.gmra.mxu0 %v2273
    %v2296 = vpop.f32.mrf.mxu0
    %v2297 = vadd.f32 0.0, %v2296
    %v2298 = vpop.f32.mrf.mxu0
    %2299 = vdwg.mxu0
    %2300 = vmatpush.bf16.msra.mxu0 %v602
    %2301 = vmatpush.bf16.msra.mxu0 %v599
    %2302 = vmatpush.bf16.msra.mxu0 %v596
    %2303 = vmatpush.bf16.msra.mxu0 %v593
    %2304 = vmatpush.bf16.msra.mxu0 %v590
    %2305 = vmatpush.bf16.msra.mxu0 %v587
    %2306 = vmatpush.bf16.msra.mxu0 %v584
    %2307 = vmatpush.bf16.msra.mxu0 %v581
    %2308 = vmatmul.bf16.gmra.mxu0 %v2273
    %v2309 = vpop.f32.mrf.mxu0
    %v2310 = vadd.f32 0.0, %v2309
    %v2311 = vpop.f32.mrf.mxu0
    %2312 = vdwg.mxu0
    %v2314 = vrot.slane %v2284, 6
    %v2315 = vrot.slane %v2284, 7
    %v2318 = vadd.f32 %v141, %v2314
    %v2319 = vadd.f32 %v144, %v2315
    %v2320 = vxor.u32 %v2318, 2147483648
    %v2321 = vxor.u32 %v2319, 2147483648
    %v2322 = vmul.f32 %v2320, 1.442695
    %v2323 = vpow.pop %v2322
    %v2324 = vmul.f32 %v2321, 1.442695
    %v2325 = vpow.pop %v2324
    %v2326 = vadd.f32 %v2323, 1.0
    %v2327 = vadd.f32 %v2325, 1.0
    %v2328 = vrcp.pop %v2326
    %v2329 = vmul.f32 %v2326, %v2328
    %v2330 = vsub.f32 1.0, %v2329
    %v2331 = vmul.f32 %v2328, %v2330
    %v2332 = vadd.f32 %v2328, %v2331
    %vm2333 = vweird.f32 %v2326
    %vm2334 = vweird.f32 %v2328
    %vm2335 = vmor %vm2333, %vm2334
    %v2336 = vsel %vm2335, %v2328, %v2332
    %v2337 = vand.u32 2147483647, %v2326
    %vm2338 = vcmp.eq.f32.partialorder %v2337, 8.507059e+37
    %v2339 = vand.u32 %v2326, 2147483648
    %v2340 = vor.u32 1.1754944e-38, %v2339
    %v2341 = vsel %vm2338, %v2340, %v2336
    %v2342 = vmul.f32 1.0, %v2341
    %v2343 = vrcp.pop %v2327
    %v2344 = vmul.f32 %v2327, %v2343
    %v2345 = vsub.f32 1.0, %v2344
    %v2346 = vmul.f32 %v2343, %v2345
    %v2347 = vadd.f32 %v2343, %v2346
    %vm2348 = vweird.f32 %v2327
    %vm2349 = vweird.f32 %v2343
    %vm2350 = vmor %vm2348, %vm2349
    %v2351 = vsel %vm2350, %v2343, %v2347
    %v2352 = vand.u32 2147483647, %v2327
    %vm2353 = vcmp.eq.f32.partialorder %v2352, 8.507059e+37
    %v2354 = vand.u32 %v2327, 2147483648
    %v2355 = vor.u32 1.1754944e-38, %v2354
    %v2356 = vsel %vm2353, %v2355, %v2351
    %v2357 = vmul.f32 1.0, %v2356
    %v2359 = vrot.slane %v2297, 6
    %v2360 = vrot.slane %v2297, 7
    %v2363 = vadd.f32 %v142, %v2359
    %v2364 = vadd.f32 %v145, %v2360
    %v2365 = vxor.u32 %v2363, 2147483648
    %v2366 = vxor.u32 %v2364, 2147483648
    %v2367 = vmul.f32 %v2365, 1.442695
    %v2368 = vpow.pop %v2367
    %v2369 = vmul.f32 %v2366, 1.442695
    %v2370 = vpow.pop %v2369
    %v2371 = vadd.f32 %v2368, 1.0
    %v2372 = vadd.f32 %v2370, 1.0
    %v2373 = vrcp.pop %v2371
    %v2374 = vmul.f32 %v2371, %v2373
    %v2375 = vsub.f32 1.0, %v2374
    %v2376 = vmul.f32 %v2373, %v2375
    %v2377 = vadd.f32 %v2373, %v2376
    %vm2378 = vweird.f32 %v2371
    %vm2379 = vweird.f32 %v2373
    %vm2380 = vmor %vm2378, %vm2379
    %v2381 = vsel %vm2380, %v2373, %v2377
    %v2382 = vand.u32 2147483647, %v2371
    %vm2383 = vcmp.eq.f32.partialorder %v2382, 8.507059e+37
    %v2384 = vand.u32 %v2371, 2147483648
    %v2385 = vor.u32 1.1754944e-38, %v2384
    %v2386 = vsel %vm2383, %v2385, %v2381
    %v2387 = vmul.f32 1.0, %v2386
    %v2388 = vrcp.pop %v2372
    %v2389 = vmul.f32 %v2372, %v2388
    %v2390 = vsub.f32 1.0, %v2389
    %v2391 = vmul.f32 %v2388, %v2390
    %v2392 = vadd.f32 %v2388, %v2391
    %vm2393 = vweird.f32 %v2372
    %vm2394 = vweird.f32 %v2388
    %vm2395 = vmor %vm2393, %vm2394
    %v2396 = vsel %vm2395, %v2388, %v2392
    %v2397 = vand.u32 2147483647, %v2372
    %vm2398 = vcmp.eq.f32.partialorder %v2397, 8.507059e+37
    %v2399 = vand.u32 %v2372, 2147483648
    %v2400 = vor.u32 1.1754944e-38, %v2399
    %v2401 = vsel %vm2398, %v2400, %v2396
    %v2402 = vmul.f32 1.0, %v2401
    %v2403 = vadd.f32 %v2310, %v757
    %v2405 = vrot.slane %v2403, 6
    %v2406 = vrot.slane %v2403, 7
    %v2409 = vmul.f32 %v2342, %v2405
    %v2410 = vmul.f32 %v2357, %v2406
    %v2411 = vadd.f32 %v143, %v2409
    %v2412 = vadd.f32 %v146, %v2410
    %v2413 = vtanh.pop %v2411
    %v2414 = vtanh.pop %v2412
    %v2415 = vsub.f32 1.0, %v2387
    %v2416 = vsub.f32 1.0, %v2402
    %v2417 = vmul.f32 %v2415, %v2413
    %v2418 = vmul.f32 %v2416, %v2414
    %v2420 = vrot.slane %v2272, 6
    %v2421 = vrot.slane %v2272, 7
    %v2424 = vmul.f32 %v2387, %v2420
    %v2425 = vmul.f32 %v2402, %v2421
    %v2426 = vadd.f32 %v2417, %v2424
    %v2427 = vadd.f32 %v2418, %v2425
    %v2430 = vrot.slane %v2271, 7
    %v2431 = vsel %vm1450, %v2430, %v2270
    %2433 = vst [vmem:[#allocation2 - $0x5] sm:$0x60] %v2431
    %v2436 = vrot.slane %v2427, 7
    %v2437 = vsel %vm1443, %v2436, %v2426
    %2439 = vst [vmem:[#allocation3 - $0x2] sm:$0xc] %v2437
    %2440 = vst [vmem:[%s5] sm:$0x20] %v2270
    %2441 = vst [vmem:[%s5 + $0x8] sm:$0x20] %v2271
    %2442 = vst [vmem:[%s127] sm:$0x4] %v2426
    %2443 = vst [vmem:[%s127 + $0x8] sm:$0x4] %v2427
    %v2444 = vld [vmem:[#allocation2] sm:$0x3]
    %v2445 = vpack.c.bf16 %v2444, %v2444
    %2446 = vmatpush.bf16.msra.mxu0 %v317
    %2447 = vmatpush.bf16.msra.mxu0 %v314
    %2448 = vmatpush.bf16.msra.mxu0 %v311
    %2449 = vmatpush.bf16.msra.mxu0 %v308
    %2450 = vmatpush.bf16.msra.mxu0 %v305
    %2451 = vmatpush.bf16.msra.mxu0 %v302
    %2452 = vmatpush.bf16.msra.mxu0 %v299
    %2453 = vmatpush.bf16.msra.mxu0 %v296
    %2454 = vmatmul.bf16.gmra.mxu0 %v2445
    %v2455 = vpop.f32.mrf.mxu0
    %v2456 = vadd.f32 0.0, %v2455
    %v2457 = vpop.f32.mrf.mxu0
    %2458 = vdwg.mxu0
    %2459 = vmatpush.bf16.msra.mxu0 %v318
    %2460 = vmatpush.bf16.msra.mxu0 %v315
    %2461 = vmatpush.bf16.msra.mxu0 %v312
    %2462 = vmatpush.bf16.msra.mxu0 %v309
    %2463 = vmatpush.bf16.msra.mxu0 %v306
    %2464 = vmatpush.bf16.msra.mxu0 %v303
    %2465 = vmatpush.bf16.msra.mxu0 %v300
    %2466 = vmatpush.bf16.msra.mxu0 %v297
    %2467 = vmatmul.bf16.gmra.mxu0 %v2445
    %v2468 = vpop.f32.mrf.mxu0
    %v2469 = vadd.f32 0.0, %v2468
    %v2470 = vpop.f32.mrf.mxu0
    %2471 = vdwg.mxu0
    %2472 = vmatpush.bf16.msra.mxu0 %v319
    %2473 = vmatpush.bf16.msra.mxu0 %v316
    %2474 = vmatpush.bf16.msra.mxu0 %v313
    %2475 = vmatpush.bf16.msra.mxu0 %v310
    %2476 = vmatpush.bf16.msra.mxu0 %v307
    %2477 = vmatpush.bf16.msra.mxu0 %v304
    %2478 = vmatpush.bf16.msra.mxu0 %v301
    %2479 = vmatpush.bf16.msra.mxu0 %v298
    %2480 = vmatmul.bf16.gmra.mxu0 %v2445
    %v2481 = vpop.f32.mrf.mxu0
    %v2482 = vadd.f32 0.0, %v2481
    %v2483 = vpop.f32.mrf.mxu0
    %2484 = vdwg.mxu0
    %v2486 = vrot.slane %v2456, 2
    %v2487 = vrot.slane %v2456, 3
    %v2490 = vadd.f32 %v135, %v2486
    %v2491 = vadd.f32 %v138, %v2487
    %v2492 = vxor.u32 %v2490, 2147483648
    %v2493 = vxor.u32 %v2491, 2147483648
    %v2494 = vmul.f32 %v2492, 1.442695
    %v2495 = vpow.pop %v2494
    %v2496 = vmul.f32 %v2493, 1.442695
    %v2497 = vpow.pop %v2496
    %v2498 = vadd.f32 %v2495, 1.0
    %v2499 = vadd.f32 %v2497, 1.0
    %v2500 = vrcp.pop %v2498
    %v2501 = vmul.f32 %v2498, %v2500
    %v2502 = vsub.f32 1.0, %v2501
    %v2503 = vmul.f32 %v2500, %v2502
    %v2504 = vadd.f32 %v2500, %v2503
    %vm2505 = vweird.f32 %v2498
    %vm2506 = vweird.f32 %v2500
    %vm2507 = vmor %vm2505, %vm2506
    %v2508 = vsel %vm2507, %v2500, %v2504
    %v2509 = vand.u32 2147483647, %v2498
    %vm2510 = vcmp.eq.f32.partialorder %v2509, 8.507059e+37
    %v2511 = vand.u32 %v2498, 2147483648
    %v2512 = vor.u32 1.1754944e-38, %v2511
    %v2513 = vsel %vm2510, %v2512, %v2508
    %v2514 = vmul.f32 1.0, %v2513
    %v2515 = vrcp.pop %v2499
    %v2516 = vmul.f32 %v2499, %v2515
    %v2517 = vsub.f32 1.0, %v2516
    %v2518 = vmul.f32 %v2515, %v2517
    %v2519 = vadd.f32 %v2515, %v2518
    %vm2520 = vweird.f32 %v2499
    %vm2521 = vweird.f32 %v2515
    %vm2522 = vmor %vm2520, %vm2521
    %v2523 = vsel %vm2522, %v2515, %v2519
    %v2524 = vand.u32 2147483647, %v2499
    %vm2525 = vcmp.eq.f32.partialorder %v2524, 8.507059e+37
    %v2526 = vand.u32 %v2499, 2147483648
    %v2527 = vor.u32 1.1754944e-38, %v2526
    %v2528 = vsel %vm2525, %v2527, %v2523
    %v2529 = vmul.f32 1.0, %v2528
    %v2531 = vrot.slane %v2469, 2
    %v2532 = vrot.slane %v2469, 3
    %v2535 = vadd.f32 %v136, %v2531
    %v2536 = vadd.f32 %v139, %v2532
    %v2537 = vxor.u32 %v2535, 2147483648
    %v2538 = vxor.u32 %v2536, 2147483648
    %v2539 = vmul.f32 %v2537, 1.442695
    %v2540 = vpow.pop %v2539
    %v2541 = vmul.f32 %v2538, 1.442695
    %v2542 = vpow.pop %v2541
    %v2543 = vadd.f32 %v2540, 1.0
    %v2544 = vadd.f32 %v2542, 1.0
    %v2545 = vrcp.pop %v2543
    %v2546 = vmul.f32 %v2543, %v2545
    %v2547 = vsub.f32 1.0, %v2546
    %v2548 = vmul.f32 %v2545, %v2547
    %v2549 = vadd.f32 %v2545, %v2548
    %vm2550 = vweird.f32 %v2543
    %vm2551 = vweird.f32 %v2545
    %vm2552 = vmor %vm2550, %vm2551
    %v2553 = vsel %vm2552, %v2545, %v2549
    %v2554 = vand.u32 2147483647, %v2543
    %vm2555 = vcmp.eq.f32.partialorder %v2554, 8.507059e+37
    %v2556 = vand.u32 %v2543, 2147483648
    %v2557 = vor.u32 1.1754944e-38, %v2556
    %v2558 = vsel %vm2555, %v2557, %v2553
    %v2559 = vmul.f32 1.0, %v2558
    %v2560 = vrcp.pop %v2544
    %v2561 = vmul.f32 %v2544, %v2560
    %v2562 = vsub.f32 1.0, %v2561
    %v2563 = vmul.f32 %v2560, %v2562
    %v2564 = vadd.f32 %v2560, %v2563
    %vm2565 = vweird.f32 %v2544
    %vm2566 = vweird.f32 %v2560
    %vm2567 = vmor %vm2565, %vm2566
    %v2568 = vsel %vm2567, %v2560, %v2564
    %v2569 = vand.u32 2147483647, %v2544
    %vm2570 = vcmp.eq.f32.partialorder %v2569, 8.507059e+37
    %v2571 = vand.u32 %v2544, 2147483648
    %v2572 = vor.u32 1.1754944e-38, %v2571
    %v2573 = vsel %vm2570, %v2572, %v2568
    %v2574 = vmul.f32 1.0, %v2573
    %v2575 = vadd.f32 %v2482, %v472
    %v2577 = vrot.slane %v2575, 2
    %v2578 = vrot.slane %v2575, 3
    %v2581 = vmul.f32 %v2514, %v2577
    %v2582 = vmul.f32 %v2529, %v2578
    %v2583 = vadd.f32 %v137, %v2581
    %v2584 = vadd.f32 %v140, %v2582
    %v2585 = vtanh.pop %v2583
    %v2586 = vtanh.pop %v2584
    %v2587 = vsub.f32 1.0, %v2559
    %v2588 = vsub.f32 1.0, %v2574
    %v2589 = vmul.f32 %v2587, %v2585
    %v2590 = vmul.f32 %v2588, %v2586
    %v2592 = vrot.slane %v2444, 2
    %v2593 = vrot.slane %v2444, 3
    %v2596 = vmul.f32 %v2559, %v2592
    %v2597 = vmul.f32 %v2574, %v2593
    %v2598 = vadd.f32 %v2589, %v2596
    %v2599 = vadd.f32 %v2590, %v2597
    %v2600 = vld [vmem:[#allocation3] sm:$0x3]
    %v2601 = vpack.c.bf16 %v2600, %v2600
    %2602 = vmatpush.bf16.msra.mxu0 %v600
    %2603 = vmatpush.bf16.msra.mxu0 %v597
    %2604 = vmatpush.bf16.msra.mxu0 %v594
    %2605 = vmatpush.bf16.msra.mxu0 %v591
    %2606 = vmatpush.bf16.msra.mxu0 %v588
    %2607 = vmatpush.bf16.msra.mxu0 %v585
    %2608 = vmatpush.bf16.msra.mxu0 %v582
    %2609 = vmatpush.bf16.msra.mxu0 %v579
    %2610 = vmatmul.bf16.gmra.mxu0 %v2601
    %v2611 = vpop.f32.mrf.mxu0
    %v2612 = vadd.f32 0.0, %v2611
    %v2613 = vpop.f32.mrf.mxu0
    %2614 = vdwg.mxu0
    %2615 = vmatpush.bf16.msra.mxu0 %v601
    %2616 = vmatpush.bf16.msra.mxu0 %v598
    %2617 = vmatpush.bf16.msra.mxu0 %v595
    %2618 = vmatpush.bf16.msra.mxu0 %v592
    %2619 = vmatpush.bf16.msra.mxu0 %v589
    %2620 = vmatpush.bf16.msra.mxu0 %v586
    %2621 = vmatpush.bf16.msra.mxu0 %v583
    %2622 = vmatpush.bf16.msra.mxu0 %v580
    %2623 = vmatmul.bf16.gmra.mxu0 %v2601
    %v2624 = vpop.f32.mrf.mxu0
    %v2625 = vadd.f32 0.0, %v2624
    %v2626 = vpop.f32.mrf.mxu0
    %2627 = vdwg.mxu0
    %2628 = vmatpush.bf16.msra.mxu0 %v602
    %2629 = vmatpush.bf16.msra.mxu0 %v599
    %2630 = vmatpush.bf16.msra.mxu0 %v596
    %2631 = vmatpush.bf16.msra.mxu0 %v593
    %2632 = vmatpush.bf16.msra.mxu0 %v590
    %2633 = vmatpush.bf16.msra.mxu0 %v587
    %2634 = vmatpush.bf16.msra.mxu0 %v584
    %2635 = vmatpush.bf16.msra.mxu0 %v581
    %2636 = vmatmul.bf16.gmra.mxu0 %v2601
    %v2637 = vpop.f32.mrf.mxu0
    %v2638 = vadd.f32 0.0, %v2637
    %v2639 = vpop.f32.mrf.mxu0
    %2640 = vdwg.mxu0
    %v2642 = vrot.slane %v2612, 7
    %v2645 = vadd.f32 %v141, %v2642
    %v2646 = vadd.f32 %v144, %v2612
    %v2647 = vxor.u32 %v2645, 2147483648
    %v2648 = vxor.u32 %v2646, 2147483648
    %v2649 = vmul.f32 %v2647, 1.442695
    %v2650 = vpow.pop %v2649
    %v2651 = vmul.f32 %v2648, 1.442695
    %v2652 = vpow.pop %v2651
    %v2653 = vadd.f32 %v2650, 1.0
    %v2654 = vadd.f32 %v2652, 1.0
    %v2655 = vrcp.pop %v2653
    %v2656 = vmul.f32 %v2653, %v2655
    %v2657 = vsub.f32 1.0, %v2656
    %v2658 = vmul.f32 %v2655, %v2657
    %v2659 = vadd.f32 %v2655, %v2658
    %vm2660 = vweird.f32 %v2653
    %vm2661 = vweird.f32 %v2655
    %vm2662 = vmor %vm2660, %vm2661
    %v2663 = vsel %vm2662, %v2655, %v2659
    %v2664 = vand.u32 2147483647, %v2653
    %vm2665 = vcmp.eq.f32.partialorder %v2664, 8.507059e+37
    %v2666 = vand.u32 %v2653, 2147483648
    %v2667 = vor.u32 1.1754944e-38, %v2666
    %v2668 = vsel %vm2665, %v2667, %v2663
    %v2669 = vmul.f32 1.0, %v2668
    %v2670 = vrcp.pop %v2654
    %v2671 = vmul.f32 %v2654, %v2670
    %v2672 = vsub.f32 1.0, %v2671
    %v2673 = vmul.f32 %v2670, %v2672
    %v2674 = vadd.f32 %v2670, %v2673
    %vm2675 = vweird.f32 %v2654
    %vm2676 = vweird.f32 %v2670
    %vm2677 = vmor %vm2675, %vm2676
    %v2678 = vsel %vm2677, %v2670, %v2674
    %v2679 = vand.u32 2147483647, %v2654
    %vm2680 = vcmp.eq.f32.partialorder %v2679, 8.507059e+37
    %v2681 = vand.u32 %v2654, 2147483648
    %v2682 = vor.u32 1.1754944e-38, %v2681
    %v2683 = vsel %vm2680, %v2682, %v2678
    %v2684 = vmul.f32 1.0, %v2683
    %v2686 = vrot.slane %v2625, 7
    %v2689 = vadd.f32 %v142, %v2686
    %v2690 = vadd.f32 %v145, %v2625
    %v2691 = vxor.u32 %v2689, 2147483648
    %v2692 = vxor.u32 %v2690, 2147483648
    %v2693 = vmul.f32 %v2691, 1.442695
    %v2694 = vpow.pop %v2693
    %v2695 = vmul.f32 %v2692, 1.442695
    %v2696 = vpow.pop %v2695
    %v2697 = vadd.f32 %v2694, 1.0
    %v2698 = vadd.f32 %v2696, 1.0
    %v2699 = vrcp.pop %v2697
    %v2700 = vmul.f32 %v2697, %v2699
    %v2701 = vsub.f32 1.0, %v2700
    %v2702 = vmul.f32 %v2699, %v2701
    %v2703 = vadd.f32 %v2699, %v2702
    %vm2704 = vweird.f32 %v2697
    %vm2705 = vweird.f32 %v2699
    %vm2706 = vmor %vm2704, %vm2705
    %v2707 = vsel %vm2706, %v2699, %v2703
    %v2708 = vand.u32 2147483647, %v2697
    %vm2709 = vcmp.eq.f32.partialorder %v2708, 8.507059e+37
    %v2710 = vand.u32 %v2697, 2147483648
    %v2711 = vor.u32 1.1754944e-38, %v2710
    %v2712 = vsel %vm2709, %v2711, %v2707
    %v2713 = vmul.f32 1.0, %v2712
    %v2714 = vrcp.pop %v2698
    %v2715 = vmul.f32 %v2698, %v2714
    %v2716 = vsub.f32 1.0, %v2715
    %v2717 = vmul.f32 %v2714, %v2716
    %v2718 = vadd.f32 %v2714, %v2717
    %vm2719 = vweird.f32 %v2698
    %vm2720 = vweird.f32 %v2714
    %vm2721 = vmor %vm2719, %vm2720
    %v2722 = vsel %vm2721, %v2714, %v2718
    %v2723 = vand.u32 2147483647, %v2698
    %vm2724 = vcmp.eq.f32.partialorder %v2723, 8.507059e+37
    %v2725 = vand.u32 %v2698, 2147483648
    %v2726 = vor.u32 1.1754944e-38, %v2725
    %v2727 = vsel %vm2724, %v2726, %v2722
    %v2728 = vmul.f32 1.0, %v2727
    %v2729 = vadd.f32 %v2638, %v757
    %v2731 = vrot.slane %v2729, 7
    %v2734 = vmul.f32 %v2669, %v2731
    %v2735 = vmul.f32 %v2684, %v2729
    %v2736 = vadd.f32 %v143, %v2734
    %v2737 = vadd.f32 %v146, %v2735
    %v2738 = vtanh.pop %v2736
    %v2739 = vtanh.pop %v2737
    %v2740 = vsub.f32 1.0, %v2713
    %v2741 = vsub.f32 1.0, %v2728
    %v2742 = vmul.f32 %v2740, %v2738
    %v2743 = vmul.f32 %v2741, %v2739
    %v2745 = vrot.slane %v2600, 7
    %v2748 = vmul.f32 %v2713, %v2745
    %v2749 = vmul.f32 %v2728, %v2600
    %v2750 = vadd.f32 %v2742, %v2748
    %v2751 = vadd.f32 %v2743, %v2749
    %v2754 = vrot.slane %v2599, 7
    %v2755 = vsel %vm1120, %v2754, %v2598
    %2757 = vst [vmem:[#allocation2 - $0x6] sm:$0xc0] %v2755
    %v2760 = vrot.slane %v2751, 7
    %v2761 = vsel %vm1113, %v2760, %v2750
    %2763 = vst [vmem:[#allocation3 - $0x1] sm:$0x6] %v2761
    %2764 = vst [vmem:[%s5] sm:$0x40] %v2598
    %2765 = vst [vmem:[%s5 + $0x8] sm:$0x40] %v2599
    %2766 = vst [vmem:[%s127] sm:$0x2] %v2750
    %2767 = vst [vmem:[%s127 + $0x8] sm:$0x2] %v2751
    %v2768 = vld [vmem:[#allocation2] sm:$0x3]
    %v2769 = vpack.c.bf16 %v2768, %v2768
    %2770 = vmatpush.bf16.msra.mxu0 %v317
    %2771 = vmatpush.bf16.msra.mxu0 %v314
    %2772 = vmatpush.bf16.msra.mxu0 %v311
    %2773 = vmatpush.bf16.msra.mxu0 %v308
    %2774 = vmatpush.bf16.msra.mxu0 %v305
    %2775 = vmatpush.bf16.msra.mxu0 %v302
    %2776 = vmatpush.bf16.msra.mxu0 %v299
    %2777 = vmatpush.bf16.msra.mxu0 %v296
    %2778 = vmatmul.bf16.gmra.mxu0 %v2769
    %v2779 = vpop.f32.mrf.mxu0
    %v2780 = vadd.f32 0.0, %v2779
    %v2781 = vpop.f32.mrf.mxu0
    %2782 = vdwg.mxu0
    %2783 = vmatpush.bf16.msra.mxu0 %v318
    %2784 = vmatpush.bf16.msra.mxu0 %v315
    %2785 = vmatpush.bf16.msra.mxu0 %v312
    %2786 = vmatpush.bf16.msra.mxu0 %v309
    %2787 = vmatpush.bf16.msra.mxu0 %v306
    %2788 = vmatpush.bf16.msra.mxu0 %v303
    %2789 = vmatpush.bf16.msra.mxu0 %v300
    %2790 = vmatpush.bf16.msra.mxu0 %v297
    %2791 = vmatmul.bf16.gmra.mxu0 %v2769
    %v2792 = vpop.f32.mrf.mxu0
    %v2793 = vadd.f32 0.0, %v2792
    %v2794 = vpop.f32.mrf.mxu0
    %2795 = vdwg.mxu0
    %2796 = vmatpush.bf16.msra.mxu0 %v319
    %2797 = vmatpush.bf16.msra.mxu0 %v316
    %2798 = vmatpush.bf16.msra.mxu0 %v313
    %2799 = vmatpush.bf16.msra.mxu0 %v310
    %2800 = vmatpush.bf16.msra.mxu0 %v307
    %2801 = vmatpush.bf16.msra.mxu0 %v304
    %2802 = vmatpush.bf16.msra.mxu0 %v301
    %2803 = vmatpush.bf16.msra.mxu0 %v298
    %2804 = vmatmul.bf16.gmra.mxu0 %v2769
    %v2805 = vpop.f32.mrf.mxu0
    %v2806 = vadd.f32 0.0, %v2805
    %v2807 = vpop.f32.mrf.mxu0
    %2808 = vdwg.mxu0
    %v2810 = vrot.slane %v2780, 1
    %v2811 = vrot.slane %v2780, 2
    %v2814 = vadd.f32 %v135, %v2810
    %v2815 = vadd.f32 %v138, %v2811
    %v2816 = vxor.u32 %v2814, 2147483648
    %v2817 = vxor.u32 %v2815, 2147483648
    %v2818 = vmul.f32 %v2816, 1.442695
    %v2819 = vpow.pop %v2818
    %v2820 = vmul.f32 %v2817, 1.442695
    %v2821 = vpow.pop %v2820
    %v2822 = vadd.f32 %v2819, 1.0
    %v2823 = vadd.f32 %v2821, 1.0
    %v2824 = vrcp.pop %v2822
    %v2825 = vmul.f32 %v2822, %v2824
    %v2826 = vsub.f32 1.0, %v2825
    %v2827 = vmul.f32 %v2824, %v2826
    %v2828 = vadd.f32 %v2824, %v2827
    %vm2829 = vweird.f32 %v2822
    %vm2830 = vweird.f32 %v2824
    %vm2831 = vmor %vm2829, %vm2830
    %v2832 = vsel %vm2831, %v2824, %v2828
    %v2833 = vand.u32 2147483647, %v2822
    %vm2834 = vcmp.eq.f32.partialorder %v2833, 8.507059e+37
    %v2835 = vand.u32 %v2822, 2147483648
    %v2836 = vor.u32 1.1754944e-38, %v2835
    %v2837 = vsel %vm2834, %v2836, %v2832
    %v2838 = vmul.f32 1.0, %v2837
    %v2839 = vrcp.pop %v2823
    %v2840 = vmul.f32 %v2823, %v2839
    %v2841 = vsub.f32 1.0, %v2840
    %v2842 = vmul.f32 %v2839, %v2841
    %v2843 = vadd.f32 %v2839, %v2842
    %vm2844 = vweird.f32 %v2823
    %vm2845 = vweird.f32 %v2839
    %vm2846 = vmor %vm2844, %vm2845
    %v2847 = vsel %vm2846, %v2839, %v2843
    %v2848 = vand.u32 2147483647, %v2823
    %vm2849 = vcmp.eq.f32.partialorder %v2848, 8.507059e+37
    %v2850 = vand.u32 %v2823, 2147483648
    %v2851 = vor.u32 1.1754944e-38, %v2850
    %v2852 = vsel %vm2849, %v2851, %v2847
    %v2853 = vmul.f32 1.0, %v2852
    %v2855 = vrot.slane %v2793, 1
    %v2856 = vrot.slane %v2793, 2
    %v2859 = vadd.f32 %v136, %v2855
    %v2860 = vadd.f32 %v139, %v2856
    %v2861 = vxor.u32 %v2859, 2147483648
    %v2862 = vxor.u32 %v2860, 2147483648
    %v2863 = vmul.f32 %v2861, 1.442695
    %v2864 = vpow.pop %v2863
    %v2865 = vmul.f32 %v2862, 1.442695
    %v2866 = vpow.pop %v2865
    %v2867 = vadd.f32 %v2864, 1.0
    %v2868 = vadd.f32 %v2866, 1.0
    %v2869 = vrcp.pop %v2867
    %v2870 = vmul.f32 %v2867, %v2869
    %v2871 = vsub.f32 1.0, %v2870
    %v2872 = vmul.f32 %v2869, %v2871
    %v2873 = vadd.f32 %v2869, %v2872
    %vm2874 = vweird.f32 %v2867
    %vm2875 = vweird.f32 %v2869
    %vm2876 = vmor %vm2874, %vm2875
    %v2877 = vsel %vm2876, %v2869, %v2873
    %v2878 = vand.u32 2147483647, %v2867
    %vm2879 = vcmp.eq.f32.partialorder %v2878, 8.507059e+37
    %v2880 = vand.u32 %v2867, 2147483648
    %v2881 = vor.u32 1.1754944e-38, %v2880
    %v2882 = vsel %vm2879, %v2881, %v2877
    %v2883 = vmul.f32 1.0, %v2882
    %v2884 = vrcp.pop %v2868
    %v2885 = vmul.f32 %v2868, %v2884
    %v2886 = vsub.f32 1.0, %v2885
    %v2887 = vmul.f32 %v2884, %v2886
    %v2888 = vadd.f32 %v2884, %v2887
    %vm2889 = vweird.f32 %v2868
    %vm2890 = vweird.f32 %v2884
    %vm2891 = vmor %vm2889, %vm2890
    %v2892 = vsel %vm2891, %v2884, %v2888
    %v2893 = vand.u32 2147483647, %v2868
    %vm2894 = vcmp.eq.f32.partialorder %v2893, 8.507059e+37
    %v2895 = vand.u32 %v2868, 2147483648
    %v2896 = vor.u32 1.1754944e-38, %v2895
    %v2897 = vsel %vm2894, %v2896, %v2892
    %v2898 = vmul.f32 1.0, %v2897
    %v2899 = vadd.f32 %v2806, %v472
    %v2901 = vrot.slane %v2899, 1
    %v2902 = vrot.slane %v2899, 2
    %v2905 = vmul.f32 %v2838, %v2901
    %v2906 = vmul.f32 %v2853, %v2902
    %v2907 = vadd.f32 %v137, %v2905
    %v2908 = vadd.f32 %v140, %v2906
    %v2909 = vtanh.pop %v2907
    %v2910 = vtanh.pop %v2908
    %v2911 = vsub.f32 1.0, %v2883
    %v2912 = vsub.f32 1.0, %v2898
    %v2913 = vmul.f32 %v2911, %v2909
    %v2914 = vmul.f32 %v2912, %v2910
    %v2916 = vrot.slane %v2768, 1
    %v2917 = vrot.slane %v2768, 2
    %v2920 = vmul.f32 %v2883, %v2916
    %v2921 = vmul.f32 %v2898, %v2917
    %v2922 = vadd.f32 %v2913, %v2920
    %v2923 = vadd.f32 %v2914, %v2921
    %v2924 = vld [vmem:[#allocation3] sm:$0x3]
    %v2925 = vpack.c.bf16 %v2924, %v2924
    %2926 = vmatpush.bf16.msra.mxu0 %v600
    %2927 = vmatpush.bf16.msra.mxu0 %v597
    %2928 = vmatpush.bf16.msra.mxu0 %v594
    %2929 = vmatpush.bf16.msra.mxu0 %v591
    %2930 = vmatpush.bf16.msra.mxu0 %v588
    %2931 = vmatpush.bf16.msra.mxu0 %v585
    %2932 = vmatpush.bf16.msra.mxu0 %v582
    %2933 = vmatpush.bf16.msra.mxu0 %v579
    %2934 = vmatmul.bf16.gmra.mxu0 %v2925
    %v2935 = vpop.f32.mrf.mxu0
    %v2936 = vadd.f32 0.0, %v2935
    %v2937 = vpop.f32.mrf.mxu0
    %2938 = vdwg.mxu0
    %2939 = vmatpush.bf16.msra.mxu0 %v601
    %2940 = vmatpush.bf16.msra.mxu0 %v598
    %2941 = vmatpush.bf16.msra.mxu0 %v595
    %2942 = vmatpush.bf16.msra.mxu0 %v592
    %2943 = vmatpush.bf16.msra.mxu0 %v589
    %2944 = vmatpush.bf16.msra.mxu0 %v586
    %2945 = vmatpush.bf16.msra.mxu0 %v583
    %2946 = vmatpush.bf16.msra.mxu0 %v580
    %2947 = vmatmul.bf16.gmra.mxu0 %v2925
    %v2948 = vpop.f32.mrf.mxu0
    %v2949 = vadd.f32 0.0, %v2948
    %v2950 = vpop.f32.mrf.mxu0
    %2951 = vdwg.mxu0
    %2952 = vmatpush.bf16.msra.mxu0 %v602
    %2953 = vmatpush.bf16.msra.mxu0 %v599
    %2954 = vmatpush.bf16.msra.mxu0 %v596
    %2955 = vmatpush.bf16.msra.mxu0 %v593
    %2956 = vmatpush.bf16.msra.mxu0 %v590
    %2957 = vmatpush.bf16.msra.mxu0 %v587
    %2958 = vmatpush.bf16.msra.mxu0 %v584
    %2959 = vmatpush.bf16.msra.mxu0 %v581
    %2960 = vmatmul.bf16.gmra.mxu0 %v2925
    %v2961 = vpop.f32.mrf.mxu0
    %v2962 = vadd.f32 0.0, %v2961
    %v2963 = vpop.f32.mrf.mxu0
    %2964 = vdwg.mxu0
    %v2966 = vrot.slane %v2936, 1
    %v2969 = vadd.f32 %v141, %v2936
    %v2970 = vadd.f32 %v144, %v2966
    %v2971 = vxor.u32 %v2969, 2147483648
    %v2972 = vxor.u32 %v2970, 2147483648
    %v2973 = vmul.f32 %v2971, 1.442695
    %v2974 = vpow.pop %v2973
    %v2975 = vmul.f32 %v2972, 1.442695
    %v2976 = vpow.pop %v2975
    %v2977 = vadd.f32 %v2974, 1.0
    %v2978 = vadd.f32 %v2976, 1.0
    %v2979 = vrcp.pop %v2977
    %v2980 = vmul.f32 %v2977, %v2979
    %v2981 = vsub.f32 1.0, %v2980
    %v2982 = vmul.f32 %v2979, %v2981
    %v2983 = vadd.f32 %v2979, %v2982
    %vm2984 = vweird.f32 %v2977
    %vm2985 = vweird.f32 %v2979
    %vm2986 = vmor %vm2984, %vm2985
    %v2987 = vsel %vm2986, %v2979, %v2983
    %v2988 = vand.u32 2147483647, %v2977
    %vm2989 = vcmp.eq.f32.partialorder %v2988, 8.507059e+37
    %v2990 = vand.u32 %v2977, 2147483648
    %v2991 = vor.u32 1.1754944e-38, %v2990
    %v2992 = vsel %vm2989, %v2991, %v2987
    %v2993 = vmul.f32 1.0, %v2992
    %v2994 = vrcp.pop %v2978
    %v2995 = vmul.f32 %v2978, %v2994
    %v2996 = vsub.f32 1.0, %v2995
    %v2997 = vmul.f32 %v2994, %v2996
    %v2998 = vadd.f32 %v2994, %v2997
    %vm2999 = vweird.f32 %v2978
    %vm3000 = vweird.f32 %v2994
    %vm3001 = vmor %vm2999, %vm3000
    %v3002 = vsel %vm3001, %v2994, %v2998
    %v3003 = vand.u32 2147483647, %v2978
    %vm3004 = vcmp.eq.f32.partialorder %v3003, 8.507059e+37
    %v3005 = vand.u32 %v2978, 2147483648
    %v3006 = vor.u32 1.1754944e-38, %v3005
    %v3007 = vsel %vm3004, %v3006, %v3002
    %v3008 = vmul.f32 1.0, %v3007
    %v3010 = vrot.slane %v2949, 1
    %v3013 = vadd.f32 %v142, %v2949
    %v3014 = vadd.f32 %v145, %v3010
    %v3015 = vxor.u32 %v3013, 2147483648
    %v3016 = vxor.u32 %v3014, 2147483648
    %v3017 = vmul.f32 %v3015, 1.442695
    %v3018 = vpow.pop %v3017
    %v3019 = vmul.f32 %v3016, 1.442695
    %v3020 = vpow.pop %v3019
    %v3021 = vadd.f32 %v3018, 1.0
    %v3022 = vadd.f32 %v3020, 1.0
    %v3023 = vrcp.pop %v3021
    %v3024 = vmul.f32 %v3021, %v3023
    %v3025 = vsub.f32 1.0, %v3024
    %v3026 = vmul.f32 %v3023, %v3025
    %v3027 = vadd.f32 %v3023, %v3026
    %vm3028 = vweird.f32 %v3021
    %vm3029 = vweird.f32 %v3023
    %vm3030 = vmor %vm3028, %vm3029
    %v3031 = vsel %vm3030, %v3023, %v3027
    %v3032 = vand.u32 2147483647, %v3021
    %vm3033 = vcmp.eq.f32.partialorder %v3032, 8.507059e+37
    %v3034 = vand.u32 %v3021, 2147483648
    %v3035 = vor.u32 1.1754944e-38, %v3034
    %v3036 = vsel %vm3033, %v3035, %v3031
    %v3037 = vmul.f32 1.0, %v3036
    %v3038 = vrcp.pop %v3022
    %v3039 = vmul.f32 %v3022, %v3038
    %v3040 = vsub.f32 1.0, %v3039
    %v3041 = vmul.f32 %v3038, %v3040
    %v3042 = vadd.f32 %v3038, %v3041
    %vm3043 = vweird.f32 %v3022
    %vm3044 = vweird.f32 %v3038
    %vm3045 = vmor %vm3043, %vm3044
    %v3046 = vsel %vm3045, %v3038, %v3042
    %v3047 = vand.u32 2147483647, %v3022
    %vm3048 = vcmp.eq.f32.partialorder %v3047, 8.507059e+37
    %v3049 = vand.u32 %v3022, 2147483648
    %v3050 = vor.u32 1.1754944e-38, %v3049
    %v3051 = vsel %vm3048, %v3050, %v3046
    %v3052 = vmul.f32 1.0, %v3051
    %v3053 = vadd.f32 %v2962, %v757
    %v3055 = vrot.slane %v3053, 1
    %v3058 = vmul.f32 %v2993, %v3053
    %v3059 = vmul.f32 %v3008, %v3055
    %v3060 = vadd.f32 %v143, %v3058
    %v3061 = vadd.f32 %v146, %v3059
    %v3062 = vtanh.pop %v3060
    %v3063 = vtanh.pop %v3061
    %v3064 = vsub.f32 1.0, %v3037
    %v3065 = vsub.f32 1.0, %v3052
    %v3066 = vmul.f32 %v3064, %v3062
    %v3067 = vmul.f32 %v3065, %v3063
    %v3069 = vrot.slane %v2924, 1
    %v3072 = vmul.f32 %v3037, %v2924
    %v3073 = vmul.f32 %v3052, %v3069
    %v3074 = vadd.f32 %v3066, %v3072
    %v3075 = vadd.f32 %v3067, %v3073
    %v3078 = vrot.slane %v2923, 7
    %3081 = vst [vmem:[#allocation2 - $0x7] sm:$0x80] %v2922
    %3082 = vst [vmem:[#allocation2 + $0x1] sm:$0x1] %v3078
    %v3085 = vrot.slane %v3075, 7
    %v3086 = vsel %vm787, %v3085, %v3074
    %3088 = vst [vmem:[#allocation3] sm:$0x3] %v3086
    %3089 = vst [vmem:[%s5] sm:$0x80] %v2922
    %3090 = vst [vmem:[%s5 + $0x8] sm:$0x80] %v2923
    %3091 = vst [vmem:[%s127] sm:$0x1] %v3074
    %3092 = vst [vmem:[%s127 + $0x8] sm:$0x1] %v3075
    %s3093 = ssub.s32 0, 0
    %p3094 = scmp.lt.s32.totalorder %s3093, 0
    %s3095 = scalar_select %p3094, %s3093, 0
    %s3096 = smul.addr %s3095, 8
    %s3097 = scalar_lea.vmem %s6, %s3096
    // Predicated region
    $region80: #{_lambda_.8} parent=1 // pred_check
      _
    $region81: #{_lambda_.8} parent=1 // pred_check_branch
      %3099 = sbr.rel (0) target = $region83
    $region82: #{_lambda_.8} parent=1 // pred_region
      _
    $region83: #{_lambda_.8} parent=1 // pred_fallthru
      _
    // Predicated region
    $region84: #{_lambda_.8} parent=1 // pred_check
      _
    $region85: #{_lambda_.8} parent=1 // pred_check_branch
      %3101 = sbr.rel (0) target = $region87
    $region86: #{_lambda_.8} parent=1 // pred_region
      %s3102 = ssub.s32 0, 0
    $region87: #{_lambda_.8} parent=1 // pred_fallthru
      _
    // Predicated region
    $region88: #{_lambda_.8} parent=1 // pred_check
      _
    $region89: #{_lambda_.8} parent=1 // pred_check_branch
      %3104 = sbr.rel (0) target = $region91
    $region90: #{_lambda_.8} parent=1 // pred_region
      _
    $region91: #{_lambda_.8} parent=1 // pred_fallthru
      _
    // Predicated region
    $region92: #{_lambda_.8} parent=1 // pred_check
      _
    $region93: #{_lambda_.8} parent=1 // pred_check_branch
      %3106 = sbr.rel (0) target = $region95
    $region94: #{_lambda_.8} parent=1 // pred_region
      %s3107 = ssub.s32 0, 0
      %p3108 = scmp.lt.s32.totalorder %s3107, 0
      %s3109 = scalar_select %p3108, %s3107, 0
      %s3110 = smul.addr %s3109, 8
      %s3111 = scalar_lea.vmem %s6, %s3110
    $region95: #{_lambda_.8} parent=1 // pred_fallthru
      _
    %3112 = vsyncpa [#allocation7], 1
    %3113 = vsyncpa [#allocation9], 1

</llo_original>
